<compile_context>
chip_gen: v7x
topology: tpu7x:2x2x1
jax: 0.10.0
libtpu: 0.0.40
codegen_flags: <defaults>
</compile_context>

<pallas_src>
import functools

import jax
import jax.numpy as jnp
from jax.experimental import pallas as pl
from jax.experimental.pallas import tpu as pltpu


# ------------------------- tiling / compiler helpers -------------------------

_ROW_TILE = 512                       # upper bound on rows per grid step
_VMEM_LIMIT = 32 * 1024 * 1024        # raise v5e's 16 MiB scoped default
_SQRT1_2 = 0.7071067811865476
_MASK_NEG = -1e9                      # finite "-inf": exp() underflows to 0 in f32


def _cparams(*sems):
    return pltpu.CompilerParams(dimension_semantics=sems,
                                vmem_limit_bytes=_VMEM_LIMIT)


def _round_up8(x):
    return ((x + 7) // 8) * 8


def _row_tile(m, max_tile=_ROW_TILE):
    """Rows per grid step: multiple of 8 (sublane tile), <= max_tile, and
    chosen so the grid has >= 2 steps whenever possible (v7x: 2 TensorCores)."""
    if m <= 16:
        return m                      # block == full array dim: always legal
    tm = min(max_tile, _round_up8(-(-m // 2)))   # cdiv(m, 2) rounded up to 8
    return max(8, min(tm, m))


def _mlp_row_tile(m, d, hidden, budget=24 * 1024 * 1024):
    """Cap the MLP row tile so double-buffered weights + the (tm, hidden)
    GELU activation fit a conservative VMEM budget (matters on v7x / large D)."""
    tm = _row_tile(m)
    weight_bytes = 2 * 4 * (d * hidden + hidden * d + hidden + 3 * d)
    per_row = 4 * (2 * 3 * d + hidden + d)        # x/a/out blocks (x2) + hidden
    avail = max(budget - weight_bytes, 8 * per_row)
    cap = max(8, (avail // per_row) // 8 * 8)
    return min(tm, cap)


def _pick_window_chunk(nwin, n_tokens, target_rows=512):
    """Windows per attention grid step: ~target_rows of tokens per step, a
    divisor of nwin, and >=2 chunks so both v7x TensorCores get work."""
    wc = max(1, min(nwin, target_rows // max(1, n_tokens)))
    while nwin % wc:
        wc -= 1
    if nwin >= 2 and nwin // wc < 2:
        wc = max(1, nwin // 2)
        while nwin % wc:
            wc -= 1
    return wc


def _erf(x):
    # TODO(synk): use lax.erf directly once Mosaic guarantees an erf lowering;
    # this Abramowitz & Stegun 7.1.26 polynomial matches it to ~1.5e-7 and only
    # uses mul/add/exp/where, which lower cleanly.
    a1, a2, a3, a4, a5 = (0.254829592, -0.284496736, 1.421413741,
                          -1.453152027, 1.061405429)
    p = 0.3275911
    s = jnp.where(x >= 0, 1.0, -1.0)
    z = jnp.abs(x)
    t = 1.0 / (1.0 + p * z)
    poly = ((((a5 * t + a4) * t + a3) * t + a2) * t + a1) * t
    return s * (1.0 - poly * jnp.exp(-z * z))


def _gelu(x):
    # Exact (erf-based) GELU, matching torch.nn.GELU default.
    return 0.5 * x * (1.0 + _erf(x * _SQRT1_2))


# ------------------------- Pallas kernels -----------------------------------

def _linear_kernel(x_ref, w_ref, b_ref, o_ref):
    acc = jnp.dot(x_ref[...].astype(jnp.float32), w_ref[...],
                  preferred_element_type=jnp.float32) + b_ref[...]
    o_ref[...] = acc.astype(o_ref.dtype)


def _ln_linear_kernel(x_ref, g_ref, b_ref, w_ref, o_ref):
    # LayerNorm (eps=1e-5, like torch) fused with the bias-free to_qkv matmul.
    x = x_ref[...].astype(jnp.float32)
    mu = jnp.mean(x, axis=-1, keepdims=True)
    var = jnp.mean(jnp.square(x - mu), axis=-1, keepdims=True)
    xn = (x - mu) * jax.lax.rsqrt(var + 1e-5) * g_ref[...] + b_ref[...]
    o_ref[...] = jnp.dot(xn, w_ref[...],
                         preferred_element_type=jnp.float32).astype(o_ref.dtype)


def _attn_proj_kernel(qkv_ref, bias_ref, w_ref, b_ref, o_ref, *,
                      heads, head_dim, scale):
    """Per-(batch, window-chunk) attention + fused output projection.

    qkv_ref : (wc, N, 3*heads*head_dim)  packed q|k|v, heads in the lane axis
    bias_ref: (wc, N, N)                 rel-pos bias (+ shift masks)
    w_ref   : (heads*head_dim, D), b_ref: (1, D)
    o_ref   : (wc, N, D)                 one lane-dense full-block store
    """
    wc, n, _ = qkv_ref.shape
    inner = heads * head_dim
    d_out = w_ref.shape[1]
    rows = wc * n

    qkv = qkv_ref[...].astype(jnp.float32)
    bias = bias_ref[...].astype(jnp.float32)
    w_out = w_ref[...].astype(jnp.float32)

    acc = jnp.zeros((rows, d_out), jnp.float32)
    for hh in range(heads):                       # heads is small & static
        off = hh * head_dim
        # lane slices of the packed qkv block (no HBM-side head split needed)
        q = qkv[:, :, off:off + head_dim] * scale          # scale on N*d, not N*N
        k = qkv[:, :, inner + off:inner + off + head_dim]
        v = qkv[:, :, 2 * inner + off:2 * inner + off + head_dim]
        # scores: contract last dims, batch over the window-chunk axis.
        s = jax.lax.dot_general(q, k, (((2,), (2,)), ((0,), (0,))),
                                preferred_element_type=jnp.float32) + bias
        m = jnp.max(s, axis=-1, keepdims=True)
        p = jnp.exp(s - m)
        p = p * pl.reciprocal(jnp.sum(p, axis=-1, keepdims=True), approx=False)
        o = jax.lax.dot_general(p, v, (((2,), (1,)), ((0,), (0,))),
                                preferred_element_type=jnp.float32)
        # fused out-projection: merging heads then (inner, D) == sum over heads
        # of per-head (d, D) matmuls, so no head-merge relayout is needed.
        acc = acc + jnp.dot(o.reshape(rows, head_dim),
                            w_out[off:off + head_dim, :],
                            preferred_element_type=jnp.float32)
    out = acc + b_ref[...].astype(jnp.float32)
    o_ref[...] = out.reshape(wc, n, d_out).astype(o_ref.dtype)


def _add_ln_mlp_kernel(x_ref, a_ref, g_ref, b_ref, w1_ref, b1_ref,
                       w2_ref, b2_ref, o_ref):
    # y = x + attn_proj  (attention residual folded in here)
    # out = y + Linear2(GELU(Linear1(LayerNorm(y))))
    # The (TM, 4D) hidden activation never touches HBM.
    y = x_ref[...].astype(jnp.float32) + a_ref[...].astype(jnp.float32)
    mu = jnp.mean(y, axis=-1, keepdims=True)
    var = jnp.mean(jnp.square(y - mu), axis=-1, keepdims=True)
    yn = (y - mu) * jax.lax.rsqrt(var + 1e-5) * g_ref[...] + b_ref[...]
    h = jnp.dot(yn, w1_ref[...], preferred_element_type=jnp.float32) + b1_ref[...]
    h = _gelu(h)
    z = jnp.dot(h, w2_ref[...], preferred_element_type=jnp.float32) + b2_ref[...]
    o_ref[...] = (y + z).astype(o_ref.dtype)


# ------------------------- pallas_call wrappers ------------------------------

def linear(x, w, b):
    m, k = x.shape
    n = w.shape[1]
    tm = _row_tile(m)
    return pl.pallas_call(
        _linear_kernel,
        out_shape=jax.ShapeDtypeStruct((m, n), x.dtype),
        grid=(pl.cdiv(m, tm),),
        in_specs=[pl.BlockSpec((tm, k), lambda i: (i, 0)),
                  pl.BlockSpec((k, n), lambda i: (0, 0)),
                  pl.BlockSpec((1, n), lambda i: (0, 0))],
        out_specs=pl.BlockSpec((tm, n), lambda i: (i, 0)),
        compiler_params=_cparams("parallel"),
    )(x, w, b.reshape(1, n))


def ln_linear(x, g, beta, w):
    m, d = x.shape
    n = w.shape[1]
    tm = _row_tile(m)
    return pl.pallas_call(
        _ln_linear_kernel,
        out_shape=jax.ShapeDtypeStruct((m, n), x.dtype),
        grid=(pl.cdiv(m, tm),),
        in_specs=[pl.BlockSpec((tm, d), lambda i: (i, 0)),
                  pl.BlockSpec((1, d), lambda i: (0, 0)),
                  pl.BlockSpec((1, d), lambda i: (0, 0)),
                  pl.BlockSpec((d, n), lambda i: (0, 0))],
        out_specs=pl.BlockSpec((tm, n), lambda i: (i, 0)),
        compiler_params=_cparams("parallel"),
    )(x, g.reshape(1, d), beta.reshape(1, d), w)


def window_attention_proj(qkv_win, bias, w_out, b_out, heads, head_dim):
    """qkv_win: (b, nwin, N, 3*inner); bias: (nwin, N, N) -> (b, nwin, N, D)."""
    b, nwin, n, c3 = qkv_win.shape
    d_out = w_out.shape[1]
    inner = c3 // 3
    wc = _pick_window_chunk(nwin, n)
    scale = head_dim ** -0.5
    kern = functools.partial(_attn_proj_kernel, heads=heads,
                             head_dim=head_dim, scale=scale)
    return pl.pallas_call(
        kern,
        out_shape=jax.ShapeDtypeStruct((b, nwin, n, d_out), qkv_win.dtype),
        grid=(b, nwin // wc),
        in_specs=[
            # batch axis squeezed into the grid: the bias adds to the scores
            # with no reshape, and every output block is lane-dense & full.
            pl.BlockSpec((None, wc, n, c3), lambda bb, c: (bb, c, 0, 0)),
            pl.BlockSpec((wc, n, n), lambda bb, c: (c, 0, 0)),
            pl.BlockSpec((inner, d_out), lambda bb, c: (0, 0)),
            pl.BlockSpec((1, d_out), lambda bb, c: (0, 0)),
        ],
        out_specs=pl.BlockSpec((None, wc, n, d_out), lambda bb, c: (bb, c, 0, 0)),
        compiler_params=_cparams("parallel", "parallel"),
    )(qkv_win, bias, w_out, b_out.reshape(1, d_out))


def add_ln_mlp(x, a, g, beta, w1, b1, w2, b2):
    m, d = x.shape
    hd = w1.shape[1]
    tm = _mlp_row_tile(m, d, hd)
    return pl.pallas_call(
        _add_ln_mlp_kernel,
        out_shape=jax.ShapeDtypeStruct((m, d), x.dtype),
        grid=(pl.cdiv(m, tm),),
        in_specs=[pl.BlockSpec((tm, d), lambda i: (i, 0)),
                  pl.BlockSpec((tm, d), lambda i: (i, 0)),
                  pl.BlockSpec((1, d), lambda i: (0, 0)),
                  pl.BlockSpec((1, d), lambda i: (0, 0)),
                  pl.BlockSpec((d, hd), lambda i: (0, 0)),
                  pl.BlockSpec((1, hd), lambda i: (0, 0)),
                  pl.BlockSpec((hd, d), lambda i: (0, 0)),
                  pl.BlockSpec((1, d), lambda i: (0, 0))],
        out_specs=pl.BlockSpec((tm, d), lambda i: (i, 0)),
        compiler_params=_cparams("parallel"),
    )(x, a, g.reshape(1, d), beta.reshape(1, d), w1, b1.reshape(1, hd),
      w2, b2.reshape(1, d))


# ------------------------- JAX glue (masks / windowing / params) -------------

def create_mask(ws, disp, upper_lower, left_right):
    mask = jnp.zeros((ws * ws, ws * ws), jnp.float32)
    neg = _MASK_NEG
    if upper_lower:
        mask = mask.at[-disp * ws:, :-disp * ws].set(neg)
        mask = mask.at[:-disp * ws, -disp * ws:].set(neg)
    if left_right:
        m = mask.reshape(ws, ws, ws, ws)
        m = m.at[:, -disp:, :, :-disp].set(neg)
        m = m.at[:, :-disp, :, -disp:].set(neg)
        mask = m.reshape(ws * ws, ws * ws)
    return mask


def relative_pos_bias(pos_embedding, ws):
    coords = jnp.stack(
        jnp.meshgrid(jnp.arange(ws), jnp.arange(ws), indexing="ij"), axis=-1
    ).reshape(-1, 2)                                   # [[x, y] for x for y] ordering
    rel = coords[None, :, :] - coords[:, None, :] + (ws - 1)    # (N, N, 2)
    return pos_embedding[rel[..., 0], rel[..., 1]]              # (N, N)


def _window_bias(pos_bias, ul_mask, lr_mask, nw_h, nw_w, shifted):
    """Per-window additive bias (nwin, N, N) = rel-pos bias (+ shift masks)."""
    wins = []
    for widx in range(nw_h * nw_w):
        bw = pos_bias
        if shifted:
            wh, ww = widx // nw_w, widx % nw_w
            if wh == nw_h - 1:          # dots[:, :, -nw_w:]        += upper_lower_mask
                bw = bw + ul_mask
            if ww == nw_w - 1:          # dots[:, :, nw_w-1::nw_w]  += left_right_mask
                bw = bw + lr_mask
        wins.append(bw)
    return jnp.stack(wins)


def swin_block(x, p, shifted, heads, head_dim, ws):
    b, H, W, D = x.shape
    nw_h, nw_w = H // ws, W // ws
    nwin, n_tok = nw_h * nw_w, ws * ws
    inner = heads * head_dim
    disp = ws // 2

    # ----- Residual(PreNorm(WindowAttention)) -----
    # LN and the bias-free QKV projection are per-token, so they commute with
    # the cyclic shift; shift the (narrower) input feature map, not qkv.
    x_in = jnp.roll(x, shift=(-disp, -disp), axis=(1, 2)) if shifted else x
    qkv = ln_linear(x_in.reshape(-1, D), p["ln1_g"], p["ln1_b"], p["w_qkv"])

    # Window grouping: keep q/k/v and the heads packed in the last dim (split
    # by lane slices inside the kernel), so this is one relayout of (M, 3*inner).
    # TODO(synk): expressing this (un)grouping as a BlockSpec index_map needs
    # either ws-sized blocks on the second-to-last axis (violates the (8,128)
    # rule for ws < 8) or in-kernel sublane-splitting reshapes whose Mosaic
    # lowering is not guaranteed; revisit with a stripe-shaped (b, ws, W, C)
    # block once that path is validated.
    qkv_win = qkv.reshape(b, nw_h, ws, nw_w, ws, 3 * inner)
    qkv_win = qkv_win.transpose(0, 1, 3, 2, 4, 5).reshape(b, nwin, n_tok, 3 * inner)

    # Shared (nwin, N, N) bias table, indexed per window chunk by the BlockSpec.
    bias = _window_bias(p["pos_bias"], p["ul_mask"], p["lr_mask"],
                        nw_h, nw_w, shifted)

    # Attention + fused to_out projection (per-token, so it commutes with the
    # un-windowing and the roll back).
    proj = window_attention_proj(qkv_win, bias, p["w_out"], p["b_out"],
                                 heads, head_dim)          # (b, nwin, N, D)
    proj = proj.reshape(b, nw_h, nw_w, ws, ws, D).transpose(0, 1, 3, 2, 4, 5)
    proj = proj.reshape(b, H, W, D)
    if shifted:
        proj = jnp.roll(proj, shift=(disp, disp), axis=(1, 2))

    # ----- attention residual + Residual(PreNorm(FeedForward)) in one kernel --
    out = add_ln_mlp(x.reshape(-1, D), proj.reshape(-1, D),
                     p["ln2_g"], p["ln2_b"],
                     p["w_mlp1"], p["b_mlp1"], p["w_mlp2"], p["b_mlp2"])
    return out.reshape(b, H, W, D)


def stage_module(x_nchw, params, cfg):
    df = cfg["downscaling_factor"]
    b, c, h, w = x_nchw.shape
    nh, nw = h // df, w // df
    # PatchMerging: non-overlapping nn.Unfold (feature order (c, kh, kw)) + Linear
    xr = x_nchw.reshape(b, c, nh, df, nw, df).transpose(0, 2, 4, 1, 3, 5)
    xr = xr.reshape(b * nh * nw, c * df * df)
    x = linear(xr, params["pm_w"], params["pm_b"]).reshape(b, nh, nw, -1)
    for pair in params["blocks"]:
        x = swin_block(x, pair["regular"], False,
                       cfg["heads"], cfg["head_dim"], cfg["window_size"])
        x = swin_block(x, pair["shifted"], True,
                       cfg["heads"], cfg["head_dim"], cfg["window_size"])
    return x.transpose(0, 3, 1, 2)                        # back to NCHW


def init_params(key, cfg):
    c = cfg["in_channels"]; D = cfg["hidden_dimension"]; df = cfg["downscaling_factor"]
    heads = cfg["heads"]; hd = cfg["head_dim"]; ws = cfg["window_size"]
    inner = heads * hd
    mlp = D * 4

    def nrm(k, shape, scale=0.02):
        return scale * jax.random.normal(k, shape, jnp.float32)

    keys = iter(jax.random.split(key, 64))
    params = {
        "pm_w": nrm(next(keys), (c * df * df, D)),
        "pm_b": nrm(next(keys), (D,)),
        "blocks": [],
    }
    ul_mask = create_mask(ws, ws // 2, True, False)
    lr_mask = create_mask(ws, ws // 2, False, True)
    for _ in range(cfg["layers"] // 2):
        pair = {}
        for name in ("regular", "shifted"):
            pos_emb = jax.random.normal(next(keys), (2 * ws - 1, 2 * ws - 1), jnp.float32)
            pair[name] = {
                "ln1_g": jnp.ones((D,), jnp.float32),
                "ln1_b": jnp.zeros((D,), jnp.float32),
                "w_qkv": nrm(next(keys), (D, 3 * inner)),      # to_qkv has no bias
                "pos_bias": relative_pos_bias(pos_emb, ws),
                "w_out": nrm(next(keys), (inner, D)),
                "b_out": nrm(next(keys), (D,)),
                "ln2_g": jnp.ones((D,), jnp.float32),
                "ln2_b": jnp.zeros((D,), jnp.float32),
                "w_mlp1": nrm(next(keys), (D, mlp)),
                "b_mlp1": nrm(next(keys), (mlp,)),
                "w_mlp2": nrm(next(keys), (mlp, D)),
                "b_mlp2": nrm(next(keys), (D,)),
                "ul_mask": ul_mask,
                "lr_mask": lr_mask,
            }
        params["blocks"].append(pair)
    return params


if __name__ == "__main__":
    cfg = dict(in_channels=4, hidden_dimension=32, layers=2, downscaling_factor=2,
               heads=2, head_dim=16, window_size=4)
    key = jax.random.PRNGKey(0)
    kx, kp = jax.random.split(key)
    x = jax.random.normal(kx, (2, 4, 16, 16), jnp.float32)   # NCHW like PyTorch
    params = init_params(kp, cfg)

    fwd = jax.jit(functools.partial(stage_module, cfg=cfg))
    out = jax.block_until_ready(fwd(x, params))
    assert out.shape == (2, cfg["hidden_dimension"], 8, 8), out.shape
    print("KERNEL_OK")
</pallas_src>

<mosaic_0001>
module attributes {stable_mosaic.version = 11 : i64} {
  func.func @_linear_kernel(%arg0: i32, %arg1: memref<64x16xf32, #tpu.memory_space<vmem>>, %arg2: memref<16x32xf32, #tpu.memory_space<vmem>>, %arg3: memref<1x32xf32, #tpu.memory_space<vmem>>, %arg4: memref<64x32xf32, #tpu.memory_space<vmem>>) attributes {dimension_semantics = [#tpu.dimension_semantics<parallel>], iteration_bounds = array<i64: 2>, scalar_prefetch = 0 : i64, scratch_operands = 0 : i64, tpu.core_type = #tpu.core_type<tc>, window_params = [{transform_indices = @transform_0, window_bounds = array<i64: 64, 16>}, {pipeline_mode = #tpu.pipeline_mode<synchronous>, transform_indices = @transform_1, window_bounds = array<i64: 16, 32>}, {pipeline_mode = #tpu.pipeline_mode<synchronous>, transform_indices = @transform_2, window_bounds = array<i64: 1, 32>}, {transform_indices = @transform_3, window_bounds = array<i64: 64, 32>}]} {
    %c0 = arith.constant 0 : index
    %c0_0 = arith.constant 0 : index
    %0 = vector.load %arg1[%c0, %c0_0] : memref<64x16xf32, #tpu.memory_space<vmem>>, vector<64x16xf32>
    %c0_1 = arith.constant 0 : index
    %c0_2 = arith.constant 0 : index
    %1 = vector.load %arg2[%c0_1, %c0_2] : memref<16x32xf32, #tpu.memory_space<vmem>>, vector<16x32xf32>
    %cst = arith.constant dense<0.000000e+00> : vector<64x32xf32>
    %2 = tpu.matmul %0, %1, %cst {dimension_numbers = #tpu.dot_dimension_numbers<[1], [0], [0], [1], [0, 0, 1, 1], [], []>} : vector<64x16xf32>, vector<16x32xf32>, vector<64x32xf32> -> vector<64x32xf32>
    %c0_3 = arith.constant 0 : index
    %c0_4 = arith.constant 0 : index
    %3 = vector.load %arg3[%c0_3, %c0_4] : memref<1x32xf32, #tpu.memory_space<vmem>>, vector<1x32xf32>
    %4 = vector.broadcast %3 : vector<1x32xf32> to vector<64x32xf32>
    %5 = arith.addf %2, %4 : vector<64x32xf32>
    %c0_5 = arith.constant 0 : index
    %c0_6 = arith.constant 0 : index
    %6 = vector.load %arg4[%c0_5, %c0_6] : memref<64x32xf32, #tpu.memory_space<vmem>>, vector<64x32xf32>
    tpu.vector_store %arg4[%c0_5, %c0_6], %5 {strides = array<i32>} : memref<64x32xf32, #tpu.memory_space<vmem>>, vector<64x32xf32>,
    return
  }
  func.func @transform_0(%arg0: i32) -> (i32, i32) {
    %c0_i32 = arith.constant 0 : i32
    %c0_i32_0 = arith.constant 0 : i32
    return %arg0, %c0_i32 : i32, i32
  }
  func.func @transform_1(%arg0: i32) -> (i32, i32) {
    %c0_i32 = arith.constant 0 : i32
    %c0_i32_0 = arith.constant 0 : i32
    %c0_i32_1 = arith.constant 0 : i32
    return %c0_i32, %c0_i32_0 : i32, i32
  }
  func.func @transform_2(%arg0: i32) -> (i32, i32) {
    %c0_i32 = arith.constant 0 : i32
    %c0_i32_0 = arith.constant 0 : i32
    %c0_i32_1 = arith.constant 0 : i32
    return %c0_i32, %c0_i32_0 : i32, i32
  }
  func.func @transform_3(%arg0: i32) -> (i32, i32) {
    %c0_i32 = arith.constant 0 : i32
    %c0_i32_0 = arith.constant 0 : i32
    return %arg0, %c0_i32 : i32, i32
  }
}

module attributes {stable_mosaic.version = 11 : i64} {
  func.func @_ln_linear_kernel(%arg0: i32, %arg1: memref<64x32xf32, #tpu.memory_space<vmem>>, %arg2: memref<1x32xf32, #tpu.memory_space<vmem>>, %arg3: memref<1x32xf32, #tpu.memory_space<vmem>>, %arg4: memref<32x96xf32, #tpu.memory_space<vmem>>, %arg5: memref<64x96xf32, #tpu.memory_space<vmem>>) attributes {dimension_semantics = [#tpu.dimension_semantics<parallel>], iteration_bounds = array<i64: 2>, scalar_prefetch = 0 : i64, scratch_operands = 0 : i64, tpu.core_type = #tpu.core_type<tc>, window_params = [{transform_indices = @transform_0, window_bounds = array<i64: 64, 32>}, {pipeline_mode = #tpu.pipeline_mode<synchronous>, transform_indices = @transform_1, window_bounds = array<i64: 1, 32>}, {pipeline_mode = #tpu.pipeline_mode<synchronous>, transform_indices = @transform_2, window_bounds = array<i64: 1, 32>}, {pipeline_mode = #tpu.pipeline_mode<synchronous>, transform_indices = @transform_3, window_bounds = array<i64: 32, 96>}, {transform_indices = @transform_4, window_bounds = array<i64: 64, 96>}]} {
    %c0 = arith.constant 0 : index
    %c0_0 = arith.constant 0 : index
    %0 = vector.load %arg1[%c0, %c0_0] : memref<64x32xf32, #tpu.memory_space<vmem>>, vector<64x32xf32>
    %cst = arith.constant dense<0.000000e+00> : vector<64xf32>
    %1 = vector.multi_reduction <add>, %0, %cst [1] : vector<64x32xf32> to vector<64xf32>
    %2 = vector.shape_cast %1 : vector<64xf32> to vector<64x1xf32>
    %cst_1 = arith.constant 3.200000e+01 : f32
    %3 = vector.broadcast %cst_1 : f32 to vector<64x1xf32>
    %4 = arith.divf %2, %3 : vector<64x1xf32>
    %5 = vector.broadcast %4 : vector<64x1xf32> to vector<64x32xf32>
    %6 = arith.subf %0, %5 : vector<64x32xf32>
    %7 = arith.mulf %6, %6 : vector<64x32xf32>
    %cst_2 = arith.constant dense<0.000000e+00> : vector<64xf32>
    %8 = vector.multi_reduction <add>, %7, %cst_2 [1] : vector<64x32xf32> to vector<64xf32>
    %9 = vector.shape_cast %8 : vector<64xf32> to vector<64x1xf32>
    %cst_3 = arith.constant 3.200000e+01 : f32
    %10 = vector.broadcast %cst_3 : f32 to vector<64x1xf32>
    %11 = arith.divf %9, %10 : vector<64x1xf32>
    %12 = vector.broadcast %4 : vector<64x1xf32> to vector<64x32xf32>
    %13 = arith.subf %0, %12 : vector<64x32xf32>
    %cst_4 = arith.constant 9.99999974E-6 : f32
    %14 = vector.broadcast %cst_4 : f32 to vector<64x1xf32>
    %15 = arith.addf %11, %14 : vector<64x1xf32>
    %16 = math.rsqrt %15 : vector<64x1xf32>
    %17 = vector.broadcast %16 : vector<64x1xf32> to vector<64x32xf32>
    %18 = arith.mulf %13, %17 : vector<64x32xf32>
    %c0_5 = arith.constant 0 : index
    %c0_6 = arith.constant 0 : index
    %19 = vector.load %arg2[%c0_5, %c0_6] : memref<1x32xf32, #tpu.memory_space<vmem>>, vector<1x32xf32>
    %20 = vector.broadcast %19 : vector<1x32xf32> to vector<64x32xf32>
    %21 = arith.mulf %18, %20 : vector<64x32xf32>
    %c0_7 = arith.constant 0 : index
    %c0_8 = arith.constant 0 : index
    %22 = vector.load %arg3[%c0_7, %c0_8] : memref<1x32xf32, #tpu.memory_space<vmem>>, vector<1x32xf32>
    %23 = vector.broadcast %22 : vector<1x32xf32> to vector<64x32xf32>
    %24 = arith.addf %21, %23 : vector<64x32xf32>
    %c0_9 = arith.constant 0 : index
    %c0_10 = arith.constant 0 : index
    %25 = vector.load %arg4[%c0_9, %c0_10] : memref<32x96xf32, #tpu.memory_space<vmem>>, vector<32x96xf32>
    %cst_11 = arith.constant dense<0.000000e+00> : vector<64x96xf32>
    %26 = tpu.matmul %24, %25, %cst_11 {dimension_numbers = #tpu.dot_dimension_numbers<[1], [0], [0], [1], [0, 0, 1, 1], [], []>} : vector<64x32xf32>, vector<32x96xf32>, vector<64x96xf32> -> vector<64x96xf32>
    %c0_12 = arith.constant 0 : index
    %c0_13 = arith.constant 0 : index
    %27 = vector.load %arg5[%c0_12, %c0_13] : memref<64x96xf32, #tpu.memory_space<vmem>>, vector<64x96xf32>
    tpu.vector_store %arg5[%c0_12, %c0_13], %26 {strides = array<i32>} : memref<64x96xf32, #tpu.memory_space<vmem>>, vector<64x96xf32>,
    return
  }
  func.func @transform_0(%arg0: i32) -> (i32, i32) {
    %c0_i32 = arith.constant 0 : i32
    %c0_i32_0 = arith.constant 0 : i32
    return %arg0, %c0_i32 : i32, i32
  }
  func.func @transform_1(%arg0: i32) -> (i32, i32) {
    %c0_i32 = arith.constant 0 : i32
    %c0_i32_0 = arith.constant 0 : i32
    %c0_i32_1 = arith.constant 0 : i32
    return %c0_i32, %c0_i32_0 : i32, i32
  }
  func.func @transform_2(%arg0: i32) -> (i32, i32) {
    %c0_i32 = arith.constant 0 : i32
    %c0_i32_0 = arith.constant 0 : i32
    %c0_i32_1 = arith.constant 0 : i32
    return %c0_i32, %c0_i32_0 : i32, i32
  }
  func.func @transform_3(%arg0: i32) -> (i32, i32) {
    %c0_i32 = arith.constant 0 : i32
    %c0_i32_0 = arith.constant 0 : i32
    %c0_i32_1 = arith.constant 0 : i32
    return %c0_i32, %c0_i32_0 : i32, i32
  }
  func.func @transform_4(%arg0: i32) -> (i32, i32) {
    %c0_i32 = arith.constant 0 : i32
    %c0_i32_0 = arith.constant 0 : i32
    return %arg0, %c0_i32 : i32, i32
  }
}

module attributes {stable_mosaic.version = 11 : i64} {
  func.func @_attn_proj_kernel(%arg0: i32, %arg1: i32, %arg2: memref<1x2x16x96xf32, #tpu.memory_space<vmem>>, %arg3: memref<2x16x16xf32, #tpu.memory_space<vmem>>, %arg4: memref<32x32xf32, #tpu.memory_space<vmem>>, %arg5: memref<1x32xf32, #tpu.memory_space<vmem>>, %arg6: memref<1x2x16x32xf32, #tpu.memory_space<vmem>>) attributes {dimension_semantics = [#tpu.dimension_semantics<parallel>, #tpu.dimension_semantics<parallel>], iteration_bounds = array<i64: 2, 2>, scalar_prefetch = 0 : i64, scratch_operands = 0 : i64, tpu.core_type = #tpu.core_type<tc>, window_params = [{transform_indices = @transform_0, window_bounds = array<i64: 1, 2, 16, 96>}, {transform_indices = @transform_1, window_bounds = array<i64: 2, 16, 16>}, {pipeline_mode = #tpu.pipeline_mode<synchronous>, transform_indices = @transform_2, window_bounds = array<i64: 32, 32>}, {pipeline_mode = #tpu.pipeline_mode<synchronous>, transform_indices = @transform_3, window_bounds = array<i64: 1, 32>}, {transform_indices = @transform_4, window_bounds = array<i64: 1, 2, 16, 32>}]} {
    %c0 = arith.constant 0 : index
    %c0_0 = arith.constant 0 : index
    %c0_1 = arith.constant 0 : index
    %c0_2 = arith.constant 0 : index
    %0 = vector.load %arg2[%c0, %c0_0, %c0_1, %c0_2] : memref<1x2x16x96xf32, #tpu.memory_space<vmem>>, vector<1x2x16x96xf32>
    %1 = vector.shape_cast %0 : vector<1x2x16x96xf32> to vector<2x16x96xf32>
    %c0_3 = arith.constant 0 : index
    %c0_4 = arith.constant 0 : index
    %c0_5 = arith.constant 0 : index
    %2 = vector.load %arg3[%c0_3, %c0_4, %c0_5] : memref<2x16x16xf32, #tpu.memory_space<vmem>>, vector<2x16x16xf32>
    %c0_6 = arith.constant 0 : index
    %c0_7 = arith.constant 0 : index
    %3 = vector.load %arg4[%c0_6, %c0_7] : memref<32x32xf32, #tpu.memory_space<vmem>>, vector<32x32xf32>
    %cst = arith.constant 0.000000e+00 : f32
    %4 = vector.broadcast %cst : f32 to vector<32x32xf32>
    %5 = vector.extract_strided_slice %1 {offsets = [0, 0, 0], sizes = [2, 16, 16], strides = [1, 1, 1]} : vector<2x16x96xf32> to vector<2x16x16xf32>
    %cst_8 = arith.constant 2.500000e-01 : f32
    %6 = vector.broadcast %cst_8 : f32 to vector<2x16x16xf32>
    %7 = arith.mulf %5, %6 : vector<2x16x16xf32>
    %8 = vector.extract_strided_slice %1 {offsets = [0, 0, 32], sizes = [2, 16, 16], strides = [1, 1, 1]} : vector<2x16x96xf32> to vector<2x16x16xf32>
    %9 = vector.extract_strided_slice %1 {offsets = [0, 0, 64], sizes = [2, 16, 16], strides = [1, 1, 1]} : vector<2x16x96xf32> to vector<2x16x16xf32>
    %cst_9 = arith.constant dense<0.000000e+00> : vector<2x16x16xf32>
    %10 = tpu.matmul %7, %8, %cst_9 {dimension_numbers = #tpu.dot_dimension_numbers<[2], [2], [1], [1], [0, 0, 0, 1, 1, 1], [0], [0]>} : vector<2x16x16xf32>, vector<2x16x16xf32>, vector<2x16x16xf32> -> vector<2x16x16xf32>
    %11 = arith.addf %10, %2 : vector<2x16x16xf32>
    %cst_10 = arith.constant dense<0xFF800000> : vector<2x16xf32>
    %12 = vector.multi_reduction <maximumf>, %11, %cst_10 [2] : vector<2x16x16xf32> to vector<2x16xf32>
    %13 = vector.shape_cast %12 : vector<2x16xf32> to vector<2x16x1xf32>
    %14 = vector.broadcast %13 : vector<2x16x1xf32> to vector<2x16x16xf32>
    %15 = arith.subf %11, %14 : vector<2x16x16xf32>
    %16 = math.exp %15 : vector<2x16x16xf32>
    %cst_11 = arith.constant dense<0.000000e+00> : vector<2x16xf32>
    %17 = vector.multi_reduction <add>, %16, %cst_11 [2] : vector<2x16x16xf32> to vector<2x16xf32>
    %18 = vector.shape_cast %17 : vector<2x16xf32> to vector<2x16x1xf32>
    %19 = tpu.reciprocal %18 : vector<2x16x1xf32> -> vector<2x16x1xf32>
    %20 = vector.broadcast %19 : vector<2x16x1xf32> to vector<2x16x16xf32>
    %21 = arith.mulf %16, %20 : vector<2x16x16xf32>
    %cst_12 = arith.constant dense<0.000000e+00> : vector<2x16x16xf32>
    %22 = tpu.matmul %21, %9, %cst_12 {dimension_numbers = #tpu.dot_dimension_numbers<[2], [1], [1], [2], [0, 0, 0, 1, 1, 2], [0], [0]>} : vector<2x16x16xf32>, vector<2x16x16xf32>, vector<2x16x16xf32> -> vector<2x16x16xf32>
    %23 = vector.shape_cast %22 : vector<2x16x16xf32> to vector<32x16xf32>
    %24 = vector.extract_strided_slice %3 {offsets = [0, 0], sizes = [16, 32], strides = [1, 1]} : vector<32x32xf32> to vector<16x32xf32>
    %cst_13 = arith.constant dense<0.000000e+00> : vector<32x32xf32>
    %25 = tpu.matmul %23, %24, %cst_13 {dimension_numbers = #tpu.dot_dimension_numbers<[1], [0], [0], [1], [0, 0, 1, 1], [], []>} : vector<32x16xf32>, vector<16x32xf32>, vector<32x32xf32> -> vector<32x32xf32>
    %26 = arith.addf %4, %25 : vector<32x32xf32>
    %27 = vector.extract_strided_slice %1 {offsets = [0, 0, 16], sizes = [2, 16, 16], strides = [1, 1, 1]} : vector<2x16x96xf32> to vector<2x16x16xf32>
    %cst_14 = arith.constant 2.500000e-01 : f32
    %28 = vector.broadcast %cst_14 : f32 to vector<2x16x16xf32>
    %29 = arith.mulf %27, %28 : vector<2x16x16xf32>
    %30 = vector.extract_strided_slice %1 {offsets = [0, 0, 48], sizes = [2, 16, 16], strides = [1, 1, 1]} : vector<2x16x96xf32> to vector<2x16x16xf32>
    %31 = vector.extract_strided_slice %1 {offsets = [0, 0, 80], sizes = [2, 16, 16], strides = [1, 1, 1]} : vector<2x16x96xf32> to vector<2x16x16xf32>
    %cst_15 = arith.constant dense<0.000000e+00> : vector<2x16x16xf32>
    %32 = tpu.matmul %29, %30, %cst_15 {dimension_numbers = #tpu.dot_dimension_numbers<[2], [2], [1], [1], [0, 0, 0, 1, 1, 1], [0], [0]>} : vector<2x16x16xf32>, vector<2x16x16xf32>, vector<2x16x16xf32> -> vector<2x16x16xf32>
    %33 = arith.addf %32, %2 : vector<2x16x16xf32>
    %cst_16 = arith.constant dense<0xFF800000> : vector<2x16xf32>
    %34 = vector.multi_reduction <maximumf>, %33, %cst_16 [2] : vector<2x16x16xf32> to vector<2x16xf32>
    %35 = vector.shape_cast %34 : vector<2x16xf32> to vector<2x16x1xf32>
    %36 = vector.broadcast %35 : vector<2x16x1xf32> to vector<2x16x16xf32>
    %37 = arith.subf %33, %36 : vector<2x16x16xf32>
    %38 = math.exp %37 : vector<2x16x16xf32>
    %cst_17 = arith.constant dense<0.000000e+00> : vector<2x16xf32>
    %39 = vector.multi_reduction <add>, %38, %cst_17 [2] : vector<2x16x16xf32> to vector<2x16xf32>
    %40 = vector.shape_cast %39 : vector<2x16xf32> to vector<2x16x1xf32>
    %41 = tpu.reciprocal %40 : vector<2x16x1xf32> -> vector<2x16x1xf32>
    %42 = vector.broadcast %41 : vector<2x16x1xf32> to vector<2x16x16xf32>
    %43 = arith.mulf %38, %42 : vector<2x16x16xf32>
    %cst_18 = arith.constant dense<0.000000e+00> : vector<2x16x16xf32>
    %44 = tpu.matmul %43, %31, %cst_18 {dimension_numbers = #tpu.dot_dimension_numbers<[2], [1], [1], [2], [0, 0, 0, 1, 1, 2], [0], [0]>} : vector<2x16x16xf32>, vector<2x16x16xf32>, vector<2x16x16xf32> -> vector<2x16x16xf32>
    %45 = vector.shape_cast %44 : vector<2x16x16xf32> to vector<32x16xf32>
    %46 = vector.extract_strided_slice %3 {offsets = [16, 0], sizes = [16, 32], strides = [1, 1]} : vector<32x32xf32> to vector<16x32xf32>
    %cst_19 = arith.constant dense<0.000000e+00> : vector<32x32xf32>
    %47 = tpu.matmul %45, %46, %cst_19 {dimension_numbers = #tpu.dot_dimension_numbers<[1], [0], [0], [1], [0, 0, 1, 1], [], []>} : vector<32x16xf32>, vector<16x32xf32>, vector<32x32xf32> -> vector<32x32xf32>
    %48 = arith.addf %26, %47 : vector<32x32xf32>
    %c0_20 = arith.constant 0 : index
    %c0_21 = arith.constant 0 : index
    %49 = vector.load %arg5[%c0_20, %c0_21] : memref<1x32xf32, #tpu.memory_space<vmem>>, vector<1x32xf32>
    %50 = vector.broadcast %49 : vector<1x32xf32> to vector<32x32xf32>
    %51 = arith.addf %48, %50 : vector<32x32xf32>
    %52 = vector.shape_cast %51 : vector<32x32xf32> to vector<2x16x32xf32>
    %c0_22 = arith.constant 0 : index
    %c0_23 = arith.constant 0 : index
    %c0_24 = arith.constant 0 : index
    %c0_25 = arith.constant 0 : index
    %53 = vector.load %arg6[%c0_22, %c0_23, %c0_24, %c0_25] : memref<1x2x16x32xf32, #tpu.memory_space<vmem>>, vector<1x2x16x32xf32>
    %54 = vector.shape_cast %53 : vector<1x2x16x32xf32> to vector<2x16x32xf32>
    %55 = vector.shape_cast %52 : vector<2x16x32xf32> to vector<1x2x16x32xf32>
    tpu.vector_store %arg6[%c0_22, %c0_23, %c0_24, %c0_25], %55 {strides = array<i32>} : memref<1x2x16x32xf32, #tpu.memory_space<vmem>>, vector<1x2x16x32xf32>,
    return
  }
  func.func @transform_0(%arg0: i32, %arg1: i32) -> (i32, i32, i32, i32) {
    %c0_i32 = arith.constant 0 : i32
    %c0_i32_0 = arith.constant 0 : i32
    %c0_i32_1 = arith.constant 0 : i32
    return %arg0, %arg1, %c0_i32, %c0_i32_0 : i32, i32, i32, i32
  }
  func.func @transform_1(%arg0: i32, %arg1: i32) -> (i32, i32, i32) {
    %c0_i32 = arith.constant 0 : i32
    %c0_i32_0 = arith.constant 0 : i32
    %c0_i32_1 = arith.constant 0 : i32
    return %arg1, %c0_i32, %c0_i32_0 : i32, i32, i32
  }
  func.func @transform_2(%arg0: i32, %arg1: i32) -> (i32, i32) {
    %c0_i32 = arith.constant 0 : i32
    %c0_i32_0 = arith.constant 0 : i32
    %c0_i32_1 = arith.constant 0 : i32
    return %c0_i32, %c0_i32_0 : i32, i32
  }
  func.func @transform_3(%arg0: i32, %arg1: i32) -> (i32, i32) {
    %c0_i32 = arith.constant 0 : i32
    %c0_i32_0 = arith.constant 0 : i32
    %c0_i32_1 = arith.constant 0 : i32
    return %c0_i32, %c0_i32_0 : i32, i32
  }
  func.func @transform_4(%arg0: i32, %arg1: i32) -> (i32, i32, i32, i32) {
    %c0_i32 = arith.constant 0 : i32
    %c0_i32_0 = arith.constant 0 : i32
    %c0_i32_1 = arith.constant 0 : i32
    return %arg0, %arg1, %c0_i32, %c0_i32_0 : i32, i32, i32, i32
  }
}

module attributes {stable_mosaic.version = 11 : i64} {
  func.func @_add_ln_mlp_kernel(%arg0: i32, %arg1: memref<64x32xf32, #tpu.memory_space<vmem>>, %arg2: memref<64x32xf32, #tpu.memory_space<vmem>>, %arg3: memref<1x32xf32, #tpu.memory_space<vmem>>, %arg4: memref<1x32xf32, #tpu.memory_space<vmem>>, %arg5: memref<32x128xf32, #tpu.memory_space<vmem>>, %arg6: memref<1x128xf32, #tpu.memory_space<vmem>>, %arg7: memref<128x32xf32, #tpu.memory_space<vmem>>, %arg8: memref<1x32xf32, #tpu.memory_space<vmem>>, %arg9: memref<64x32xf32, #tpu.memory_space<vmem>>) attributes {dimension_semantics = [#tpu.dimension_semantics<parallel>], iteration_bounds = array<i64: 2>, scalar_prefetch = 0 : i64, scratch_operands = 0 : i64, tpu.core_type = #tpu.core_type<tc>, window_params = [{transform_indices = @transform_0, window_bounds = array<i64: 64, 32>}, {transform_indices = @transform_1, window_bounds = array<i64: 64, 32>}, {pipeline_mode = #tpu.pipeline_mode<synchronous>, transform_indices = @transform_2, window_bounds = array<i64: 1, 32>}, {pipeline_mode = #tpu.pipeline_mode<synchronous>, transform_indices = @transform_3, window_bounds = array<i64: 1, 32>}, {pipeline_mode = #tpu.pipeline_mode<synchronous>, transform_indices = @transform_4, window_bounds = array<i64: 32, 128>}, {pipeline_mode = #tpu.pipeline_mode<synchronous>, transform_indices = @transform_5, window_bounds = array<i64: 1, 128>}, {pipeline_mode = #tpu.pipeline_mode<synchronous>, transform_indices = @transform_6, window_bounds = array<i64: 128, 32>}, {pipeline_mode = #tpu.pipeline_mode<synchronous>, transform_indices = @transform_7, window_bounds = array<i64: 1, 32>}, {transform_indices = @transform_8, window_bounds = array<i64: 64, 32>}]} {
    %c0 = arith.constant 0 : index
    %c0_0 = arith.constant 0 : index
    %0 = vector.load %arg1[%c0, %c0_0] : memref<64x32xf32, #tpu.memory_space<vmem>>, vector<64x32xf32>
    %c0_1 = arith.constant 0 : index
    %c0_2 = arith.constant 0 : index
    %1 = vector.load %arg2[%c0_1, %c0_2] : memref<64x32xf32, #tpu.memory_space<vmem>>, vector<64x32xf32>
    %2 = arith.addf %0, %1 : vector<64x32xf32>
    %cst = arith.constant dense<0.000000e+00> : vector<64xf32>
    %3 = vector.multi_reduction <add>, %2, %cst [1] : vector<64x32xf32> to vector<64xf32>
    %4 = vector.shape_cast %3 : vector<64xf32> to vector<64x1xf32>
    %cst_3 = arith.constant 3.200000e+01 : f32
    %5 = vector.broadcast %cst_3 : f32 to vector<64x1xf32>
    %6 = arith.divf %4, %5 : vector<64x1xf32>
    %7 = vector.broadcast %6 : vector<64x1xf32> to vector<64x32xf32>
    %8 = arith.subf %2, %7 : vector<64x32xf32>
    %9 = arith.mulf %8, %8 : vector<64x32xf32>
    %cst_4 = arith.constant dense<0.000000e+00> : vector<64xf32>
    %10 = vector.multi_reduction <add>, %9, %cst_4 [1] : vector<64x32xf32> to vector<64xf32>
    %11 = vector.shape_cast %10 : vector<64xf32> to vector<64x1xf32>
    %cst_5 = arith.constant 3.200000e+01 : f32
    %12 = vector.broadcast %cst_5 : f32 to vector<64x1xf32>
    %13 = arith.divf %11, %12 : vector<64x1xf32>
    %14 = vector.broadcast %6 : vector<64x1xf32> to vector<64x32xf32>
    %15 = arith.subf %2, %14 : vector<64x32xf32>
    %cst_6 = arith.constant 9.99999974E-6 : f32
    %16 = vector.broadcast %cst_6 : f32 to vector<64x1xf32>
    %17 = arith.addf %13, %16 : vector<64x1xf32>
    %18 = math.rsqrt %17 : vector<64x1xf32>
    %19 = vector.broadcast %18 : vector<64x1xf32> to vector<64x32xf32>
    %20 = arith.mulf %15, %19 : vector<64x32xf32>
    %c0_7 = arith.constant 0 : index
    %c0_8 = arith.constant 0 : index
    %21 = vector.load %arg3[%c0_7, %c0_8] : memref<1x32xf32, #tpu.memory_space<vmem>>, vector<1x32xf32>
    %22 = vector.broadcast %21 : vector<1x32xf32> to vector<64x32xf32>
    %23 = arith.mulf %20, %22 : vector<64x32xf32>
    %c0_9 = arith.constant 0 : index
    %c0_10 = arith.constant 0 : index
    %24 = vector.load %arg4[%c0_9, %c0_10] : memref<1x32xf32, #tpu.memory_space<vmem>>, vector<1x32xf32>
    %25 = vector.broadcast %24 : vector<1x32xf32> to vector<64x32xf32>
    %26 = arith.addf %23, %25 : vector<64x32xf32>
    %c0_11 = arith.constant 0 : index
    %c0_12 = arith.constant 0 : index
    %27 = vector.load %arg5[%c0_11, %c0_12] : memref<32x128xf32, #tpu.memory_space<vmem>>, vector<32x128xf32>
    %cst_13 = arith.constant dense<0.000000e+00> : vector<64x128xf32>
    %28 = tpu.matmul %26, %27, %cst_13 {dimension_numbers = #tpu.dot_dimension_numbers<[1], [0], [0], [1], [0, 0, 1, 1], [], []>} : vector<64x32xf32>, vector<32x128xf32>, vector<64x128xf32> -> vector<64x128xf32>
    %c0_14 = arith.constant 0 : index
    %c0_15 = arith.constant 0 : index
    %29 = vector.load %arg6[%c0_14, %c0_15] : memref<1x128xf32, #tpu.memory_space<vmem>>, vector<1x128xf32>
    %30 = vector.broadcast %29 : vector<1x128xf32> to vector<64x128xf32>
    %31 = arith.addf %28, %30 : vector<64x128xf32>
    %cst_16 = arith.constant 5.000000e-01 : f32
    %32 = vector.broadcast %cst_16 : f32 to vector<64x128xf32>
    %33 = arith.mulf %32, %31 : vector<64x128xf32>
    %cst_17 = arith.constant 0.707106769 : f32
    %34 = vector.broadcast %cst_17 : f32 to vector<64x128xf32>
    %35 = arith.mulf %31, %34 : vector<64x128xf32>
    %cst_18 = arith.constant 0.000000e+00 : f32
    %36 = vector.broadcast %cst_18 : f32 to vector<64x128xf32>
    %37 = arith.cmpf oge, %35, %36 : vector<64x128xf32>
    %cst_19 = arith.constant 1.000000e+00 : f32
    %cst_20 = arith.constant -1.000000e+00 : f32
    %38 = vector.broadcast %cst_19 : f32 to vector<64x128xf32>
    %39 = vector.broadcast %cst_20 : f32 to vector<64x128xf32>
    %40 = arith.select %37, %38, %39 : vector<64x128xi1>, vector<64x128xf32>
    %41 = math.absf %35 : vector<64x128xf32>
    %cst_21 = arith.constant 0.327591091 : f32
    %42 = vector.broadcast %cst_21 : f32 to vector<64x128xf32>
    %43 = arith.mulf %42, %41 : vector<64x128xf32>
    %cst_22 = arith.constant 1.000000e+00 : f32
    %44 = vector.broadcast %cst_22 : f32 to vector<64x128xf32>
    %45 = arith.addf %44, %43 : vector<64x128xf32>
    %cst_23 = arith.constant 1.000000e+00 : f32
    %46 = vector.broadcast %cst_23 : f32 to vector<64x128xf32>
    %47 = arith.divf %46, %45 : vector<64x128xf32>
    %cst_24 = arith.constant 1.06140542 : f32
    %48 = vector.broadcast %cst_24 : f32 to vector<64x128xf32>
    %49 = arith.mulf %48, %47 : vector<64x128xf32>
    %cst_25 = arith.constant -1.45315206 : f32
    %50 = vector.broadcast %cst_25 : f32 to vector<64x128xf32>
    %51 = arith.addf %49, %50 : vector<64x128xf32>
    %52 = arith.mulf %51, %47 : vector<64x128xf32>
    %cst_26 = arith.constant 1.42141378 : f32
    %53 = vector.broadcast %cst_26 : f32 to vector<64x128xf32>
    %54 = arith.addf %52, %53 : vector<64x128xf32>
    %55 = arith.mulf %54, %47 : vector<64x128xf32>
    %cst_27 = arith.constant -0.284496725 : f32
    %56 = vector.broadcast %cst_27 : f32 to vector<64x128xf32>
    %57 = arith.addf %55, %56 : vector<64x128xf32>
    %58 = arith.mulf %57, %47 : vector<64x128xf32>
    %cst_28 = arith.constant 0.254829586 : f32
    %59 = vector.broadcast %cst_28 : f32 to vector<64x128xf32>
    %60 = arith.addf %58, %59 : vector<64x128xf32>
    %61 = arith.mulf %60, %47 : vector<64x128xf32>
    %cst_29 = arith.constant 0.000000e+00 : f32
    %62 = vector.broadcast %cst_29 : f32 to vector<64x128xf32>
    %63 = arith.subf %62, %41 : vector<64x128xf32>
    %64 = arith.mulf %63, %41 : vector<64x128xf32>
    %65 = math.exp %64 : vector<64x128xf32>
    %66 = arith.mulf %61, %65 : vector<64x128xf32>
    %cst_30 = arith.constant 1.000000e+00 : f32
    %67 = vector.broadcast %cst_30 : f32 to vector<64x128xf32>
    %68 = arith.subf %67, %66 : vector<64x128xf32>
    %69 = arith.mulf %40, %68 : vector<64x128xf32>
    %cst_31 = arith.constant 1.000000e+00 : f32
    %70 = vector.broadcast %cst_31 : f32 to vector<64x128xf32>
    %71 = arith.addf %70, %69 : vector<64x128xf32>
    %72 = arith.mulf %33, %71 : vector<64x128xf32>
    %c0_32 = arith.constant 0 : index
    %c0_33 = arith.constant 0 : index
    %73 = vector.load %arg7[%c0_32, %c0_33] : memref<128x32xf32, #tpu.memory_space<vmem>>, vector<128x32xf32>
    %cst_34 = arith.constant dense<0.000000e+00> : vector<64x32xf32>
    %74 = tpu.matmul %72, %73, %cst_34 {dimension_numbers = #tpu.dot_dimension_numbers<[1], [0], [0], [1], [0, 0, 1, 1], [], []>} : vector<64x128xf32>, vector<128x32xf32>, vector<64x32xf32> -> vector<64x32xf32>
    %c0_35 = arith.constant 0 : index
    %c0_36 = arith.constant 0 : index
    %75 = vector.load %arg8[%c0_35, %c0_36] : memref<1x32xf32, #tpu.memory_space<vmem>>, vector<1x32xf32>
    %76 = vector.broadcast %75 : vector<1x32xf32> to vector<64x32xf32>
    %77 = arith.addf %74, %76 : vector<64x32xf32>
    %78 = arith.addf %2, %77 : vector<64x32xf32>
    %c0_37 = arith.constant 0 : index
    %c0_38 = arith.constant 0 : index
    %79 = vector.load %arg9[%c0_37, %c0_38] : memref<64x32xf32, #tpu.memory_space<vmem>>, vector<64x32xf32>
    tpu.vector_store %arg9[%c0_37, %c0_38], %78 {strides = array<i32>} : memref<64x32xf32, #tpu.memory_space<vmem>>, vector<64x32xf32>,
    return
  }
  func.func @transform_0(%arg0: i32) -> (i32, i32) {
    %c0_i32 = arith.constant 0 : i32
    %c0_i32_0 = arith.constant 0 : i32
    return %arg0, %c0_i32 : i32, i32
  }
  func.func @transform_1(%arg0: i32) -> (i32, i32) {
    %c0_i32 = arith.constant 0 : i32
    %c0_i32_0 = arith.constant 0 : i32
    return %arg0, %c0_i32 : i32, i32
  }
  func.func @transform_2(%arg0: i32) -> (i32, i32) {
    %c0_i32 = arith.constant 0 : i32
    %c0_i32_0 = arith.constant 0 : i32
    %c0_i32_1 = arith.constant 0 : i32
    return %c0_i32, %c0_i32_0 : i32, i32
  }
  func.func @transform_3(%arg0: i32) -> (i32, i32) {
    %c0_i32 = arith.constant 0 : i32
    %c0_i32_0 = arith.constant 0 : i32
    %c0_i32_1 = arith.constant 0 : i32
    return %c0_i32, %c0_i32_0 : i32, i32
  }
  func.func @transform_4(%arg0: i32) -> (i32, i32) {
    %c0_i32 = arith.constant 0 : i32
    %c0_i32_0 = arith.constant 0 : i32
    %c0_i32_1 = arith.constant 0 : i32
    return %c0_i32, %c0_i32_0 : i32, i32
  }
  func.func @transform_5(%arg0: i32) -> (i32, i32) {
    %c0_i32 = arith.constant 0 : i32
    %c0_i32_0 = arith.constant 0 : i32
    %c0_i32_1 = arith.constant 0 : i32
    return %c0_i32, %c0_i32_0 : i32, i32
  }
  func.func @transform_6(%arg0: i32) -> (i32, i32) {
    %c0_i32 = arith.constant 0 : i32
    %c0_i32_0 = arith.constant 0 : i32
    %c0_i32_1 = arith.constant 0 : i32
    return %c0_i32, %c0_i32_0 : i32, i32
  }
  func.func @transform_7(%arg0: i32) -> (i32, i32) {
    %c0_i32 = arith.constant 0 : i32
    %c0_i32_0 = arith.constant 0 : i32
    %c0_i32_1 = arith.constant 0 : i32
    return %c0_i32, %c0_i32_0 : i32, i32
  }
  func.func @transform_8(%arg0: i32) -> (i32, i32) {
    %c0_i32 = arith.constant 0 : i32
    %c0_i32_0 = arith.constant 0 : i32
    return %arg0, %c0_i32 : i32, i32
  }
}

module attributes {stable_mosaic.version = 11 : i64} {
  func.func @_add_ln_mlp_kernel(%arg0: i32, %arg1: memref<64x32xf32, #tpu.memory_space<vmem>>, %arg2: memref<64x32xf32, #tpu.memory_space<vmem>>, %arg3: memref<1x32xf32, #tpu.memory_space<vmem>>, %arg4: memref<1x32xf32, #tpu.memory_space<vmem>>, %arg5: memref<32x128xf32, #tpu.memory_space<vmem>>, %arg6: memref<1x128xf32, #tpu.memory_space<vmem>>, %arg7: memref<128x32xf32, #tpu.memory_space<vmem>>, %arg8: memref<1x32xf32, #tpu.memory_space<vmem>>, %arg9: memref<64x32xf32, #tpu.memory_space<vmem>>) attributes {dimension_semantics = [#tpu.dimension_semantics<parallel>], iteration_bounds = array<i64: 2>, scalar_prefetch = 0 : i64, scratch_operands = 0 : i64, tpu.core_type = #tpu.core_type<tc>, window_params = [{transform_indices = @transform_0, window_bounds = array<i64: 64, 32>}, {transform_indices = @transform_1, window_bounds = array<i64: 64, 32>}, {pipeline_mode = #tpu.pipeline_mode<synchronous>, transform_indices = @transform_2, window_bounds = array<i64: 1, 32>}, {pipeline_mode = #tpu.pipeline_mode<synchronous>, transform_indices = @transform_3, window_bounds = array<i64: 1, 32>}, {pipeline_mode = #tpu.pipeline_mode<synchronous>, transform_indices = @transform_4, window_bounds = array<i64: 32, 128>}, {pipeline_mode = #tpu.pipeline_mode<synchronous>, transform_indices = @transform_5, window_bounds = array<i64: 1, 128>}, {pipeline_mode = #tpu.pipeline_mode<synchronous>, transform_indices = @transform_6, window_bounds = array<i64: 128, 32>}, {pipeline_mode = #tpu.pipeline_mode<synchronous>, transform_indices = @transform_7, window_bounds = array<i64: 1, 32>}, {transform_indices = @transform_8, window_bounds = array<i64: 64, 32>}]} {
    %c0 = arith.constant 0 : index
    %c0_0 = arith.constant 0 : index
    %0 = vector.load %arg1[%c0, %c0_0] : memref<64x32xf32, #tpu.memory_space<vmem>>, vector<64x32xf32>
    %c0_1 = arith.constant 0 : index
    %c0_2 = arith.constant 0 : index
    %1 = vector.load %arg2[%c0_1, %c0_2] : memref<64x32xf32, #tpu.memory_space<vmem>>, vector<64x32xf32>
    %2 = arith.addf %0, %1 : vector<64x32xf32>
    %cst = arith.constant dense<0.000000e+00> : vector<64xf32>
    %3 = vector.multi_reduction <add>, %2, %cst [1] : vector<64x32xf32> to vector<64xf32>
    %4 = vector.shape_cast %3 : vector<64xf32> to vector<64x1xf32>
    %cst_3 = arith.constant 3.200000e+01 : f32
    %5 = vector.broadcast %cst_3 : f32 to vector<64x1xf32>
    %6 = arith.divf %4, %5 : vector<64x1xf32>
    %7 = vector.broadcast %6 : vector<64x1xf32> to vector<64x32xf32>
    %8 = arith.subf %2, %7 : vector<64x32xf32>
    %9 = arith.mulf %8, %8 : vector<64x32xf32>
    %cst_4 = arith.constant dense<0.000000e+00> : vector<64xf32>
    %10 = vector.multi_reduction <add>, %9, %cst_4 [1] : vector<64x32xf32> to vector<64xf32>
    %11 = vector.shape_cast %10 : vector<64xf32> to vector<64x1xf32>
    %cst_5 = arith.constant 3.200000e+01 : f32
    %12 = vector.broadcast %cst_5 : f32 to vector<64x1xf32>
    %13 = arith.divf %11, %12 : vector<64x1xf32>
    %14 = vector.broadcast %6 : vector<64x1xf32> to vector<64x32xf32>
    %15 = arith.subf %2, %14 : vector<64x32xf32>
    %cst_6 = arith.constant 9.99999974E-6 : f32
    %16 = vector.broadcast %cst_6 : f32 to vector<64x1xf32>
    %17 = arith.addf %13, %16 : vector<64x1xf32>
    %18 = math.rsqrt %17 : vector<64x1xf32>
    %19 = vector.broadcast %18 : vector<64x1xf32> to vector<64x32xf32>
    %20 = arith.mulf %15, %19 : vector<64x32xf32>
    %c0_7 = arith.constant 0 : index
    %c0_8 = arith.constant 0 : index
    %21 = vector.load %arg3[%c0_7, %c0_8] : memref<1x32xf32, #tpu.memory_space<vmem>>, vector<1x32xf32>
    %22 = vector.broadcast %21 : vector<1x32xf32> to vector<64x32xf32>
    %23 = arith.mulf %20, %22 : vector<64x32xf32>
    %c0_9 = arith.constant 0 : index
    %c0_10 = arith.constant 0 : index
    %24 = vector.load %arg4[%c0_9, %c0_10] : memref<1x32xf32, #tpu.memory_space<vmem>>, vector<1x32xf32>
    %25 = vector.broadcast %24 : vector<1x32xf32> to vector<64x32xf32>
    %26 = arith.addf %23, %25 : vector<64x32xf32>
    %c0_11 = arith.constant 0 : index
    %c0_12 = arith.constant 0 : index
    %27 = vector.load %arg5[%c0_11, %c0_12] : memref<32x128xf32, #tpu.memory_space<vmem>>, vector<32x128xf32>
    %cst_13 = arith.constant dense<0.000000e+00> : vector<64x128xf32>
    %28 = tpu.matmul %26, %27, %cst_13 {dimension_numbers = #tpu.dot_dimension_numbers<[1], [0], [0], [1], [0, 0, 1, 1], [], []>} : vector<64x32xf32>, vector<32x128xf32>, vector<64x128xf32> -> vector<64x128xf32>
    %c0_14 = arith.constant 0 : index
    %c0_15 = arith.constant 0 : index
    %29 = vector.load %arg6[%c0_14, %c0_15] : memref<1x128xf32, #tpu.memory_space<vmem>>, vector<1x128xf32>
    %30 = vector.broadcast %29 : vector<1x128xf32> to vector<64x128xf32>
    %31 = arith.addf %28, %30 : vector<64x128xf32>
    %cst_16 = arith.constant 5.000000e-01 : f32
    %32 = vector.broadcast %cst_16 : f32 to vector<64x128xf32>
    %33 = arith.mulf %32, %31 : vector<64x128xf32>
    %cst_17 = arith.constant 0.707106769 : f32
    %34 = vector.broadcast %cst_17 : f32 to vector<64x128xf32>
    %35 = arith.mulf %31, %34 : vector<64x128xf32>
    %cst_18 = arith.constant 0.000000e+00 : f32
    %36 = vector.broadcast %cst_18 : f32 to vector<64x128xf32>
    %37 = arith.cmpf oge, %35, %36 : vector<64x128xf32>
    %cst_19 = arith.constant 1.000000e+00 : f32
    %cst_20 = arith.constant -1.000000e+00 : f32
    %38 = vector.broadcast %cst_19 : f32 to vector<64x128xf32>
    %39 = vector.broadcast %cst_20 : f32 to vector<64x128xf32>
    %40 = arith.select %37, %38, %39 : vector<64x128xi1>, vector<64x128xf32>
    %41 = math.absf %35 : vector<64x128xf32>
    %cst_21 = arith.constant 0.327591091 : f32
    %42 = vector.broadcast %cst_21 : f32 to vector<64x128xf32>
    %43 = arith.mulf %42, %41 : vector<64x128xf32>
    %cst_22 = arith.constant 1.000000e+00 : f32
    %44 = vector.broadcast %cst_22 : f32 to vector<64x128xf32>
    %45 = arith.addf %44, %43 : vector<64x128xf32>
    %cst_23 = arith.constant 1.000000e+00 : f32
    %46 = vector.broadcast %cst_23 : f32 to vector<64x128xf32>
    %47 = arith.divf %46, %45 : vector<64x128xf32>
    %cst_24 = arith.constant 1.06140542 : f32
    %48 = vector.broadcast %cst_24 : f32 to vector<64x128xf32>
    %49 = arith.mulf %48, %47 : vector<64x128xf32>
    %cst_25 = arith.constant -1.45315206 : f32
    %50 = vector.broadcast %cst_25 : f32 to vector<64x128xf32>
    %51 = arith.addf %49, %50 : vector<64x128xf32>
    %52 = arith.mulf %51, %47 : vector<64x128xf32>
    %cst_26 = arith.constant 1.42141378 : f32
    %53 = vector.broadcast %cst_26 : f32 to vector<64x128xf32>
    %54 = arith.addf %52, %53 : vector<64x128xf32>
    %55 = arith.mulf %54, %47 : vector<64x128xf32>
    %cst_27 = arith.constant -0.284496725 : f32
    %56 = vector.broadcast %cst_27 : f32 to vector<64x128xf32>
    %57 = arith.addf %55, %56 : vector<64x128xf32>
    %58 = arith.mulf %57, %47 : vector<64x128xf32>
    %cst_28 = arith.constant 0.254829586 : f32
    %59 = vector.broadcast %cst_28 : f32 to vector<64x128xf32>
    %60 = arith.addf %58, %59 : vector<64x128xf32>
    %61 = arith.mulf %60, %47 : vector<64x128xf32>
    %cst_29 = arith.constant 0.000000e+00 : f32
    %62 = vector.broadcast %cst_29 : f32 to vector<64x128xf32>
    %63 = arith.subf %62, %41 : vector<64x128xf32>
    %64 = arith.mulf %63, %41 : vector<64x128xf32>
    %65 = math.exp %64 : vector<64x128xf32>
    %66 = arith.mulf %61, %65 : vector<64x128xf32>
    %cst_30 = arith.constant 1.000000e+00 : f32
    %67 = vector.broadcast %cst_30 : f32 to vector<64x128xf32>
    %68 = arith.subf %67, %66 : vector<64x128xf32>
    %69 = arith.mulf %40, %68 : vector<64x128xf32>
    %cst_31 = arith.constant 1.000000e+00 : f32
    %70 = vector.broadcast %cst_31 : f32 to vector<64x128xf32>
    %71 = arith.addf %70, %69 : vector<64x128xf32>
    %72 = arith.mulf %33, %71 : vector<64x128xf32>
    %c0_32 = arith.constant 0 : index
    %c0_33 = arith.constant 0 : index
    %73 = vector.load %arg7[%c0_32, %c0_33] : memref<128x32xf32, #tpu.memory_space<vmem>>, vector<128x32xf32>
    %cst_34 = arith.constant dense<0.000000e+00> : vector<64x32xf32>
    %74 = tpu.matmul %72, %73, %cst_34 {dimension_numbers = #tpu.dot_dimension_numbers<[1], [0], [0], [1], [0, 0, 1, 1], [], []>} : vector<64x128xf32>, vector<128x32xf32>, vector<64x32xf32> -> vector<64x32xf32>
    %c0_35 = arith.constant 0 : index
    %c0_36 = arith.constant 0 : index
    %75 = vector.load %arg8[%c0_35, %c0_36] : memref<1x32xf32, #tpu.memory_space<vmem>>, vector<1x32xf32>
    %76 = vector.broadcast %75 : vector<1x32xf32> to vector<64x32xf32>
    %77 = arith.addf %74, %76 : vector<64x32xf32>
    %78 = arith.addf %2, %77 : vector<64x32xf32>
    %c0_37 = arith.constant 0 : index
    %c0_38 = arith.constant 0 : index
    %79 = vector.load %arg9[%c0_37, %c0_38] : memref<64x32xf32, #tpu.memory_space<vmem>>, vector<64x32xf32>
    tpu.vector_store %arg9[%c0_37, %c0_38], %78 {strides = array<i32>} : memref<64x32xf32, #tpu.memory_space<vmem>>, vector<64x32xf32>,
    return
  }
  func.func @transform_0(%arg0: i32) -> (i32, i32) {
    %c0_i32 = arith.constant 0 : i32
    %c0_i32_0 = arith.constant 0 : i32
    return %arg0, %c0_i32 : i32, i32
  }
  func.func @transform_1(%arg0: i32) -> (i32, i32) {
    %c0_i32 = arith.constant 0 : i32
    %c0_i32_0 = arith.constant 0 : i32
    return %arg0, %c0_i32 : i32, i32
  }
  func.func @transform_2(%arg0: i32) -> (i32, i32) {
    %c0_i32 = arith.constant 0 : i32
    %c0_i32_0 = arith.constant 0 : i32
    %c0_i32_1 = arith.constant 0 : i32
    return %c0_i32, %c0_i32_0 : i32, i32
  }
  func.func @transform_3(%arg0: i32) -> (i32, i32) {
    %c0_i32 = arith.constant 0 : i32
    %c0_i32_0 = arith.constant 0 : i32
    %c0_i32_1 = arith.constant 0 : i32
    return %c0_i32, %c0_i32_0 : i32, i32
  }
  func.func @transform_4(%arg0: i32) -> (i32, i32) {
    %c0_i32 = arith.constant 0 : i32
    %c0_i32_0 = arith.constant 0 : i32
    %c0_i32_1 = arith.constant 0 : i32
    return %c0_i32, %c0_i32_0 : i32, i32
  }
  func.func @transform_5(%arg0: i32) -> (i32, i32) {
    %c0_i32 = arith.constant 0 : i32
    %c0_i32_0 = arith.constant 0 : i32
    %c0_i32_1 = arith.constant 0 : i32
    return %c0_i32, %c0_i32_0 : i32, i32
  }
  func.func @transform_6(%arg0: i32) -> (i32, i32) {
    %c0_i32 = arith.constant 0 : i32
    %c0_i32_0 = arith.constant 0 : i32
    %c0_i32_1 = arith.constant 0 : i32
    return %c0_i32, %c0_i32_0 : i32, i32
  }
  func.func @transform_7(%arg0: i32) -> (i32, i32) {
    %c0_i32 = arith.constant 0 : i32
    %c0_i32_0 = arith.constant 0 : i32
    %c0_i32_1 = arith.constant 0 : i32
    return %c0_i32, %c0_i32_0 : i32, i32
  }
  func.func @transform_8(%arg0: i32) -> (i32, i32) {
    %c0_i32 = arith.constant 0 : i32
    %c0_i32_0 = arith.constant 0 : i32
    return %arg0, %c0_i32 : i32, i32
  }
}

</mosaic_0001>

<llo_original>
// kernel: stage_module.7
$region0: #{stage_module.7}
  #allocation0 [shape = 'u32[]', space=smem, size = 0x4, offset = 0x4, fixed_abs, tag = 'smem constant byte address 0x4 - core index']
  #allocation1 [shape = 'u32[144,128]{1,0:T(1,128)}', space=vmem, size = 0x12000, scoped, tag = 'internal scratch']
  %s0 = inlined_call_operand.vmem [shape: f32[128,16], index: 0, kind: input, shape index: {}]
  %s1 = inlined_call_operand.vmem [shape: f32[16,32], index: 1, kind: input, shape index: {}]
  %s2 = inlined_call_operand.vmem [shape: f32[1,32], index: 2, kind: input, shape index: {}]
  %s3 = inlined_call_operand.vmem [shape: f32[128,32], index: 3, kind: output, shape index: {}]
  %s4 = sld [smem:[#allocation0]]
  $region45: #{stage_module.7} parent=0
    _
  %s6 = ssub.s32 1, %s4
  %s7 = scalar_select 0, %s6, %s4
  loop: start=0, step=1, limit=4
  $region2: #{stage_module.7} parent=0 // loop_pre_header
    _
  $region3: #{stage_module.7} parent=0 // loop_header
    %s9 = sphi 0, %s13
    %p10 = scmp.ge.s32.totalorder %s9, 4
    %s19 = sphi 0, %s21
    %s22 = sphi 0, %s19
    %s23 = sphi 0, %s22
    %s39 = sphi 0, %s23
    %s43 = sphi 0, %s43
    %s45 = sphi 0, %s43
    %s46 = sphi 0, %s45
    %s60 = sphi 0, %s46
    %s64 = sphi 0, %s64
    %s66 = sphi 0, %s64
    %s67 = sphi 0, %s66
    %s81 = sphi 0, %s67
    %s87 = sphi 0, %s89
    %s90 = sphi 0, %s87
    %s91 = sphi 0, %s90
    %s107 = sphi 0, %s91
  $region4: #{stage_module.7} parent=0 // loop_header_branch
    %12 = sbr.rel (%p10) target = $region8
  $region5: #{stage_module.7} parent=0 // loop_body
    %s14 = ssub.s32 %s9, 1
    %s15 = ssub.s32 %s9, 2
    %s16 = sadd.s32 %s9, 1
    %s17 = ssub.s32 %s9, %s16
    %p18 = scmp.eq.s32.totalorder %s17, 0
    %s20 = sadd.s32 %s19, 1
    %s21 = scalar_select %p18, %s19, %s20
    %p24 = pneg %p18
    %p25 = scmp.eq.s32.totalorder %s9, 1
    %p26 = por %p24, %p25
    %p27 = scmp.ne.s32.totalorder %s19, %s22
    %p28 = scmp.eq.s32.totalorder %s9, 0
    %p29 = por %p27, %p28
    %p30 = scmp.ne.s32.totalorder %s19, %s22
    %p31 = scmp.eq.s32.totalorder %s14, 1
    %p32 = por %p30, %p31
    %p33 = scmp.ne.s32.totalorder %s22, %s23
    %p34 = scmp.eq.s32.totalorder %s14, 0
    %p35 = por %p33, %p34
    %p36 = scmp.ne.s32.totalorder %s22, %s23
    %p37 = scmp.eq.s32.totalorder %s15, 1
    %p38 = por %p36, %p37
    %p40 = scmp.ne.s32.totalorder %s23, %s39
    %p41 = scmp.eq.s32.totalorder %s15, 0
    %p42 = por %p40, %p41
    %s44 = sadd.s32 %s43, 1
    %p47 = scmp.eq.s32.totalorder %s9, 1
    %p48 = scmp.ne.s32.totalorder %s43, %s45
    %p49 = scmp.eq.s32.totalorder %s9, 0
    %p50 = por %p48, %p49
    %p51 = scmp.ne.s32.totalorder %s43, %s45
    %p52 = scmp.eq.s32.totalorder %s14, 1
    %p53 = por %p51, %p52
    %p54 = scmp.ne.s32.totalorder %s45, %s46
    %p55 = scmp.eq.s32.totalorder %s14, 0
    %p56 = por %p54, %p55
    %p57 = scmp.ne.s32.totalorder %s45, %s46
    %p58 = scmp.eq.s32.totalorder %s15, 1
    %p59 = por %p57, %p58
    %p61 = scmp.ne.s32.totalorder %s46, %s60
    %p62 = scmp.eq.s32.totalorder %s15, 0
    %p63 = por %p61, %p62
    %s65 = sadd.s32 %s64, 1
    %p68 = scmp.eq.s32.totalorder %s9, 1
    %p69 = scmp.ne.s32.totalorder %s64, %s66
    %p70 = scmp.eq.s32.totalorder %s9, 0
    %p71 = por %p69, %p70
    %p72 = scmp.ne.s32.totalorder %s64, %s66
    %p73 = scmp.eq.s32.totalorder %s14, 1
    %p74 = por %p72, %p73
    %p75 = scmp.ne.s32.totalorder %s66, %s67
    %p76 = scmp.eq.s32.totalorder %s14, 0
    %p77 = por %p75, %p76
    %p78 = scmp.ne.s32.totalorder %s66, %s67
    %p79 = scmp.eq.s32.totalorder %s15, 1
    %p80 = por %p78, %p79
    %p82 = scmp.ne.s32.totalorder %s67, %s81
    %p83 = scmp.eq.s32.totalorder %s15, 0
    %p84 = por %p82, %p83
    %s85 = ssub.s32 %s9, %s16
    %p86 = scmp.eq.s32.totalorder %s85, 0
    %s88 = sadd.s32 %s87, 1
    %s89 = scalar_select %p86, %s87, %s88
    %p92 = pneg %p86
    %p93 = scmp.eq.s32.totalorder %s9, 1
    %p94 = por %p92, %p93
    %p95 = scmp.ne.s32.totalorder %s87, %s90
    %p96 = scmp.eq.s32.totalorder %s9, 0
    %p97 = por %p95, %p96
    %p98 = scmp.ne.s32.totalorder %s87, %s90
    %p99 = scmp.eq.s32.totalorder %s14, 1
    %p100 = por %p98, %p99
    %p101 = scmp.ne.s32.totalorder %s90, %s91
    %p102 = scmp.eq.s32.totalorder %s14, 0
    %p103 = por %p101, %p102
    %p104 = scmp.ne.s32.totalorder %s90, %s91
    %p105 = scmp.eq.s32.totalorder %s15, 1
    %p106 = por %p104, %p105
    %p108 = scmp.ne.s32.totalorder %s91, %s107
    %p109 = scmp.eq.s32.totalorder %s15, 0
    %p110 = por %p108, %p109
    %p111 = scmp.le.s32.totalorder 1, %s9
    %p112 = scmp.lt.s32.totalorder %s9, 3
    %p113 = pnand %p111, %p112
    %p114 = pneg %p113
    // Predicated region
    $region9: #{stage_module.7} parent=5 // pred_check
      _
    $region10: #{stage_module.7} parent=5 // pred_check_branch
      %116 = sbr.rel (%p113) target = $region12
    $region11: #{stage_module.7} parent=5 // pred_region
      %s117 = ssub.s32 %s9, 1
      // Predicated region
      $region13: #{stage_module.7} parent=11 // pred_check
        %p118 = pneg %p56
      $region14: #{stage_module.7} parent=11 // pred_check_branch
        %120 = sbr.rel (%p118) target = $region16
      $region15: #{stage_module.7} parent=11 // pred_region
        _
      $region16: #{stage_module.7} parent=11 // pred_fallthru
        _
      // Predicated region
      $region17: #{stage_module.7} parent=11 // pred_check
        %p121 = pneg %p77
      $region18: #{stage_module.7} parent=11 // pred_check_branch
        %123 = sbr.rel (%p121) target = $region20
      $region19: #{stage_module.7} parent=11 // pred_region
        _
      $region20: #{stage_module.7} parent=11 // pred_fallthru
        _
    $region12: #{stage_module.7} parent=5 // pred_fallthru
      _
    %p124 = scmp.lt.s32.totalorder %s9, 2
    // Predicated region
    $region21: #{stage_module.7} parent=5 // pred_check
      %p125 = pneg %p124
    $region22: #{stage_module.7} parent=5 // pred_check_branch
      %127 = sbr.rel (%p125) target = $region24
    $region23: #{stage_module.7} parent=5 // pred_region
      // Predicated region
      $region25: #{stage_module.7} parent=23 // pred_check
        %p128 = pneg %p29
      $region26: #{stage_module.7} parent=23 // pred_check_branch
        %130 = sbr.rel (%p128) target = $region28
      $region27: #{stage_module.7} parent=23 // pred_region
        %s131 = smul.u32 8, %s9
        %p132 = scmp.lt.s32.totalorder %s131, 15
        %s133 = scalar_select %p132, %s131, 15
        %s134 = smul.addr %s133, 8
        %s135 = scalar_lea.vmem %s0, %s134
        %s136 = smul.u32 8, %s9
      $region28: #{stage_module.7} parent=23 // pred_fallthru
        _
    $region24: #{stage_module.7} parent=5 // pred_fallthru
      _
    %p137 = scmp.le.s32.totalorder 1, %s9
    %p138 = scmp.lt.s32.totalorder %s9, 3
    %p139 = pnand %p137, %p138
    %p140 = pneg %p139
    // Predicated region
    $region29: #{stage_module.7} parent=5 // pred_check
      _
    $region30: #{stage_module.7} parent=5 // pred_check_branch
      %142 = sbr.rel (%p139) target = $region32
    $region31: #{stage_module.7} parent=5 // pred_region
      %s143 = ssub.s32 %s9, 1
      %s144 = smul.u32 8, %s14
      %p145 = scmp.lt.s32.totalorder %s144, 15
      %s146 = scalar_select %p145, %s144, 15
      %s147 = smul.addr %s146, 8
      %s148 = scalar_lea.vmem %s0, %s147
      %p149 = pneg %p35
      %p150 = pneg %p32
      %p151 = pneg %p56
      %p152 = pneg %p53
      %p153 = pneg %p77
      %p154 = pneg %p74
      %p155 = pneg %p103
      %p156 = pneg %p100
      %s157 = smul.u32 8, %s14
      %p158 = scmp.lt.s32.totalorder %s157, 15
      %s159 = scalar_select %p158, %s157, 15
      %s160 = smul.addr %s159, 8
      %s161 = scalar_lea.vmem %s3, %s160
      %s162 = smul.u32 8, %s14
      %p163 = scmp.lt.s32.totalorder %s162, 15
      %s164 = scalar_select %p163, %s162, 15
      %s165 = smul.addr %s164, 8
      %s166 = scalar_lea.vmem %s0, %s165
      %s167 = smul.u32 8, %s14
      %s168 = smul.u32 8, %s14
      %p169 = scmp.lt.s32.totalorder %s168, 15
      %s170 = scalar_select %p169, %s168, 15
      %s171 = smul.addr %s170, 8
      %s172 = scalar_lea.vmem %s3, %s171
      %s173 = smul.u32 8, %s14
      %v174 = vld [vmem:[%s166] sm:$0xff]
      %v175 = vld [vmem:[%s166 + $0x8] sm:$0xff]
      %v176 = vld [vmem:[%s166 + $0x10] sm:$0xff]
      %v177 = vld [vmem:[%s166 + $0x18] sm:$0xff]
      %v178 = vld [vmem:[%s166 + $0x20] sm:$0xff]
      %v179 = vld [vmem:[%s166 + $0x28] sm:$0xff]
      %v180 = vld [vmem:[%s166 + $0x30] sm:$0xff]
      %v181 = vld [vmem:[%s166 + $0x38] sm:$0xff]
      %v182 = vld [vmem:[%s1] sm:$0xff]
      %v183 = vld [vmem:[%s1 + $0x8] sm:$0xff]
      %v184 = vld [vmem:[%s2] sm:$0x1]
      %v186 = vlaneseq
      %v187 = vshrl.u32 %v186, 7
      %v188 = vsub.s32 0, %v187
      %v189 = vrot.slane %v184, %v188
      %vm191 = vcmask 130048
      %v193 = vsel %vm191, %v174, 0
      %v196 = vsel %vm191, %v175, 0
      %v199 = vsel %vm191, %v176, 0
      %v202 = vsel %vm191, %v177, 0
      %v205 = vsel %vm191, %v178, 0
      %v208 = vsel %vm191, %v179, 0
      %v211 = vsel %vm191, %v180, 0
      %v214 = vsel %vm191, %v181, 0
      %216 = vmatprep.subr.mxu0 0.0
      %217 = vmatpush1.msra.mxu0 %v182
      %218 = vmatprep.subr.mxu0 0.0
      %219 = vmatpush1.msra.mxu0 %v183
      %220 = vmatprep.subr.mxu0 0.0
      %221 = vmatpush1.msra.mxu0 0.0
      %222 = vmatprep.subr.mxu0 0.0
      %223 = vmatpush1.msra.mxu0 0.0
      %224 = vmatprep.subr.mxu0 0.0
      %225 = vmatpush1.msra.mxu0 0.0
      %226 = vmatprep.subr.mxu0 0.0
      %227 = vmatpush1.msra.mxu0 0.0
      %228 = vmatprep.subr.mxu0 0.0
      %229 = vmatpush1.msra.mxu0 0.0
      %230 = vmatprep.subr.mxu0 0.0
      %231 = vmatpush1.msra.mxu0 0.0
      %232 = vmatprep.subr.mxu0 0.0
      %233 = vmatpush1.msra.mxu0 0.0
      %234 = vmatprep.subr.mxu0 0.0
      %235 = vmatpush1.msra.mxu0 0.0
      %236 = vmatprep.subr.mxu0 0.0
      %237 = vmatpush1.msra.mxu0 0.0
      %238 = vmatprep.subr.mxu0 0.0
      %239 = vmatpush1.msra.mxu0 0.0
      %240 = vmatprep.subr.mxu0 0.0
      %241 = vmatpush1.msra.mxu0 0.0
      %242 = vmatprep.subr.mxu0 0.0
      %243 = vmatpush1.msra.mxu0 0.0
      %244 = vmatprep.subr.mxu0 0.0
      %245 = vmatpush1.msra.mxu0 0.0
      %246 = vmatprep.subr.mxu0 0.0
      %247 = vmatpush1.msra.mxu0 0.0
      %248 = vmatprep.subr.mxu0 0.0
      %249 = vmatpush1.msra.mxu0 0.0
      %250 = vmatprep.subr.mxu0 0.0
      %251 = vmatpush1.msra.mxu0 0.0
      %252 = vmatprep.subr.mxu0 0.0
      %253 = vmatpush1.msra.mxu0 0.0
      %254 = vmatprep.subr.mxu0 0.0
      %255 = vmatpush1.msra.mxu0 0.0
      %256 = vmatprep.subr.mxu0 0.0
      %257 = vmatpush1.msra.mxu0 0.0
      %258 = vmatprep.subr.mxu0 0.0
      %259 = vmatpush1.msra.mxu0 0.0
      %260 = vmatprep.subr.mxu0 0.0
      %261 = vmatpush1.msra.mxu0 0.0
      %262 = vmatprep.subr.mxu0 0.0
      %263 = vmatpush1.msra.mxu0 0.0
      %264 = vmatprep.subr.mxu0 0.0
      %265 = vmatpush1.msra.mxu0 0.0
      %266 = vmatprep.subr.mxu0 0.0
      %267 = vmatpush1.msra.mxu0 0.0
      %268 = vmatprep.subr.mxu0 0.0
      %269 = vmatpush1.msra.mxu0 0.0
      %270 = vmatprep.subr.mxu0 0.0
      %271 = vmatpush1.msra.mxu0 0.0
      %272 = vmatprep.subr.mxu0 0.0
      %273 = vmatpush1.msra.mxu0 0.0
      %274 = vmatprep.subr.mxu0 0.0
      %275 = vmatpush1.msra.mxu0 0.0
      %276 = vmatprep.subr.mxu0 0.0
      %277 = vmatpush1.msra.mxu0 0.0
      %278 = vmatprep.subr.mxu0 0.0
      %279 = vmatpush1.msra.mxu0 0.0
      %280 = vmatprep.mubr.f32.mxu0 0.0
      %281 = vmatmul.mubr.f32.gmra.mrb[0].mxu0 %v193
      %v282 = vpop.f32.mrb[0].mxu0
      %v283 = vadd.f32 %v189, %v282
      %v284 = vpop.f32.mrb[0].mxu0
      %285 = vmatprep.mubr.f32.mxu0 0.0
      %286 = vmatmul.mubr.f32.gmra.mrb[0].mxu0 %v196
      %v287 = vpop.f32.mrb[0].mxu0
      %v288 = vadd.f32 %v189, %v287
      %v289 = vpop.f32.mrb[0].mxu0
      %290 = vmatprep.mubr.f32.mxu0 0.0
      %291 = vmatmul.mubr.f32.gmra.mrb[0].mxu0 %v199
      %v292 = vpop.f32.mrb[0].mxu0
      %v293 = vadd.f32 %v189, %v292
      %v294 = vpop.f32.mrb[0].mxu0
      %295 = vmatprep.mubr.f32.mxu0 0.0
      %296 = vmatmul.mubr.f32.gmra.mrb[0].mxu0 %v202
      %v297 = vpop.f32.mrb[0].mxu0
      %v298 = vadd.f32 %v189, %v297
      %v299 = vpop.f32.mrb[0].mxu0
      %300 = vmatprep.mubr.f32.mxu0 0.0
      %301 = vmatmul.mubr.f32.gmra.mrb[0].mxu0 %v205
      %v302 = vpop.f32.mrb[0].mxu0
      %v303 = vadd.f32 %v189, %v302
      %v304 = vpop.f32.mrb[0].mxu0
      %305 = vmatprep.mubr.f32.mxu0 0.0
      %306 = vmatmul.mubr.f32.gmra.mrb[0].mxu0 %v208
      %v307 = vpop.f32.mrb[0].mxu0
      %v308 = vadd.f32 %v189, %v307
      %v309 = vpop.f32.mrb[0].mxu0
      %310 = vmatprep.mubr.f32.mxu0 0.0
      %311 = vmatmul.mubr.f32.gmra.mrb[0].mxu0 %v211
      %v312 = vpop.f32.mrb[0].mxu0
      %v313 = vadd.f32 %v189, %v312
      %v314 = vpop.f32.mrb[0].mxu0
      %315 = vmatprep.mubr.f32.mxu0 0.0
      %316 = vmatmul.mubr.f32.gmra.mrb[0].mxu0 %v214
      %v317 = vpop.f32.mrb[0].mxu0
      %v318 = vadd.f32 %v189, %v317
      %v319 = vpop.f32.mrb[0].mxu0
      %320 = vdwg.mxu0
      %vm321 = vcmask 261120
      %322 = vst.msk [vmem:[%s172] sm:$0xff] %vm321, %v283
      %323 = vst.msk [vmem:[%s172 + $0x8] sm:$0xff] %vm321, %v288
      %324 = vst.msk [vmem:[%s172 + $0x10] sm:$0xff] %vm321, %v293
      %325 = vst.msk [vmem:[%s172 + $0x18] sm:$0xff] %vm321, %v298
      %326 = vst.msk [vmem:[%s172 + $0x20] sm:$0xff] %vm321, %v303
      %327 = vst.msk [vmem:[%s172 + $0x28] sm:$0xff] %vm321, %v308
      %328 = vst.msk [vmem:[%s172 + $0x30] sm:$0xff] %vm321, %v313
      %329 = vst.msk [vmem:[%s172 + $0x38] sm:$0xff] %vm321, %v318
      %s330 = smul.u32 8, %s14
      %p331 = scmp.lt.s32.totalorder %s330, 15
      %s332 = scalar_select %p331, %s330, 15
      %s333 = smul.addr %s332, 8
      %s334 = scalar_lea.vmem %s3, %s333
      // Predicated region
      $region33: #{stage_module.7} parent=31 // pred_check
        %p335 = pneg %p100
      $region34: #{stage_module.7} parent=31 // pred_check_branch
        %337 = sbr.rel (%p335) target = $region36
      $region35: #{stage_module.7} parent=31 // pred_region
        %s338 = smul.u32 8, %s14
      $region36: #{stage_module.7} parent=31 // pred_fallthru
        _
    $region32: #{stage_module.7} parent=5 // pred_fallthru
      _
    %p339 = scmp.le.s32.totalorder 2, %s9
    // Predicated region
    $region37: #{stage_module.7} parent=5 // pred_check
      %p340 = pneg %p339
    $region38: #{stage_module.7} parent=5 // pred_check_branch
      %342 = sbr.rel (%p340) target = $region40
    $region39: #{stage_module.7} parent=5 // pred_region
      %s343 = ssub.s32 %s9, 2
      // Predicated region
      $region41: #{stage_module.7} parent=39 // pred_check
        %p344 = pneg %p106
      $region42: #{stage_module.7} parent=39 // pred_check_branch
        %346 = sbr.rel (%p344) target = $region44
      $region43: #{stage_module.7} parent=39 // pred_region
        %s347 = smul.u32 8, %s15
        %p348 = scmp.lt.s32.totalorder %s347, 15
        %s349 = scalar_select %p348, %s347, 15
        %s350 = smul.addr %s349, 8
        %s351 = scalar_lea.vmem %s3, %s350
      $region44: #{stage_module.7} parent=39 // pred_fallthru
        _
    $region40: #{stage_module.7} parent=5 // pred_fallthru
      _
  $region6: #{stage_module.7} parent=0 // loop_footer
    %s13 = sadd.s32 1, %s9
  $region7: #{stage_module.7} parent=0 // loop_footer_branch
    %8 = sbr.rel target = $region3
  $region8: #{stage_module.7} parent=0 // loop_exit
    _

// kernel: stage_module.8
$region0: #{stage_module.8}
  #allocation0 [shape = 'u32[]', space=smem, size = 0x4, offset = 0x4, fixed_abs, tag = 'smem constant byte address 0x4 - core index']
  #allocation1 [shape = 'u32[144,128]{1,0:T(1,128)}', space=vmem, size = 0x12000, scoped, tag = 'internal scratch']
  %s0 = inlined_call_operand.vmem [shape: f32[128,32], index: 0, kind: input, shape index: {}]
  %s1 = inlined_call_operand.vmem [shape: f32[1,32], index: 1, kind: input, shape index: {}]
  %s2 = inlined_call_operand.vmem [shape: f32[1,32], index: 2, kind: input, shape index: {}]
  %s3 = inlined_call_operand.vmem [shape: f32[32,96], index: 3, kind: input, shape index: {}]
  %s4 = inlined_call_operand.vmem [shape: f32[128,96], index: 4, kind: output, shape index: {}]
  %s5 = sld [smem:[#allocation0]]
  $region49: #{stage_module.8} parent=0
    _
  %s7 = ssub.s32 1, %s5
  %s8 = scalar_select 0, %s7, %s5
  loop: start=0, step=1, limit=4
  $region2: #{stage_module.8} parent=0 // loop_pre_header
    _
  $region3: #{stage_module.8} parent=0 // loop_header
    %s10 = sphi 0, %s14
    %p11 = scmp.ge.s32.totalorder %s10, 4
    %s20 = sphi 0, %s22
    %s23 = sphi 0, %s20
    %s24 = sphi 0, %s23
    %s40 = sphi 0, %s24
    %s44 = sphi 0, %s44
    %s46 = sphi 0, %s44
    %s47 = sphi 0, %s46
    %s61 = sphi 0, %s47
    %s65 = sphi 0, %s65
    %s67 = sphi 0, %s65
    %s68 = sphi 0, %s67
    %s82 = sphi 0, %s68
    %s86 = sphi 0, %s86
    %s88 = sphi 0, %s86
    %s89 = sphi 0, %s88
    %s103 = sphi 0, %s89
    %s109 = sphi 0, %s111
    %s112 = sphi 0, %s109
    %s113 = sphi 0, %s112
    %s129 = sphi 0, %s113
  $region4: #{stage_module.8} parent=0 // loop_header_branch
    %13 = sbr.rel (%p11) target = $region8
  $region5: #{stage_module.8} parent=0 // loop_body
    %s15 = ssub.s32 %s10, 1
    %s16 = ssub.s32 %s10, 2
    %s17 = sadd.s32 %s10, 1
    %s18 = ssub.s32 %s10, %s17
    %p19 = scmp.eq.s32.totalorder %s18, 0
    %s21 = sadd.s32 %s20, 1
    %s22 = scalar_select %p19, %s20, %s21
    %p25 = pneg %p19
    %p26 = scmp.eq.s32.totalorder %s10, 1
    %p27 = por %p25, %p26
    %p28 = scmp.ne.s32.totalorder %s20, %s23
    %p29 = scmp.eq.s32.totalorder %s10, 0
    %p30 = por %p28, %p29
    %p31 = scmp.ne.s32.totalorder %s20, %s23
    %p32 = scmp.eq.s32.totalorder %s15, 1
    %p33 = por %p31, %p32
    %p34 = scmp.ne.s32.totalorder %s23, %s24
    %p35 = scmp.eq.s32.totalorder %s15, 0
    %p36 = por %p34, %p35
    %p37 = scmp.ne.s32.totalorder %s23, %s24
    %p38 = scmp.eq.s32.totalorder %s16, 1
    %p39 = por %p37, %p38
    %p41 = scmp.ne.s32.totalorder %s24, %s40
    %p42 = scmp.eq.s32.totalorder %s16, 0
    %p43 = por %p41, %p42
    %s45 = sadd.s32 %s44, 1
    %p48 = scmp.eq.s32.totalorder %s10, 1
    %p49 = scmp.ne.s32.totalorder %s44, %s46
    %p50 = scmp.eq.s32.totalorder %s10, 0
    %p51 = por %p49, %p50
    %p52 = scmp.ne.s32.totalorder %s44, %s46
    %p53 = scmp.eq.s32.totalorder %s15, 1
    %p54 = por %p52, %p53
    %p55 = scmp.ne.s32.totalorder %s46, %s47
    %p56 = scmp.eq.s32.totalorder %s15, 0
    %p57 = por %p55, %p56
    %p58 = scmp.ne.s32.totalorder %s46, %s47
    %p59 = scmp.eq.s32.totalorder %s16, 1
    %p60 = por %p58, %p59
    %p62 = scmp.ne.s32.totalorder %s47, %s61
    %p63 = scmp.eq.s32.totalorder %s16, 0
    %p64 = por %p62, %p63
    %s66 = sadd.s32 %s65, 1
    %p69 = scmp.eq.s32.totalorder %s10, 1
    %p70 = scmp.ne.s32.totalorder %s65, %s67
    %p71 = scmp.eq.s32.totalorder %s10, 0
    %p72 = por %p70, %p71
    %p73 = scmp.ne.s32.totalorder %s65, %s67
    %p74 = scmp.eq.s32.totalorder %s15, 1
    %p75 = por %p73, %p74
    %p76 = scmp.ne.s32.totalorder %s67, %s68
    %p77 = scmp.eq.s32.totalorder %s15, 0
    %p78 = por %p76, %p77
    %p79 = scmp.ne.s32.totalorder %s67, %s68
    %p80 = scmp.eq.s32.totalorder %s16, 1
    %p81 = por %p79, %p80
    %p83 = scmp.ne.s32.totalorder %s68, %s82
    %p84 = scmp.eq.s32.totalorder %s16, 0
    %p85 = por %p83, %p84
    %s87 = sadd.s32 %s86, 1
    %p90 = scmp.eq.s32.totalorder %s10, 1
    %p91 = scmp.ne.s32.totalorder %s86, %s88
    %p92 = scmp.eq.s32.totalorder %s10, 0
    %p93 = por %p91, %p92
    %p94 = scmp.ne.s32.totalorder %s86, %s88
    %p95 = scmp.eq.s32.totalorder %s15, 1
    %p96 = por %p94, %p95
    %p97 = scmp.ne.s32.totalorder %s88, %s89
    %p98 = scmp.eq.s32.totalorder %s15, 0
    %p99 = por %p97, %p98
    %p100 = scmp.ne.s32.totalorder %s88, %s89
    %p101 = scmp.eq.s32.totalorder %s16, 1
    %p102 = por %p100, %p101
    %p104 = scmp.ne.s32.totalorder %s89, %s103
    %p105 = scmp.eq.s32.totalorder %s16, 0
    %p106 = por %p104, %p105
    %s107 = ssub.s32 %s10, %s17
    %p108 = scmp.eq.s32.totalorder %s107, 0
    %s110 = sadd.s32 %s109, 1
    %s111 = scalar_select %p108, %s109, %s110
    %p114 = pneg %p108
    %p115 = scmp.eq.s32.totalorder %s10, 1
    %p116 = por %p114, %p115
    %p117 = scmp.ne.s32.totalorder %s109, %s112
    %p118 = scmp.eq.s32.totalorder %s10, 0
    %p119 = por %p117, %p118
    %p120 = scmp.ne.s32.totalorder %s109, %s112
    %p121 = scmp.eq.s32.totalorder %s15, 1
    %p122 = por %p120, %p121
    %p123 = scmp.ne.s32.totalorder %s112, %s113
    %p124 = scmp.eq.s32.totalorder %s15, 0
    %p125 = por %p123, %p124
    %p126 = scmp.ne.s32.totalorder %s112, %s113
    %p127 = scmp.eq.s32.totalorder %s16, 1
    %p128 = por %p126, %p127
    %p130 = scmp.ne.s32.totalorder %s113, %s129
    %p131 = scmp.eq.s32.totalorder %s16, 0
    %p132 = por %p130, %p131
    %p133 = scmp.le.s32.totalorder 1, %s10
    %p134 = scmp.lt.s32.totalorder %s10, 3
    %p135 = pnand %p133, %p134
    %p136 = pneg %p135
    // Predicated region
    $region9: #{stage_module.8} parent=5 // pred_check
      _
    $region10: #{stage_module.8} parent=5 // pred_check_branch
      %138 = sbr.rel (%p135) target = $region12
    $region11: #{stage_module.8} parent=5 // pred_region
      %s139 = ssub.s32 %s10, 1
      // Predicated region
      $region13: #{stage_module.8} parent=11 // pred_check
        %p140 = pneg %p57
      $region14: #{stage_module.8} parent=11 // pred_check_branch
        %142 = sbr.rel (%p140) target = $region16
      $region15: #{stage_module.8} parent=11 // pred_region
        _
      $region16: #{stage_module.8} parent=11 // pred_fallthru
        _
      // Predicated region
      $region17: #{stage_module.8} parent=11 // pred_check
        %p143 = pneg %p78
      $region18: #{stage_module.8} parent=11 // pred_check_branch
        %145 = sbr.rel (%p143) target = $region20
      $region19: #{stage_module.8} parent=11 // pred_region
        _
      $region20: #{stage_module.8} parent=11 // pred_fallthru
        _
      // Predicated region
      $region21: #{stage_module.8} parent=11 // pred_check
        %p146 = pneg %p99
      $region22: #{stage_module.8} parent=11 // pred_check_branch
        %148 = sbr.rel (%p146) target = $region24
      $region23: #{stage_module.8} parent=11 // pred_region
        _
      $region24: #{stage_module.8} parent=11 // pred_fallthru
        _
    $region12: #{stage_module.8} parent=5 // pred_fallthru
      _
    %p149 = scmp.lt.s32.totalorder %s10, 2
    // Predicated region
    $region25: #{stage_module.8} parent=5 // pred_check
      %p150 = pneg %p149
    $region26: #{stage_module.8} parent=5 // pred_check_branch
      %152 = sbr.rel (%p150) target = $region28
    $region27: #{stage_module.8} parent=5 // pred_region
      // Predicated region
      $region29: #{stage_module.8} parent=27 // pred_check
        %p153 = pneg %p30
      $region30: #{stage_module.8} parent=27 // pred_check_branch
        %155 = sbr.rel (%p153) target = $region32
      $region31: #{stage_module.8} parent=27 // pred_region
        %s156 = smul.u32 8, %s10
        %p157 = scmp.lt.s32.totalorder %s156, 15
        %s158 = scalar_select %p157, %s156, 15
        %s159 = smul.addr %s158, 8
        %s160 = scalar_lea.vmem %s0, %s159
        %s161 = smul.u32 8, %s10
      $region32: #{stage_module.8} parent=27 // pred_fallthru
        _
    $region28: #{stage_module.8} parent=5 // pred_fallthru
      _
    %p162 = scmp.le.s32.totalorder 1, %s10
    %p163 = scmp.lt.s32.totalorder %s10, 3
    %p164 = pnand %p162, %p163
    %p165 = pneg %p164
    // Predicated region
    $region33: #{stage_module.8} parent=5 // pred_check
      _
    $region34: #{stage_module.8} parent=5 // pred_check_branch
      %167 = sbr.rel (%p164) target = $region36
    $region35: #{stage_module.8} parent=5 // pred_region
      %s168 = ssub.s32 %s10, 1
      %s169 = smul.u32 8, %s15
      %p170 = scmp.lt.s32.totalorder %s169, 15
      %s171 = scalar_select %p170, %s169, 15
      %s172 = smul.addr %s171, 8
      %s173 = scalar_lea.vmem %s0, %s172
      %p174 = pneg %p36
      %p175 = pneg %p33
      %p176 = pneg %p57
      %p177 = pneg %p54
      %p178 = pneg %p78
      %p179 = pneg %p75
      %p180 = pneg %p99
      %p181 = pneg %p96
      %p182 = pneg %p125
      %p183 = pneg %p122
      %s184 = smul.u32 8, %s15
      %p185 = scmp.lt.s32.totalorder %s184, 15
      %s186 = scalar_select %p185, %s184, 15
      %s187 = smul.addr %s186, 8
      %s188 = scalar_lea.vmem %s4, %s187
      %s189 = smul.u32 8, %s15
      %p190 = scmp.lt.s32.totalorder %s189, 15
      %s191 = scalar_select %p190, %s189, 15
      %s192 = smul.addr %s191, 8
      %s193 = scalar_lea.vmem %s0, %s192
      %s194 = smul.u32 8, %s15
      %s195 = smul.u32 8, %s15
      %p196 = scmp.lt.s32.totalorder %s195, 15
      %s197 = scalar_select %p196, %s195, 15
      %s198 = smul.addr %s197, 8
      %s199 = scalar_lea.vmem %s4, %s198
      %s200 = smul.u32 8, %s15
      %v201 = vld [vmem:[%s193] sm:$0xff]
      %v202 = vld [vmem:[%s193 + $0x8] sm:$0xff]
      %v203 = vld [vmem:[%s193 + $0x10] sm:$0xff]
      %v204 = vld [vmem:[%s193 + $0x18] sm:$0xff]
      %v205 = vld [vmem:[%s193 + $0x20] sm:$0xff]
      %v206 = vld [vmem:[%s193 + $0x28] sm:$0xff]
      %v207 = vld [vmem:[%s193 + $0x30] sm:$0xff]
      %v208 = vld [vmem:[%s193 + $0x38] sm:$0xff]
      %vm209 = vcmask 261120
      %v210 = vsel %vm209, %v201, 0.0
      %211 = vadd.xlane.f32.xlu0 %v210
      %v212 = vpop.xlane.xlu0 %211
      %v213 = vsel %vm209, %v202, 0.0
      %214 = vadd.xlane.f32.xlu0 %v213
      %v215 = vpop.xlane.xlu0 %214
      %v216 = vsel %vm209, %v203, 0.0
      %217 = vadd.xlane.f32.xlu0 %v216
      %v218 = vpop.xlane.xlu0 %217
      %v219 = vsel %vm209, %v204, 0.0
      %220 = vadd.xlane.f32.xlu0 %v219
      %v221 = vpop.xlane.xlu0 %220
      %v222 = vsel %vm209, %v205, 0.0
      %223 = vadd.xlane.f32.xlu0 %v222
      %v224 = vpop.xlane.xlu0 %223
      %v225 = vsel %vm209, %v206, 0.0
      %226 = vadd.xlane.f32.xlu0 %v225
      %v227 = vpop.xlane.xlu0 %226
      %v228 = vsel %vm209, %v207, 0.0
      %229 = vadd.xlane.f32.xlu0 %v228
      %v230 = vpop.xlane.xlu0 %229
      %v231 = vsel %vm209, %v208, 0.0
      %232 = vadd.xlane.f32.xlu0 %v231
      %v233 = vpop.xlane.xlu0 %232
      %v234 = vrcp.pop 32.0
      %v235 = vmul.f32 %v212, %v234
      %v236 = vmul.f32 %v215, %v234
      %v237 = vmul.f32 %v218, %v234
      %v238 = vmul.f32 %v221, %v234
      %v239 = vmul.f32 %v224, %v234
      %v240 = vmul.f32 %v227, %v234
      %v241 = vmul.f32 %v230, %v234
      %v242 = vmul.f32 %v233, %v234
      %v243 = vsub.f32 %v201, %v235
      %v244 = vsub.f32 %v202, %v236
      %v245 = vsub.f32 %v203, %v237
      %v246 = vsub.f32 %v204, %v238
      %v247 = vsub.f32 %v205, %v239
      %v248 = vsub.f32 %v206, %v240
      %v249 = vsub.f32 %v207, %v241
      %v250 = vsub.f32 %v208, %v242
      %v251 = vmul.f32 %v243, %v243
      %v252 = vmul.f32 %v244, %v244
      %v253 = vmul.f32 %v245, %v245
      %v254 = vmul.f32 %v246, %v246
      %v255 = vmul.f32 %v247, %v247
      %v256 = vmul.f32 %v248, %v248
      %v257 = vmul.f32 %v249, %v249
      %v258 = vmul.f32 %v250, %v250
      %v259 = vsel %vm209, %v251, 0.0
      %260 = vadd.xlane.f32.xlu0 %v259
      %v261 = vpop.xlane.xlu0 %260
      %v262 = vsel %vm209, %v252, 0.0
      %263 = vadd.xlane.f32.xlu0 %v262
      %v264 = vpop.xlane.xlu0 %263
      %v265 = vsel %vm209, %v253, 0.0
      %266 = vadd.xlane.f32.xlu0 %v265
      %v267 = vpop.xlane.xlu0 %266
      %v268 = vsel %vm209, %v254, 0.0
      %269 = vadd.xlane.f32.xlu0 %v268
      %v270 = vpop.xlane.xlu0 %269
      %v271 = vsel %vm209, %v255, 0.0
      %272 = vadd.xlane.f32.xlu0 %v271
      %v273 = vpop.xlane.xlu0 %272
      %v274 = vsel %vm209, %v256, 0.0
      %275 = vadd.xlane.f32.xlu0 %v274
      %v276 = vpop.xlane.xlu0 %275
      %v277 = vsel %vm209, %v257, 0.0
      %278 = vadd.xlane.f32.xlu0 %v277
      %v279 = vpop.xlane.xlu0 %278
      %v280 = vsel %vm209, %v258, 0.0
      %281 = vadd.xlane.f32.xlu0 %v280
      %v282 = vpop.xlane.xlu0 %281
      %v283 = vmul.f32 %v261, %v234
      %v284 = vmul.f32 %v264, %v234
      %v285 = vmul.f32 %v267, %v234
      %v286 = vmul.f32 %v270, %v234
      %v287 = vmul.f32 %v273, %v234
      %v288 = vmul.f32 %v276, %v234
      %v289 = vmul.f32 %v279, %v234
      %v290 = vmul.f32 %v282, %v234
      %v291 = vadd.f32 %v283, 1e-05
      %v292 = vadd.f32 %v284, 1e-05
      %v293 = vadd.f32 %v285, 1e-05
      %v294 = vadd.f32 %v286, 1e-05
      %v295 = vadd.f32 %v287, 1e-05
      %v296 = vadd.f32 %v288, 1e-05
      %v297 = vadd.f32 %v289, 1e-05
      %v298 = vadd.f32 %v290, 1e-05
      %v299 = vrsqrt.pop %v291
      %v300 = vrsqrt.pop %v292
      %v301 = vrsqrt.pop %v293
      %v302 = vrsqrt.pop %v294
      %v303 = vrsqrt.pop %v295
      %v304 = vrsqrt.pop %v296
      %v305 = vrsqrt.pop %v297
      %v306 = vrsqrt.pop %v298
      %v307 = vmul.f32 %v243, %v299
      %v308 = vmul.f32 %v244, %v300
      %v309 = vmul.f32 %v245, %v301
      %v310 = vmul.f32 %v246, %v302
      %v311 = vmul.f32 %v247, %v303
      %v312 = vmul.f32 %v248, %v304
      %v313 = vmul.f32 %v249, %v305
      %v314 = vmul.f32 %v250, %v306
      %v315 = vld [vmem:[%s1] sm:$0x1]
      %v317 = vlaneseq
      %v318 = vshrl.u32 %v317, 7
      %v319 = vsub.s32 0, %v318
      %v320 = vrot.slane %v315, %v319
      %v322 = vmul.f32 %v307, %v320
      %v323 = vmul.f32 %v308, %v320
      %v324 = vmul.f32 %v309, %v320
      %v325 = vmul.f32 %v310, %v320
      %v326 = vmul.f32 %v311, %v320
      %v327 = vmul.f32 %v312, %v320
      %v328 = vmul.f32 %v313, %v320
      %v329 = vmul.f32 %v314, %v320
      %v330 = vld [vmem:[%s2] sm:$0x1]
      %v332 = vlaneseq
      %v333 = vshrl.u32 %v332, 7
      %v334 = vsub.s32 0, %v333
      %v335 = vrot.slane %v330, %v334
      %v337 = vadd.f32 %v322, %v335
      %v338 = vadd.f32 %v323, %v335
      %v339 = vadd.f32 %v324, %v335
      %v340 = vadd.f32 %v325, %v335
      %v341 = vadd.f32 %v326, %v335
      %v342 = vadd.f32 %v327, %v335
      %v343 = vadd.f32 %v328, %v335
      %v344 = vadd.f32 %v329, %v335
      %v345 = vld [vmem:[%s3] sm:$0xff]
      %v346 = vld [vmem:[%s3 + $0x8] sm:$0xff]
      %v347 = vld [vmem:[%s3 + $0x10] sm:$0xff]
      %v348 = vld [vmem:[%s3 + $0x18] sm:$0xff]
      %v350 = vsel %vm209, %v337, 0
      %v353 = vsel %vm209, %v338, 0
      %v356 = vsel %vm209, %v339, 0
      %v359 = vsel %vm209, %v340, 0
      %v362 = vsel %vm209, %v341, 0
      %v365 = vsel %vm209, %v342, 0
      %v368 = vsel %vm209, %v343, 0
      %v371 = vsel %vm209, %v344, 0
      %373 = vmatprep.subr.mxu0 0.0
      %374 = vmatpush1.msra.mxu0 %v345
      %375 = vmatprep.subr.mxu0 0.0
      %376 = vmatpush1.msra.mxu0 %v346
      %377 = vmatprep.subr.mxu0 0.0
      %378 = vmatpush1.msra.mxu0 %v347
      %379 = vmatprep.subr.mxu0 0.0
      %380 = vmatpush1.msra.mxu0 %v348
      %381 = vmatprep.subr.mxu0 0.0
      %382 = vmatpush1.msra.mxu0 0.0
      %383 = vmatprep.subr.mxu0 0.0
      %384 = vmatpush1.msra.mxu0 0.0
      %385 = vmatprep.subr.mxu0 0.0
      %386 = vmatpush1.msra.mxu0 0.0
      %387 = vmatprep.subr.mxu0 0.0
      %388 = vmatpush1.msra.mxu0 0.0
      %389 = vmatprep.subr.mxu0 0.0
      %390 = vmatpush1.msra.mxu0 0.0
      %391 = vmatprep.subr.mxu0 0.0
      %392 = vmatpush1.msra.mxu0 0.0
      %393 = vmatprep.subr.mxu0 0.0
      %394 = vmatpush1.msra.mxu0 0.0
      %395 = vmatprep.subr.mxu0 0.0
      %396 = vmatpush1.msra.mxu0 0.0
      %397 = vmatprep.subr.mxu0 0.0
      %398 = vmatpush1.msra.mxu0 0.0
      %399 = vmatprep.subr.mxu0 0.0
      %400 = vmatpush1.msra.mxu0 0.0
      %401 = vmatprep.subr.mxu0 0.0
      %402 = vmatpush1.msra.mxu0 0.0
      %403 = vmatprep.subr.mxu0 0.0
      %404 = vmatpush1.msra.mxu0 0.0
      %405 = vmatprep.subr.mxu0 0.0
      %406 = vmatpush1.msra.mxu0 0.0
      %407 = vmatprep.subr.mxu0 0.0
      %408 = vmatpush1.msra.mxu0 0.0
      %409 = vmatprep.subr.mxu0 0.0
      %410 = vmatpush1.msra.mxu0 0.0
      %411 = vmatprep.subr.mxu0 0.0
      %412 = vmatpush1.msra.mxu0 0.0
      %413 = vmatprep.subr.mxu0 0.0
      %414 = vmatpush1.msra.mxu0 0.0
      %415 = vmatprep.subr.mxu0 0.0
      %416 = vmatpush1.msra.mxu0 0.0
      %417 = vmatprep.subr.mxu0 0.0
      %418 = vmatpush1.msra.mxu0 0.0
      %419 = vmatprep.subr.mxu0 0.0
      %420 = vmatpush1.msra.mxu0 0.0
      %421 = vmatprep.subr.mxu0 0.0
      %422 = vmatpush1.msra.mxu0 0.0
      %423 = vmatprep.subr.mxu0 0.0
      %424 = vmatpush1.msra.mxu0 0.0
      %425 = vmatprep.subr.mxu0 0.0
      %426 = vmatpush1.msra.mxu0 0.0
      %427 = vmatprep.subr.mxu0 0.0
      %428 = vmatpush1.msra.mxu0 0.0
      %429 = vmatprep.subr.mxu0 0.0
      %430 = vmatpush1.msra.mxu0 0.0
      %431 = vmatprep.subr.mxu0 0.0
      %432 = vmatpush1.msra.mxu0 0.0
      %433 = vmatprep.subr.mxu0 0.0
      %434 = vmatpush1.msra.mxu0 0.0
      %435 = vmatprep.subr.mxu0 0.0
      %436 = vmatpush1.msra.mxu0 0.0
      %437 = vmatprep.mubr.f32.mxu0 0.0
      %438 = vmatmul.mubr.f32.gmra.mrb[0].mxu0 %v350
      %v439 = vpop.f32.mrb[0].mxu0
      %v440 = vadd.f32 0.0, %v439
      %v441 = vpop.f32.mrb[0].mxu0
      %442 = vmatprep.mubr.f32.mxu0 0.0
      %443 = vmatmul.mubr.f32.gmra.mrb[0].mxu0 %v353
      %v444 = vpop.f32.mrb[0].mxu0
      %v445 = vadd.f32 0.0, %v444
      %v446 = vpop.f32.mrb[0].mxu0
      %447 = vmatprep.mubr.f32.mxu0 0.0
      %448 = vmatmul.mubr.f32.gmra.mrb[0].mxu0 %v356
      %v449 = vpop.f32.mrb[0].mxu0
      %v450 = vadd.f32 0.0, %v449
      %v451 = vpop.f32.mrb[0].mxu0
      %452 = vmatprep.mubr.f32.mxu0 0.0
      %453 = vmatmul.mubr.f32.gmra.mrb[0].mxu0 %v359
      %v454 = vpop.f32.mrb[0].mxu0
      %v455 = vadd.f32 0.0, %v454
      %v456 = vpop.f32.mrb[0].mxu0
      %457 = vmatprep.mubr.f32.mxu0 0.0
      %458 = vmatmul.mubr.f32.gmra.mrb[0].mxu0 %v362
      %v459 = vpop.f32.mrb[0].mxu0
      %v460 = vadd.f32 0.0, %v459
      %v461 = vpop.f32.mrb[0].mxu0
      %462 = vmatprep.mubr.f32.mxu0 0.0
      %463 = vmatmul.mubr.f32.gmra.mrb[0].mxu0 %v365
      %v464 = vpop.f32.mrb[0].mxu0
      %v465 = vadd.f32 0.0, %v464
      %v466 = vpop.f32.mrb[0].mxu0
      %467 = vmatprep.mubr.f32.mxu0 0.0
      %468 = vmatmul.mubr.f32.gmra.mrb[0].mxu0 %v368
      %v469 = vpop.f32.mrb[0].mxu0
      %v470 = vadd.f32 0.0, %v469
      %v471 = vpop.f32.mrb[0].mxu0
      %472 = vmatprep.mubr.f32.mxu0 0.0
      %473 = vmatmul.mubr.f32.gmra.mrb[0].mxu0 %v371
      %v474 = vpop.f32.mrb[0].mxu0
      %v475 = vadd.f32 0.0, %v474
      %v476 = vpop.f32.mrb[0].mxu0
      %477 = vdwg.mxu0
      %vm478 = vcmask 785408
      %479 = vst.msk [vmem:[%s199] sm:$0xff] %vm478, %v440
      %480 = vst.msk [vmem:[%s199 + $0x8] sm:$0xff] %vm478, %v445
      %481 = vst.msk [vmem:[%s199 + $0x10] sm:$0xff] %vm478, %v450
      %482 = vst.msk [vmem:[%s199 + $0x18] sm:$0xff] %vm478, %v455
      %483 = vst.msk [vmem:[%s199 + $0x20] sm:$0xff] %vm478, %v460
      %484 = vst.msk [vmem:[%s199 + $0x28] sm:$0xff] %vm478, %v465
      %485 = vst.msk [vmem:[%s199 + $0x30] sm:$0xff] %vm478, %v470
      %486 = vst.msk [vmem:[%s199 + $0x38] sm:$0xff] %vm478, %v475
      %s487 = smul.u32 8, %s15
      %p488 = scmp.lt.s32.totalorder %s487, 15
      %s489 = scalar_select %p488, %s487, 15
      %s490 = smul.addr %s489, 8
      %s491 = scalar_lea.vmem %s4, %s490
      // Predicated region
      $region37: #{stage_module.8} parent=35 // pred_check
        %p492 = pneg %p122
      $region38: #{stage_module.8} parent=35 // pred_check_branch
        %494 = sbr.rel (%p492) target = $region40
      $region39: #{stage_module.8} parent=35 // pred_region
        %s495 = smul.u32 8, %s15
      $region40: #{stage_module.8} parent=35 // pred_fallthru
        _
    $region36: #{stage_module.8} parent=5 // pred_fallthru
      _
    %p496 = scmp.le.s32.totalorder 2, %s10
    // Predicated region
    $region41: #{stage_module.8} parent=5 // pred_check
      %p497 = pneg %p496
    $region42: #{stage_module.8} parent=5 // pred_check_branch
      %499 = sbr.rel (%p497) target = $region44
    $region43: #{stage_module.8} parent=5 // pred_region
      %s500 = ssub.s32 %s10, 2
      // Predicated region
      $region45: #{stage_module.8} parent=43 // pred_check
        %p501 = pneg %p128
      $region46: #{stage_module.8} parent=43 // pred_check_branch
        %503 = sbr.rel (%p501) target = $region48
      $region47: #{stage_module.8} parent=43 // pred_region
        %s504 = smul.u32 8, %s16
        %p505 = scmp.lt.s32.totalorder %s504, 15
        %s506 = scalar_select %p505, %s504, 15
        %s507 = smul.addr %s506, 8
        %s508 = scalar_lea.vmem %s4, %s507
      $region48: #{stage_module.8} parent=43 // pred_fallthru
        _
    $region44: #{stage_module.8} parent=5 // pred_fallthru
      _
  $region6: #{stage_module.8} parent=0 // loop_footer
    %s14 = sadd.s32 1, %s10
  $region7: #{stage_module.8} parent=0 // loop_footer_branch
    %9 = sbr.rel target = $region3
  $region8: #{stage_module.8} parent=0 // loop_exit
    _

// kernel: stage_module.9
$region0: #{stage_module.9}
  #allocation0 [shape = 'u32[]', space=smem, size = 0x4, offset = 0x4, fixed_abs, tag = 'smem constant byte address 0x4 - core index']
  #allocation1 [shape = 'u32[144,128]{1,0:T(1,128)}', space=vmem, size = 0x12000, scoped, tag = 'internal scratch']
  %s0 = inlined_call_operand.vmem [shape: f32[2,4,16,96], index: 0, kind: input, shape index: {}]
  %s1 = inlined_call_operand.vmem [shape: f32[4,16,16], index: 1, kind: input, shape index: {}]
  %s2 = inlined_call_operand.vmem [shape: f32[32,32], index: 2, kind: input, shape index: {}]
  %s3 = inlined_call_operand.vmem [shape: f32[1,32], index: 3, kind: input, shape index: {}]
  %s4 = inlined_call_operand.vmem [shape: f32[2,4,16,32], index: 4, kind: output, shape index: {}]
  %s5 = sld [smem:[#allocation0]]
  $region49: #{stage_module.9} parent=0
    _
  %s7 = ssub.s32 1, %s5
  %s8 = scalar_select 0, %s7, %s5
  loop: start=0, step=1, limit=6
  $region2: #{stage_module.9} parent=0 // loop_pre_header
    _
  $region3: #{stage_module.9} parent=0 // loop_header
    %s10 = sphi 0, %s14
    %p11 = scmp.ge.s32.totalorder %s10, 6
    %s17 = sphi 0, %s29
    %s18 = sphi 0, %s25
    %s19 = sphi 0, %s17
    %s20 = sphi 0, %s18
    %s21 = sphi 0, %s19
    %s22 = sphi 0, %s20
    %s34 = sphi 0, %s36
    %s37 = sphi 0, %s34
    %s38 = sphi 0, %s37
    %s54 = sphi 0, %s38
    %s60 = sphi 0, %s62
    %s63 = sphi 0, %s60
    %s64 = sphi 0, %s63
    %s80 = sphi 0, %s64
    %s84 = sphi 0, %s84
    %s86 = sphi 0, %s84
    %s87 = sphi 0, %s86
    %s101 = sphi 0, %s87
    %s105 = sphi 0, %s105
    %s107 = sphi 0, %s105
    %s108 = sphi 0, %s107
    %s122 = sphi 0, %s108
    %s130 = sphi 0, %s132
    %s133 = sphi 0, %s130
    %s134 = sphi 0, %s133
    %s150 = sphi 0, %s134
  $region4: #{stage_module.9} parent=0 // loop_header_branch
    %13 = sbr.rel (%p11) target = $region8
  $region5: #{stage_module.9} parent=0 // loop_body
    %s15 = ssub.s32 %s10, 1
    %s16 = ssub.s32 %s10, 2
    %s23 = sadd.s32 1, %s18
    %p24 = scmp.ge.s32.totalorder %s23, 2
    %s25 = scalar_select %p24, 0, %s23
    %s26 = sadd.s32 1, %s17
    %s27 = scalar_select %p24, %s26, %s17
    %p28 = scmp.ge.s32.totalorder %s27, 2
    %s29 = scalar_select %p28, 0, %s27
    %s30 = ssub.s32 %s17, %s29
    %s31 = ssub.s32 %s18, %s25
    %s32 = sor.u32 %s30, %s31
    %p33 = scmp.eq.s32.totalorder %s32, 0
    %s35 = sadd.s32 %s34, 1
    %s36 = scalar_select %p33, %s34, %s35
    %p39 = pneg %p33
    %p40 = scmp.eq.s32.totalorder %s10, 3
    %p41 = por %p39, %p40
    %p42 = scmp.ne.s32.totalorder %s34, %s37
    %p43 = scmp.eq.s32.totalorder %s10, 0
    %p44 = por %p42, %p43
    %p45 = scmp.ne.s32.totalorder %s34, %s37
    %p46 = scmp.eq.s32.totalorder %s15, 3
    %p47 = por %p45, %p46
    %p48 = scmp.ne.s32.totalorder %s37, %s38
    %p49 = scmp.eq.s32.totalorder %s15, 0
    %p50 = por %p48, %p49
    %p51 = scmp.ne.s32.totalorder %s37, %s38
    %p52 = scmp.eq.s32.totalorder %s16, 3
    %p53 = por %p51, %p52
    %p55 = scmp.ne.s32.totalorder %s38, %s54
    %p56 = scmp.eq.s32.totalorder %s16, 0
    %p57 = por %p55, %p56
    %s58 = ssub.s32 %s18, %s25
    %p59 = scmp.eq.s32.totalorder %s58, 0
    %s61 = sadd.s32 %s60, 1
    %s62 = scalar_select %p59, %s60, %s61
    %p65 = pneg %p59
    %p66 = scmp.eq.s32.totalorder %s10, 3
    %p67 = por %p65, %p66
    %p68 = scmp.ne.s32.totalorder %s60, %s63
    %p69 = scmp.eq.s32.totalorder %s10, 0
    %p70 = por %p68, %p69
    %p71 = scmp.ne.s32.totalorder %s60, %s63
    %p72 = scmp.eq.s32.totalorder %s15, 3
    %p73 = por %p71, %p72
    %p74 = scmp.ne.s32.totalorder %s63, %s64
    %p75 = scmp.eq.s32.totalorder %s15, 0
    %p76 = por %p74, %p75
    %p77 = scmp.ne.s32.totalorder %s63, %s64
    %p78 = scmp.eq.s32.totalorder %s16, 3
    %p79 = por %p77, %p78
    %p81 = scmp.ne.s32.totalorder %s64, %s80
    %p82 = scmp.eq.s32.totalorder %s16, 0
    %p83 = por %p81, %p82
    %s85 = sadd.s32 %s84, 1
    %p88 = scmp.eq.s32.totalorder %s10, 3
    %p89 = scmp.ne.s32.totalorder %s84, %s86
    %p90 = scmp.eq.s32.totalorder %s10, 0
    %p91 = por %p89, %p90
    %p92 = scmp.ne.s32.totalorder %s84, %s86
    %p93 = scmp.eq.s32.totalorder %s15, 3
    %p94 = por %p92, %p93
    %p95 = scmp.ne.s32.totalorder %s86, %s87
    %p96 = scmp.eq.s32.totalorder %s15, 0
    %p97 = por %p95, %p96
    %p98 = scmp.ne.s32.totalorder %s86, %s87
    %p99 = scmp.eq.s32.totalorder %s16, 3
    %p100 = por %p98, %p99
    %p102 = scmp.ne.s32.totalorder %s87, %s101
    %p103 = scmp.eq.s32.totalorder %s16, 0
    %p104 = por %p102, %p103
    %s106 = sadd.s32 %s105, 1
    %p109 = scmp.eq.s32.totalorder %s10, 3
    %p110 = scmp.ne.s32.totalorder %s105, %s107
    %p111 = scmp.eq.s32.totalorder %s10, 0
    %p112 = por %p110, %p111
    %p113 = scmp.ne.s32.totalorder %s105, %s107
    %p114 = scmp.eq.s32.totalorder %s15, 3
    %p115 = por %p113, %p114
    %p116 = scmp.ne.s32.totalorder %s107, %s108
    %p117 = scmp.eq.s32.totalorder %s15, 0
    %p118 = por %p116, %p117
    %p119 = scmp.ne.s32.totalorder %s107, %s108
    %p120 = scmp.eq.s32.totalorder %s16, 3
    %p121 = por %p119, %p120
    %p123 = scmp.ne.s32.totalorder %s108, %s122
    %p124 = scmp.eq.s32.totalorder %s16, 0
    %p125 = por %p123, %p124
    %s126 = ssub.s32 %s17, %s29
    %s127 = ssub.s32 %s18, %s25
    %s128 = sor.u32 %s126, %s127
    %p129 = scmp.eq.s32.totalorder %s128, 0
    %s131 = sadd.s32 %s130, 1
    %s132 = scalar_select %p129, %s130, %s131
    %p135 = pneg %p129
    %p136 = scmp.eq.s32.totalorder %s10, 3
    %p137 = por %p135, %p136
    %p138 = scmp.ne.s32.totalorder %s130, %s133
    %p139 = scmp.eq.s32.totalorder %s10, 0
    %p140 = por %p138, %p139
    %p141 = scmp.ne.s32.totalorder %s130, %s133
    %p142 = scmp.eq.s32.totalorder %s15, 3
    %p143 = por %p141, %p142
    %p144 = scmp.ne.s32.totalorder %s133, %s134
    %p145 = scmp.eq.s32.totalorder %s15, 0
    %p146 = por %p144, %p145
    %p147 = scmp.ne.s32.totalorder %s133, %s134
    %p148 = scmp.eq.s32.totalorder %s16, 3
    %p149 = por %p147, %p148
    %p151 = scmp.ne.s32.totalorder %s134, %s150
    %p152 = scmp.eq.s32.totalorder %s16, 0
    %p153 = por %p151, %p152
    %p154 = scmp.le.s32.totalorder 1, %s10
    %p155 = scmp.lt.s32.totalorder %s10, 5
    %p156 = pnand %p154, %p155
    %p157 = pneg %p156
    // Predicated region
    $region9: #{stage_module.9} parent=5 // pred_check
      _
    $region10: #{stage_module.9} parent=5 // pred_check_branch
      %159 = sbr.rel (%p156) target = $region12
    $region11: #{stage_module.9} parent=5 // pred_region
      %s160 = ssub.s32 %s10, 1
      // Predicated region
      $region13: #{stage_module.9} parent=11 // pred_check
        %p161 = pneg %p97
      $region14: #{stage_module.9} parent=11 // pred_check_branch
        %163 = sbr.rel (%p161) target = $region16
      $region15: #{stage_module.9} parent=11 // pred_region
        _
      $region16: #{stage_module.9} parent=11 // pred_fallthru
        _
      // Predicated region
      $region17: #{stage_module.9} parent=11 // pred_check
        %p164 = pneg %p118
      $region18: #{stage_module.9} parent=11 // pred_check_branch
        %166 = sbr.rel (%p164) target = $region20
      $region19: #{stage_module.9} parent=11 // pred_region
        _
      $region20: #{stage_module.9} parent=11 // pred_fallthru
        _
    $region12: #{stage_module.9} parent=5 // pred_fallthru
      _
    %p167 = scmp.lt.s32.totalorder %s10, 4
    // Predicated region
    $region21: #{stage_module.9} parent=5 // pred_check
      %p168 = pneg %p167
    $region22: #{stage_module.9} parent=5 // pred_check_branch
      %170 = sbr.rel (%p168) target = $region24
    $region23: #{stage_module.9} parent=5 // pred_region
      // Predicated region
      $region25: #{stage_module.9} parent=23 // pred_check
        %p171 = pneg %p44
      $region26: #{stage_module.9} parent=23 // pred_check_branch
        %173 = sbr.rel (%p171) target = $region28
      $region27: #{stage_module.9} parent=23 // pred_region
        %s174 = smul.u32 2, %s18
        %p175 = scmp.lt.s32.totalorder %s17, 1
        %s176 = scalar_select %p175, %s17, 1
        %p177 = scmp.lt.s32.totalorder %s174, 3
        %s178 = scalar_select %p177, %s174, 3
        %s179 = smul.addr %s178, 2
        %s180 = smul.addr %s176, 8
        %s181 = sadd.s32 %s179, %s180
        %s182 = smul.addr %s181, 8
        %s183 = scalar_lea.vmem %s0, %s182
        %s184 = smul.u32 2, %s18
      $region28: #{stage_module.9} parent=23 // pred_fallthru
        _
      // Predicated region
      $region29: #{stage_module.9} parent=23 // pred_check
        %p185 = pneg %p70
      $region30: #{stage_module.9} parent=23 // pred_check_branch
        %187 = sbr.rel (%p185) target = $region32
      $region31: #{stage_module.9} parent=23 // pred_region
        %s188 = smul.u32 2, %s18
        %p189 = scmp.lt.s32.totalorder %s188, 3
        %s190 = scalar_select %p189, %s188, 3
        %s191 = smul.addr %s190, 2
        %s192 = smul.addr %s191, 8
        %s193 = scalar_lea.vmem %s1, %s192
        %s194 = smul.u32 2, %s18
      $region32: #{stage_module.9} parent=23 // pred_fallthru
        _
    $region24: #{stage_module.9} parent=5 // pred_fallthru
      _
    %p195 = scmp.le.s32.totalorder 1, %s10
    %p196 = scmp.lt.s32.totalorder %s10, 5
    %p197 = pnand %p195, %p196
    %p198 = pneg %p197
    // Predicated region
    $region33: #{stage_module.9} parent=5 // pred_check
      _
    $region34: #{stage_module.9} parent=5 // pred_check_branch
      %200 = sbr.rel (%p197) target = $region36
    $region35: #{stage_module.9} parent=5 // pred_region
      %s201 = ssub.s32 %s10, 1
      %s202 = smul.u32 2, %s20
      %p203 = scmp.lt.s32.totalorder %s19, 1
      %s204 = scalar_select %p203, %s19, 1
      %p205 = scmp.lt.s32.totalorder %s202, 3
      %s206 = scalar_select %p205, %s202, 3
      %s207 = smul.addr %s206, 2
      %s208 = smul.addr %s204, 8
      %s209 = sadd.s32 %s207, %s208
      %s210 = smul.addr %s209, 8
      %s211 = scalar_lea.vmem %s0, %s210
      %p212 = pneg %p50
      %p213 = pneg %p47
      %s214 = smul.u32 2, %s20
      %p215 = scmp.lt.s32.totalorder %s214, 3
      %s216 = scalar_select %p215, %s214, 3
      %s217 = smul.addr %s216, 2
      %s218 = smul.addr %s217, 8
      %s219 = scalar_lea.vmem %s1, %s218
      %p220 = pneg %p76
      %p221 = pneg %p73
      %p222 = pneg %p97
      %p223 = pneg %p94
      %p224 = pneg %p118
      %p225 = pneg %p115
      %p226 = pneg %p146
      %p227 = pneg %p143
      %s228 = smul.u32 2, %s20
      %p229 = scmp.lt.s32.totalorder %s19, 1
      %s230 = scalar_select %p229, %s19, 1
      %p231 = scmp.lt.s32.totalorder %s228, 3
      %s232 = scalar_select %p231, %s228, 3
      %s233 = smul.addr %s232, 2
      %s234 = smul.addr %s230, 8
      %s235 = sadd.s32 %s233, %s234
      %s236 = smul.addr %s235, 8
      %s237 = scalar_lea.vmem %s4, %s236
      %s238 = smul.u32 2, %s20
      %p239 = scmp.lt.s32.totalorder %s19, 1
      %s240 = scalar_select %p239, %s19, 1
      %p241 = scmp.lt.s32.totalorder %s238, 3
      %s242 = scalar_select %p241, %s238, 3
      %s243 = smul.addr %s242, 2
      %s244 = smul.addr %s240, 8
      %s245 = sadd.s32 %s243, %s244
      %s246 = smul.addr %s245, 8
      %s247 = scalar_lea.vmem %s0, %s246
      %s248 = smul.u32 2, %s20
      %s249 = smul.u32 2, %s20
      %p250 = scmp.lt.s32.totalorder %s249, 3
      %s251 = scalar_select %p250, %s249, 3
      %s252 = smul.addr %s251, 2
      %s253 = smul.addr %s252, 8
      %s254 = scalar_lea.vmem %s1, %s253
      %s255 = smul.u32 2, %s20
      %s256 = smul.u32 2, %s20
      %p257 = scmp.lt.s32.totalorder %s19, 1
      %s258 = scalar_select %p257, %s19, 1
      %p259 = scmp.lt.s32.totalorder %s256, 3
      %s260 = scalar_select %p259, %s256, 3
      %s261 = smul.addr %s260, 2
      %s262 = smul.addr %s258, 8
      %s263 = sadd.s32 %s261, %s262
      %s264 = smul.addr %s263, 8
      %s265 = scalar_lea.vmem %s4, %s264
      %s266 = smul.u32 2, %s20
      %v267 = vld [vmem:[%s247] sm:$0xff]
      %v268 = vld [vmem:[%s247 + $0x8] sm:$0xff]
      %v269 = vld [vmem:[%s247 + $0x10] sm:$0xff]
      %v270 = vld [vmem:[%s247 + $0x18] sm:$0xff]
      %v271 = vld [vmem:[%s254] sm:$0xff]
      %v272 = vld [vmem:[%s254 + $0x8] sm:$0xff]
      %v273 = vld [vmem:[%s254 + $0x10] sm:$0xff]
      %v274 = vld [vmem:[%s254 + $0x18] sm:$0xff]
      %v275 = vld [vmem:[%s2] sm:$0xff]
      %v276 = vld [vmem:[%s2 + $0x8] sm:$0xff]
      %v277 = vld [vmem:[%s2 + $0x10] sm:$0xff]
      %v278 = vld [vmem:[%s2 + $0x18] sm:$0xff]
      %v279 = vmul.f32 %v267, 0.25
      %v280 = vmul.f32 %v268, 0.25
      %v281 = vmul.f32 %v269, 0.25
      %v282 = vmul.f32 %v270, 0.25
      %285 = vrot.lane.b32.xlu0 %v267, 96
      %v286 = vpop.permute.xlu0 %285
      %287 = vrot.lane.b32.xlu0 %v268, 96
      %v288 = vpop.permute.xlu0 %287
      %vm289 = vcmask 130048
      %v291 = vsel %vm289, %v279, 0
      %v294 = vsel %vm289, %v280, 0
      %v296 = vsel %vm289, %v286, 0
      %v298 = vsel %vm289, %v288, 0
      %300 = vmatprep.subr.mxu0 0.0
      %301 = vmatpush1.xpose.msra.mxu0 %v296
      %302 = vmatprep.subr.mxu0 0.0
      %303 = vmatpush1.xpose.msra.mxu0 %v298
      %304 = vmatprep.subr.mxu0 0.0
      %305 = vmatpush1.xpose.msra.mxu0 0.0
      %306 = vmatprep.subr.mxu0 0.0
      %307 = vmatpush1.xpose.msra.mxu0 0.0
      %308 = vmatprep.subr.mxu0 0.0
      %309 = vmatpush1.xpose.msra.mxu0 0.0
      %310 = vmatprep.subr.mxu0 0.0
      %311 = vmatpush1.xpose.msra.mxu0 0.0
      %312 = vmatprep.subr.mxu0 0.0
      %313 = vmatpush1.xpose.msra.mxu0 0.0
      %314 = vmatprep.subr.mxu0 0.0
      %315 = vmatpush1.xpose.msra.mxu0 0.0
      %316 = vmatprep.subr.mxu0 0.0
      %317 = vmatpush1.xpose.msra.mxu0 0.0
      %318 = vmatprep.subr.mxu0 0.0
      %319 = vmatpush1.xpose.msra.mxu0 0.0
      %320 = vmatprep.subr.mxu0 0.0
      %321 = vmatpush1.xpose.msra.mxu0 0.0
      %322 = vmatprep.subr.mxu0 0.0
      %323 = vmatpush1.xpose.msra.mxu0 0.0
      %324 = vmatprep.subr.mxu0 0.0
      %325 = vmatpush1.xpose.msra.mxu0 0.0
      %326 = vmatprep.subr.mxu0 0.0
      %327 = vmatpush1.xpose.msra.mxu0 0.0
      %328 = vmatprep.subr.mxu0 0.0
      %329 = vmatpush1.xpose.msra.mxu0 0.0
      %330 = vmatprep.subr.mxu0 0.0
      %331 = vmatpush1.xpose.msra.mxu0 0.0
      %332 = vmatprep.subr.mxu0 0.0
      %333 = vmatpush1.xpose.msra.mxu0 0.0
      %334 = vmatprep.subr.mxu0 0.0
      %335 = vmatpush1.xpose.msra.mxu0 0.0
      %336 = vmatprep.subr.mxu0 0.0
      %337 = vmatpush1.xpose.msra.mxu0 0.0
      %338 = vmatprep.subr.mxu0 0.0
      %339 = vmatpush1.xpose.msra.mxu0 0.0
      %340 = vmatprep.subr.mxu0 0.0
      %341 = vmatpush1.xpose.msra.mxu0 0.0
      %342 = vmatprep.subr.mxu0 0.0
      %343 = vmatpush1.xpose.msra.mxu0 0.0
      %344 = vmatprep.subr.mxu0 0.0
      %345 = vmatpush1.xpose.msra.mxu0 0.0
      %346 = vmatprep.subr.mxu0 0.0
      %347 = vmatpush1.xpose.msra.mxu0 0.0
      %348 = vmatprep.subr.mxu0 0.0
      %349 = vmatpush1.xpose.msra.mxu0 0.0
      %350 = vmatprep.subr.mxu0 0.0
      %351 = vmatpush1.xpose.msra.mxu0 0.0
      %352 = vmatprep.subr.mxu0 0.0
      %353 = vmatpush1.xpose.msra.mxu0 0.0
      %354 = vmatprep.subr.mxu0 0.0
      %355 = vmatpush1.xpose.msra.mxu0 0.0
      %356 = vmatprep.subr.mxu0 0.0
      %357 = vmatpush1.xpose.msra.mxu0 0.0
      %358 = vmatprep.subr.mxu0 0.0
      %359 = vmatpush1.xpose.msra.mxu0 0.0
      %360 = vmatprep.subr.mxu0 0.0
      %361 = vmatpush1.xpose.msra.mxu0 0.0
      %362 = vmatprep.subr.mxu0 0.0
      %363 = vmatpush1.xpose.msra.mxu0 0.0
      %364 = vmatprep.mubr.f32.mxu0 0.0
      %365 = vmatmul.mubr.f32.gmra.mrb[0].mxu0 %v291
      %v366 = vpop.f32.mrb[0].mxu0
      %v367 = vadd.f32 %v271, %v366
      %v368 = vpop.f32.mrb[0].mxu0
      %369 = vmatprep.mubr.f32.mxu0 0.0
      %370 = vmatmul.mubr.f32.gmra.mrb[0].mxu0 %v294
      %v371 = vpop.f32.mrb[0].mxu0
      %v372 = vadd.f32 %v272, %v371
      %v373 = vpop.f32.mrb[0].mxu0
      %374 = vdwg.mxu0
      %377 = vrot.lane.b32.xlu0 %v269, 96
      %v378 = vpop.permute.xlu0 %377
      %379 = vrot.lane.b32.xlu0 %v270, 96
      %v380 = vpop.permute.xlu0 %379
      %v382 = vsel %vm289, %v281, 0
      %v385 = vsel %vm289, %v282, 0
      %v387 = vsel %vm289, %v378, 0
      %v389 = vsel %vm289, %v380, 0
      %391 = vmatprep.subr.mxu0 0.0
      %392 = vmatpush1.xpose.msra.mxu0 %v387
      %393 = vmatprep.subr.mxu0 0.0
      %394 = vmatpush1.xpose.msra.mxu0 %v389
      %395 = vmatprep.subr.mxu0 0.0
      %396 = vmatpush1.xpose.msra.mxu0 0.0
      %397 = vmatprep.subr.mxu0 0.0
      %398 = vmatpush1.xpose.msra.mxu0 0.0
      %399 = vmatprep.subr.mxu0 0.0
      %400 = vmatpush1.xpose.msra.mxu0 0.0
      %401 = vmatprep.subr.mxu0 0.0
      %402 = vmatpush1.xpose.msra.mxu0 0.0
      %403 = vmatprep.subr.mxu0 0.0
      %404 = vmatpush1.xpose.msra.mxu0 0.0
      %405 = vmatprep.subr.mxu0 0.0
      %406 = vmatpush1.xpose.msra.mxu0 0.0
      %407 = vmatprep.subr.mxu0 0.0
      %408 = vmatpush1.xpose.msra.mxu0 0.0
      %409 = vmatprep.subr.mxu0 0.0
      %410 = vmatpush1.xpose.msra.mxu0 0.0
      %411 = vmatprep.subr.mxu0 0.0
      %412 = vmatpush1.xpose.msra.mxu0 0.0
      %413 = vmatprep.subr.mxu0 0.0
      %414 = vmatpush1.xpose.msra.mxu0 0.0
      %415 = vmatprep.subr.mxu0 0.0
      %416 = vmatpush1.xpose.msra.mxu0 0.0
      %417 = vmatprep.subr.mxu0 0.0
      %418 = vmatpush1.xpose.msra.mxu0 0.0
      %419 = vmatprep.subr.mxu0 0.0
      %420 = vmatpush1.xpose.msra.mxu0 0.0
      %421 = vmatprep.subr.mxu0 0.0
      %422 = vmatpush1.xpose.msra.mxu0 0.0
      %423 = vmatprep.subr.mxu0 0.0
      %424 = vmatpush1.xpose.msra.mxu0 0.0
      %425 = vmatprep.subr.mxu0 0.0
      %426 = vmatpush1.xpose.msra.mxu0 0.0
      %427 = vmatprep.subr.mxu0 0.0
      %428 = vmatpush1.xpose.msra.mxu0 0.0
      %429 = vmatprep.subr.mxu0 0.0
      %430 = vmatpush1.xpose.msra.mxu0 0.0
      %431 = vmatprep.subr.mxu0 0.0
      %432 = vmatpush1.xpose.msra.mxu0 0.0
      %433 = vmatprep.subr.mxu0 0.0
      %434 = vmatpush1.xpose.msra.mxu0 0.0
      %435 = vmatprep.subr.mxu0 0.0
      %436 = vmatpush1.xpose.msra.mxu0 0.0
      %437 = vmatprep.subr.mxu0 0.0
      %438 = vmatpush1.xpose.msra.mxu0 0.0
      %439 = vmatprep.subr.mxu0 0.0
      %440 = vmatpush1.xpose.msra.mxu0 0.0
      %441 = vmatprep.subr.mxu0 0.0
      %442 = vmatpush1.xpose.msra.mxu0 0.0
      %443 = vmatprep.subr.mxu0 0.0
      %444 = vmatpush1.xpose.msra.mxu0 0.0
      %445 = vmatprep.subr.mxu0 0.0
      %446 = vmatpush1.xpose.msra.mxu0 0.0
      %447 = vmatprep.subr.mxu0 0.0
      %448 = vmatpush1.xpose.msra.mxu0 0.0
      %449 = vmatprep.subr.mxu0 0.0
      %450 = vmatpush1.xpose.msra.mxu0 0.0
      %451 = vmatprep.subr.mxu0 0.0
      %452 = vmatpush1.xpose.msra.mxu0 0.0
      %453 = vmatprep.subr.mxu0 0.0
      %454 = vmatpush1.xpose.msra.mxu0 0.0
      %455 = vmatprep.mubr.f32.mxu0 0.0
      %456 = vmatmul.mubr.f32.gmra.mrb[0].mxu0 %v382
      %v457 = vpop.f32.mrb[0].mxu0
      %v458 = vadd.f32 %v273, %v457
      %v459 = vpop.f32.mrb[0].mxu0
      %460 = vmatprep.mubr.f32.mxu0 0.0
      %461 = vmatmul.mubr.f32.gmra.mrb[0].mxu0 %v385
      %v462 = vpop.f32.mrb[0].mxu0
      %v463 = vadd.f32 %v274, %v462
      %v464 = vpop.f32.mrb[0].mxu0
      %465 = vdwg.mxu0
      %v466 = vsel %vm289, %v367, -inf
      %467 = vmax.xlane.f32.xlu0 %v466
      %v468 = vpop.xlane.xlu0 %467
      %v469 = vsel %vm289, %v372, -inf
      %470 = vmax.xlane.f32.xlu0 %v469
      %v471 = vpop.xlane.xlu0 %470
      %v472 = vsel %vm289, %v458, -inf
      %473 = vmax.xlane.f32.xlu0 %v472
      %v474 = vpop.xlane.xlu0 %473
      %v475 = vsel %vm289, %v463, -inf
      %476 = vmax.xlane.f32.xlu0 %v475
      %v477 = vpop.xlane.xlu0 %476
      %v478 = vsub.f32 %v367, %v468
      %v479 = vsub.f32 %v372, %v471
      %v480 = vsub.f32 %v458, %v474
      %v481 = vsub.f32 %v463, %v477
      %v482 = vmul.f32 %v478, 1.442695
      %v483 = vpow.pop %v482
      %v484 = vmul.f32 %v479, 1.442695
      %v485 = vpow.pop %v484
      %v486 = vmul.f32 %v480, 1.442695
      %v487 = vpow.pop %v486
      %v488 = vmul.f32 %v481, 1.442695
      %v489 = vpow.pop %v488
      %v490 = vsel %vm289, %v483, 0.0
      %491 = vadd.xlane.f32.xlu0 %v490
      %v492 = vpop.xlane.xlu0 %491
      %v493 = vsel %vm289, %v485, 0.0
      %494 = vadd.xlane.f32.xlu0 %v493
      %v495 = vpop.xlane.xlu0 %494
      %v496 = vsel %vm289, %v487, 0.0
      %497 = vadd.xlane.f32.xlu0 %v496
      %v498 = vpop.xlane.xlu0 %497
      %v499 = vsel %vm289, %v489, 0.0
      %500 = vadd.xlane.f32.xlu0 %v499
      %v501 = vpop.xlane.xlu0 %500
      %v502 = vrcp.pop %v492
      %v503 = vrcp.pop %v495
      %v504 = vrcp.pop %v498
      %v505 = vrcp.pop %v501
      %v506 = vmul.f32 %v483, %v502
      %v507 = vmul.f32 %v485, %v503
      %v508 = vmul.f32 %v487, %v504
      %v509 = vmul.f32 %v489, %v505
      %510 = vrot.lane.b32.xlu0 %v267, 64
      %v511 = vpop.permute.xlu0 %510
      %512 = vrot.lane.b32.xlu0 %v268, 64
      %v513 = vpop.permute.xlu0 %512
      %v517 = vsel %vm289, %v506, 0
      %v520 = vsel %vm289, %v507, 0
      %522 = vmatprep.subr.mxu0 0.0
      %523 = vmatpush1.msra.mxu0 %v511
      %524 = vmatprep.subr.mxu0 0.0
      %525 = vmatpush1.msra.mxu0 %v513
      %526 = vmatprep.subr.mxu0 0.0
      %527 = vmatpush1.msra.mxu0 0.0
      %528 = vmatprep.subr.mxu0 0.0
      %529 = vmatpush1.msra.mxu0 0.0
      %530 = vmatprep.subr.mxu0 0.0
      %531 = vmatpush1.msra.mxu0 0.0
      %532 = vmatprep.subr.mxu0 0.0
      %533 = vmatpush1.msra.mxu0 0.0
      %534 = vmatprep.subr.mxu0 0.0
      %535 = vmatpush1.msra.mxu0 0.0
      %536 = vmatprep.subr.mxu0 0.0
      %537 = vmatpush1.msra.mxu0 0.0
      %538 = vmatprep.subr.mxu0 0.0
      %539 = vmatpush1.msra.mxu0 0.0
      %540 = vmatprep.subr.mxu0 0.0
      %541 = vmatpush1.msra.mxu0 0.0
      %542 = vmatprep.subr.mxu0 0.0
      %543 = vmatpush1.msra.mxu0 0.0
      %544 = vmatprep.subr.mxu0 0.0
      %545 = vmatpush1.msra.mxu0 0.0
      %546 = vmatprep.subr.mxu0 0.0
      %547 = vmatpush1.msra.mxu0 0.0
      %548 = vmatprep.subr.mxu0 0.0
      %549 = vmatpush1.msra.mxu0 0.0
      %550 = vmatprep.subr.mxu0 0.0
      %551 = vmatpush1.msra.mxu0 0.0
      %552 = vmatprep.subr.mxu0 0.0
      %553 = vmatpush1.msra.mxu0 0.0
      %554 = vmatprep.subr.mxu0 0.0
      %555 = vmatpush1.msra.mxu0 0.0
      %556 = vmatprep.subr.mxu0 0.0
      %557 = vmatpush1.msra.mxu0 0.0
      %558 = vmatprep.subr.mxu0 0.0
      %559 = vmatpush1.msra.mxu0 0.0
      %560 = vmatprep.subr.mxu0 0.0
      %561 = vmatpush1.msra.mxu0 0.0
      %562 = vmatprep.subr.mxu0 0.0
      %563 = vmatpush1.msra.mxu0 0.0
      %564 = vmatprep.subr.mxu0 0.0
      %565 = vmatpush1.msra.mxu0 0.0
      %566 = vmatprep.subr.mxu0 0.0
      %567 = vmatpush1.msra.mxu0 0.0
      %568 = vmatprep.subr.mxu0 0.0
      %569 = vmatpush1.msra.mxu0 0.0
      %570 = vmatprep.subr.mxu0 0.0
      %571 = vmatpush1.msra.mxu0 0.0
      %572 = vmatprep.subr.mxu0 0.0
      %573 = vmatpush1.msra.mxu0 0.0
      %574 = vmatprep.subr.mxu0 0.0
      %575 = vmatpush1.msra.mxu0 0.0
      %576 = vmatprep.subr.mxu0 0.0
      %577 = vmatpush1.msra.mxu0 0.0
      %578 = vmatprep.subr.mxu0 0.0
      %579 = vmatpush1.msra.mxu0 0.0
      %580 = vmatprep.subr.mxu0 0.0
      %581 = vmatpush1.msra.mxu0 0.0
      %582 = vmatprep.subr.mxu0 0.0
      %583 = vmatpush1.msra.mxu0 0.0
      %584 = vmatprep.subr.mxu0 0.0
      %585 = vmatpush1.msra.mxu0 0.0
      %586 = vmatprep.mubr.f32.mxu0 0.0
      %587 = vmatmul.mubr.f32.gmra.mrb[0].mxu0 %v517
      %v588 = vpop.f32.mrb[0].mxu0
      %v589 = vadd.f32 0.0, %v588
      %v590 = vpop.f32.mrb[0].mxu0
      %591 = vmatprep.mubr.f32.mxu0 0.0
      %592 = vmatmul.mubr.f32.gmra.mrb[0].mxu0 %v520
      %v593 = vpop.f32.mrb[0].mxu0
      %v594 = vadd.f32 0.0, %v593
      %v595 = vpop.f32.mrb[0].mxu0
      %596 = vdwg.mxu0
      %597 = vrot.lane.b32.xlu0 %v269, 64
      %v598 = vpop.permute.xlu0 %597
      %599 = vrot.lane.b32.xlu0 %v270, 64
      %v600 = vpop.permute.xlu0 %599
      %v604 = vsel %vm289, %v508, 0
      %v607 = vsel %vm289, %v509, 0
      %609 = vmatprep.subr.mxu0 0.0
      %610 = vmatpush1.msra.mxu0 %v598
      %611 = vmatprep.subr.mxu0 0.0
      %612 = vmatpush1.msra.mxu0 %v600
      %613 = vmatprep.subr.mxu0 0.0
      %614 = vmatpush1.msra.mxu0 0.0
      %615 = vmatprep.subr.mxu0 0.0
      %616 = vmatpush1.msra.mxu0 0.0
      %617 = vmatprep.subr.mxu0 0.0
      %618 = vmatpush1.msra.mxu0 0.0
      %619 = vmatprep.subr.mxu0 0.0
      %620 = vmatpush1.msra.mxu0 0.0
      %621 = vmatprep.subr.mxu0 0.0
      %622 = vmatpush1.msra.mxu0 0.0
      %623 = vmatprep.subr.mxu0 0.0
      %624 = vmatpush1.msra.mxu0 0.0
      %625 = vmatprep.subr.mxu0 0.0
      %626 = vmatpush1.msra.mxu0 0.0
      %627 = vmatprep.subr.mxu0 0.0
      %628 = vmatpush1.msra.mxu0 0.0
      %629 = vmatprep.subr.mxu0 0.0
      %630 = vmatpush1.msra.mxu0 0.0
      %631 = vmatprep.subr.mxu0 0.0
      %632 = vmatpush1.msra.mxu0 0.0
      %633 = vmatprep.subr.mxu0 0.0
      %634 = vmatpush1.msra.mxu0 0.0
      %635 = vmatprep.subr.mxu0 0.0
      %636 = vmatpush1.msra.mxu0 0.0
      %637 = vmatprep.subr.mxu0 0.0
      %638 = vmatpush1.msra.mxu0 0.0
      %639 = vmatprep.subr.mxu0 0.0
      %640 = vmatpush1.msra.mxu0 0.0
      %641 = vmatprep.subr.mxu0 0.0
      %642 = vmatpush1.msra.mxu0 0.0
      %643 = vmatprep.subr.mxu0 0.0
      %644 = vmatpush1.msra.mxu0 0.0
      %645 = vmatprep.subr.mxu0 0.0
      %646 = vmatpush1.msra.mxu0 0.0
      %647 = vmatprep.subr.mxu0 0.0
      %648 = vmatpush1.msra.mxu0 0.0
      %649 = vmatprep.subr.mxu0 0.0
      %650 = vmatpush1.msra.mxu0 0.0
      %651 = vmatprep.subr.mxu0 0.0
      %652 = vmatpush1.msra.mxu0 0.0
      %653 = vmatprep.subr.mxu0 0.0
      %654 = vmatpush1.msra.mxu0 0.0
      %655 = vmatprep.subr.mxu0 0.0
      %656 = vmatpush1.msra.mxu0 0.0
      %657 = vmatprep.subr.mxu0 0.0
      %658 = vmatpush1.msra.mxu0 0.0
      %659 = vmatprep.subr.mxu0 0.0
      %660 = vmatpush1.msra.mxu0 0.0
      %661 = vmatprep.subr.mxu0 0.0
      %662 = vmatpush1.msra.mxu0 0.0
      %663 = vmatprep.subr.mxu0 0.0
      %664 = vmatpush1.msra.mxu0 0.0
      %665 = vmatprep.subr.mxu0 0.0
      %666 = vmatpush1.msra.mxu0 0.0
      %667 = vmatprep.subr.mxu0 0.0
      %668 = vmatpush1.msra.mxu0 0.0
      %669 = vmatprep.subr.mxu0 0.0
      %670 = vmatpush1.msra.mxu0 0.0
      %671 = vmatprep.subr.mxu0 0.0
      %672 = vmatpush1.msra.mxu0 0.0
      %673 = vmatprep.mubr.f32.mxu0 0.0
      %674 = vmatmul.mubr.f32.gmra.mrb[0].mxu0 %v604
      %v675 = vpop.f32.mrb[0].mxu0
      %v676 = vadd.f32 0.0, %v675
      %v677 = vpop.f32.mrb[0].mxu0
      %678 = vmatprep.mubr.f32.mxu0 0.0
      %679 = vmatmul.mubr.f32.gmra.mrb[0].mxu0 %v607
      %v680 = vpop.f32.mrb[0].mxu0
      %v681 = vadd.f32 0.0, %v680
      %v682 = vpop.f32.mrb[0].mxu0
      %683 = vdwg.mxu0
      %684 = vrot.lane.b32.xlu0 %v279, 112
      %v685 = vpop.permute.xlu0 %684
      %686 = vrot.lane.b32.xlu0 %v280, 112
      %v687 = vpop.permute.xlu0 %686
      %688 = vrot.lane.b32.xlu0 %v267, 80
      %v689 = vpop.permute.xlu0 %688
      %690 = vrot.lane.b32.xlu0 %v268, 80
      %v691 = vpop.permute.xlu0 %690
      %v692 = vsel %vm289, %v685, 0
      %v694 = vsel %vm289, %v687, 0
      %v696 = vsel %vm289, %v689, 0
      %v698 = vsel %vm289, %v691, 0
      %700 = vmatprep.subr.mxu0 0.0
      %701 = vmatpush1.xpose.msra.mxu0 %v696
      %702 = vmatprep.subr.mxu0 0.0
      %703 = vmatpush1.xpose.msra.mxu0 %v698
      %704 = vmatprep.subr.mxu0 0.0
      %705 = vmatpush1.xpose.msra.mxu0 0.0
      %706 = vmatprep.subr.mxu0 0.0
      %707 = vmatpush1.xpose.msra.mxu0 0.0
      %708 = vmatprep.subr.mxu0 0.0
      %709 = vmatpush1.xpose.msra.mxu0 0.0
      %710 = vmatprep.subr.mxu0 0.0
      %711 = vmatpush1.xpose.msra.mxu0 0.0
      %712 = vmatprep.subr.mxu0 0.0
      %713 = vmatpush1.xpose.msra.mxu0 0.0
      %714 = vmatprep.subr.mxu0 0.0
      %715 = vmatpush1.xpose.msra.mxu0 0.0
      %716 = vmatprep.subr.mxu0 0.0
      %717 = vmatpush1.xpose.msra.mxu0 0.0
      %718 = vmatprep.subr.mxu0 0.0
      %719 = vmatpush1.xpose.msra.mxu0 0.0
      %720 = vmatprep.subr.mxu0 0.0
      %721 = vmatpush1.xpose.msra.mxu0 0.0
      %722 = vmatprep.subr.mxu0 0.0
      %723 = vmatpush1.xpose.msra.mxu0 0.0
      %724 = vmatprep.subr.mxu0 0.0
      %725 = vmatpush1.xpose.msra.mxu0 0.0
      %726 = vmatprep.subr.mxu0 0.0
      %727 = vmatpush1.xpose.msra.mxu0 0.0
      %728 = vmatprep.subr.mxu0 0.0
      %729 = vmatpush1.xpose.msra.mxu0 0.0
      %730 = vmatprep.subr.mxu0 0.0
      %731 = vmatpush1.xpose.msra.mxu0 0.0
      %732 = vmatprep.subr.mxu0 0.0
      %733 = vmatpush1.xpose.msra.mxu0 0.0
      %734 = vmatprep.subr.mxu0 0.0
      %735 = vmatpush1.xpose.msra.mxu0 0.0
      %736 = vmatprep.subr.mxu0 0.0
      %737 = vmatpush1.xpose.msra.mxu0 0.0
      %738 = vmatprep.subr.mxu0 0.0
      %739 = vmatpush1.xpose.msra.mxu0 0.0
      %740 = vmatprep.subr.mxu0 0.0
      %741 = vmatpush1.xpose.msra.mxu0 0.0
      %742 = vmatprep.subr.mxu0 0.0
      %743 = vmatpush1.xpose.msra.mxu0 0.0
      %744 = vmatprep.subr.mxu0 0.0
      %745 = vmatpush1.xpose.msra.mxu0 0.0
      %746 = vmatprep.subr.mxu0 0.0
      %747 = vmatpush1.xpose.msra.mxu0 0.0
      %748 = vmatprep.subr.mxu0 0.0
      %749 = vmatpush1.xpose.msra.mxu0 0.0
      %750 = vmatprep.subr.mxu0 0.0
      %751 = vmatpush1.xpose.msra.mxu0 0.0
      %752 = vmatprep.subr.mxu0 0.0
      %753 = vmatpush1.xpose.msra.mxu0 0.0
      %754 = vmatprep.subr.mxu0 0.0
      %755 = vmatpush1.xpose.msra.mxu0 0.0
      %756 = vmatprep.subr.mxu0 0.0
      %757 = vmatpush1.xpose.msra.mxu0 0.0
      %758 = vmatprep.subr.mxu0 0.0
      %759 = vmatpush1.xpose.msra.mxu0 0.0
      %760 = vmatprep.subr.mxu0 0.0
      %761 = vmatpush1.xpose.msra.mxu0 0.0
      %762 = vmatprep.subr.mxu0 0.0
      %763 = vmatpush1.xpose.msra.mxu0 0.0
      %764 = vmatprep.mubr.f32.mxu0 0.0
      %765 = vmatmul.mubr.f32.gmra.mrb[0].mxu0 %v692
      %v766 = vpop.f32.mrb[0].mxu0
      %v767 = vadd.f32 %v271, %v766
      %v768 = vpop.f32.mrb[0].mxu0
      %769 = vmatprep.mubr.f32.mxu0 0.0
      %770 = vmatmul.mubr.f32.gmra.mrb[0].mxu0 %v694
      %v771 = vpop.f32.mrb[0].mxu0
      %v772 = vadd.f32 %v272, %v771
      %v773 = vpop.f32.mrb[0].mxu0
      %774 = vdwg.mxu0
      %775 = vrot.lane.b32.xlu0 %v281, 112
      %v776 = vpop.permute.xlu0 %775
      %777 = vrot.lane.b32.xlu0 %v282, 112
      %v778 = vpop.permute.xlu0 %777
      %779 = vrot.lane.b32.xlu0 %v269, 80
      %v780 = vpop.permute.xlu0 %779
      %781 = vrot.lane.b32.xlu0 %v270, 80
      %v782 = vpop.permute.xlu0 %781
      %v783 = vsel %vm289, %v776, 0
      %v785 = vsel %vm289, %v778, 0
      %v787 = vsel %vm289, %v780, 0
      %v789 = vsel %vm289, %v782, 0
      %791 = vmatprep.subr.mxu0 0.0
      %792 = vmatpush1.xpose.msra.mxu0 %v787
      %793 = vmatprep.subr.mxu0 0.0
      %794 = vmatpush1.xpose.msra.mxu0 %v789
      %795 = vmatprep.subr.mxu0 0.0
      %796 = vmatpush1.xpose.msra.mxu0 0.0
      %797 = vmatprep.subr.mxu0 0.0
      %798 = vmatpush1.xpose.msra.mxu0 0.0
      %799 = vmatprep.subr.mxu0 0.0
      %800 = vmatpush1.xpose.msra.mxu0 0.0
      %801 = vmatprep.subr.mxu0 0.0
      %802 = vmatpush1.xpose.msra.mxu0 0.0
      %803 = vmatprep.subr.mxu0 0.0
      %804 = vmatpush1.xpose.msra.mxu0 0.0
      %805 = vmatprep.subr.mxu0 0.0
      %806 = vmatpush1.xpose.msra.mxu0 0.0
      %807 = vmatprep.subr.mxu0 0.0
      %808 = vmatpush1.xpose.msra.mxu0 0.0
      %809 = vmatprep.subr.mxu0 0.0
      %810 = vmatpush1.xpose.msra.mxu0 0.0
      %811 = vmatprep.subr.mxu0 0.0
      %812 = vmatpush1.xpose.msra.mxu0 0.0
      %813 = vmatprep.subr.mxu0 0.0
      %814 = vmatpush1.xpose.msra.mxu0 0.0
      %815 = vmatprep.subr.mxu0 0.0
      %816 = vmatpush1.xpose.msra.mxu0 0.0
      %817 = vmatprep.subr.mxu0 0.0
      %818 = vmatpush1.xpose.msra.mxu0 0.0
      %819 = vmatprep.subr.mxu0 0.0
      %820 = vmatpush1.xpose.msra.mxu0 0.0
      %821 = vmatprep.subr.mxu0 0.0
      %822 = vmatpush1.xpose.msra.mxu0 0.0
      %823 = vmatprep.subr.mxu0 0.0
      %824 = vmatpush1.xpose.msra.mxu0 0.0
      %825 = vmatprep.subr.mxu0 0.0
      %826 = vmatpush1.xpose.msra.mxu0 0.0
      %827 = vmatprep.subr.mxu0 0.0
      %828 = vmatpush1.xpose.msra.mxu0 0.0
      %829 = vmatprep.subr.mxu0 0.0
      %830 = vmatpush1.xpose.msra.mxu0 0.0
      %831 = vmatprep.subr.mxu0 0.0
      %832 = vmatpush1.xpose.msra.mxu0 0.0
      %833 = vmatprep.subr.mxu0 0.0
      %834 = vmatpush1.xpose.msra.mxu0 0.0
      %835 = vmatprep.subr.mxu0 0.0
      %836 = vmatpush1.xpose.msra.mxu0 0.0
      %837 = vmatprep.subr.mxu0 0.0
      %838 = vmatpush1.xpose.msra.mxu0 0.0
      %839 = vmatprep.subr.mxu0 0.0
      %840 = vmatpush1.xpose.msra.mxu0 0.0
      %841 = vmatprep.subr.mxu0 0.0
      %842 = vmatpush1.xpose.msra.mxu0 0.0
      %843 = vmatprep.subr.mxu0 0.0
      %844 = vmatpush1.xpose.msra.mxu0 0.0
      %845 = vmatprep.subr.mxu0 0.0
      %846 = vmatpush1.xpose.msra.mxu0 0.0
      %847 = vmatprep.subr.mxu0 0.0
      %848 = vmatpush1.xpose.msra.mxu0 0.0
      %849 = vmatprep.subr.mxu0 0.0
      %850 = vmatpush1.xpose.msra.mxu0 0.0
      %851 = vmatprep.subr.mxu0 0.0
      %852 = vmatpush1.xpose.msra.mxu0 0.0
      %853 = vmatprep.subr.mxu0 0.0
      %854 = vmatpush1.xpose.msra.mxu0 0.0
      %855 = vmatprep.mubr.f32.mxu0 0.0
      %856 = vmatmul.mubr.f32.gmra.mrb[0].mxu0 %v783
      %v857 = vpop.f32.mrb[0].mxu0
      %v858 = vadd.f32 %v273, %v857
      %v859 = vpop.f32.mrb[0].mxu0
      %860 = vmatprep.mubr.f32.mxu0 0.0
      %861 = vmatmul.mubr.f32.gmra.mrb[0].mxu0 %v785
      %v862 = vpop.f32.mrb[0].mxu0
      %v863 = vadd.f32 %v274, %v862
      %v864 = vpop.f32.mrb[0].mxu0
      %865 = vdwg.mxu0
      %v866 = vsel %vm289, %v767, -inf
      %867 = vmax.xlane.f32.xlu0 %v866
      %v868 = vpop.xlane.xlu0 %867
      %v869 = vsel %vm289, %v772, -inf
      %870 = vmax.xlane.f32.xlu0 %v869
      %v871 = vpop.xlane.xlu0 %870
      %v872 = vsel %vm289, %v858, -inf
      %873 = vmax.xlane.f32.xlu0 %v872
      %v874 = vpop.xlane.xlu0 %873
      %v875 = vsel %vm289, %v863, -inf
      %876 = vmax.xlane.f32.xlu0 %v875
      %v877 = vpop.xlane.xlu0 %876
      %v878 = vsub.f32 %v767, %v868
      %v879 = vsub.f32 %v772, %v871
      %v880 = vsub.f32 %v858, %v874
      %v881 = vsub.f32 %v863, %v877
      %v882 = vmul.f32 %v878, 1.442695
      %v883 = vpow.pop %v882
      %v884 = vmul.f32 %v879, 1.442695
      %v885 = vpow.pop %v884
      %v886 = vmul.f32 %v880, 1.442695
      %v887 = vpow.pop %v886
      %v888 = vmul.f32 %v881, 1.442695
      %v889 = vpow.pop %v888
      %v890 = vsel %vm289, %v883, 0.0
      %891 = vadd.xlane.f32.xlu0 %v890
      %v892 = vpop.xlane.xlu0 %891
      %v893 = vsel %vm289, %v885, 0.0
      %894 = vadd.xlane.f32.xlu0 %v893
      %v895 = vpop.xlane.xlu0 %894
      %v896 = vsel %vm289, %v887, 0.0
      %897 = vadd.xlane.f32.xlu0 %v896
      %v898 = vpop.xlane.xlu0 %897
      %v899 = vsel %vm289, %v889, 0.0
      %900 = vadd.xlane.f32.xlu0 %v899
      %v901 = vpop.xlane.xlu0 %900
      %v902 = vrcp.pop %v892
      %v903 = vrcp.pop %v895
      %v904 = vrcp.pop %v898
      %v905 = vrcp.pop %v901
      %v906 = vmul.f32 %v883, %v902
      %v907 = vmul.f32 %v885, %v903
      %v908 = vmul.f32 %v887, %v904
      %v909 = vmul.f32 %v889, %v905
      %910 = vrot.lane.b32.xlu0 %v267, 48
      %v911 = vpop.permute.xlu0 %910
      %912 = vrot.lane.b32.xlu0 %v268, 48
      %v913 = vpop.permute.xlu0 %912
      %v917 = vsel %vm289, %v906, 0
      %v920 = vsel %vm289, %v907, 0
      %922 = vmatprep.subr.mxu0 0.0
      %923 = vmatpush1.msra.mxu0 %v911
      %924 = vmatprep.subr.mxu0 0.0
      %925 = vmatpush1.msra.mxu0 %v913
      %926 = vmatprep.subr.mxu0 0.0
      %927 = vmatpush1.msra.mxu0 0.0
      %928 = vmatprep.subr.mxu0 0.0
      %929 = vmatpush1.msra.mxu0 0.0
      %930 = vmatprep.subr.mxu0 0.0
      %931 = vmatpush1.msra.mxu0 0.0
      %932 = vmatprep.subr.mxu0 0.0
      %933 = vmatpush1.msra.mxu0 0.0
      %934 = vmatprep.subr.mxu0 0.0
      %935 = vmatpush1.msra.mxu0 0.0
      %936 = vmatprep.subr.mxu0 0.0
      %937 = vmatpush1.msra.mxu0 0.0
      %938 = vmatprep.subr.mxu0 0.0
      %939 = vmatpush1.msra.mxu0 0.0
      %940 = vmatprep.subr.mxu0 0.0
      %941 = vmatpush1.msra.mxu0 0.0
      %942 = vmatprep.subr.mxu0 0.0
      %943 = vmatpush1.msra.mxu0 0.0
      %944 = vmatprep.subr.mxu0 0.0
      %945 = vmatpush1.msra.mxu0 0.0
      %946 = vmatprep.subr.mxu0 0.0
      %947 = vmatpush1.msra.mxu0 0.0
      %948 = vmatprep.subr.mxu0 0.0
      %949 = vmatpush1.msra.mxu0 0.0
      %950 = vmatprep.subr.mxu0 0.0
      %951 = vmatpush1.msra.mxu0 0.0
      %952 = vmatprep.subr.mxu0 0.0
      %953 = vmatpush1.msra.mxu0 0.0
      %954 = vmatprep.subr.mxu0 0.0
      %955 = vmatpush1.msra.mxu0 0.0
      %956 = vmatprep.subr.mxu0 0.0
      %957 = vmatpush1.msra.mxu0 0.0
      %958 = vmatprep.subr.mxu0 0.0
      %959 = vmatpush1.msra.mxu0 0.0
      %960 = vmatprep.subr.mxu0 0.0
      %961 = vmatpush1.msra.mxu0 0.0
      %962 = vmatprep.subr.mxu0 0.0
      %963 = vmatpush1.msra.mxu0 0.0
      %964 = vmatprep.subr.mxu0 0.0
      %965 = vmatpush1.msra.mxu0 0.0
      %966 = vmatprep.subr.mxu0 0.0
      %967 = vmatpush1.msra.mxu0 0.0
      %968 = vmatprep.subr.mxu0 0.0
      %969 = vmatpush1.msra.mxu0 0.0
      %970 = vmatprep.subr.mxu0 0.0
      %971 = vmatpush1.msra.mxu0 0.0
      %972 = vmatprep.subr.mxu0 0.0
      %973 = vmatpush1.msra.mxu0 0.0
      %974 = vmatprep.subr.mxu0 0.0
      %975 = vmatpush1.msra.mxu0 0.0
      %976 = vmatprep.subr.mxu0 0.0
      %977 = vmatpush1.msra.mxu0 0.0
      %978 = vmatprep.subr.mxu0 0.0
      %979 = vmatpush1.msra.mxu0 0.0
      %980 = vmatprep.subr.mxu0 0.0
      %981 = vmatpush1.msra.mxu0 0.0
      %982 = vmatprep.subr.mxu0 0.0
      %983 = vmatpush1.msra.mxu0 0.0
      %984 = vmatprep.subr.mxu0 0.0
      %985 = vmatpush1.msra.mxu0 0.0
      %986 = vmatprep.mubr.f32.mxu0 0.0
      %987 = vmatmul.mubr.f32.gmra.mrb[0].mxu0 %v917
      %v988 = vpop.f32.mrb[0].mxu0
      %v989 = vadd.f32 0.0, %v988
      %v990 = vpop.f32.mrb[0].mxu0
      %991 = vmatprep.mubr.f32.mxu0 0.0
      %992 = vmatmul.mubr.f32.gmra.mrb[0].mxu0 %v920
      %v993 = vpop.f32.mrb[0].mxu0
      %v994 = vadd.f32 0.0, %v993
      %v995 = vpop.f32.mrb[0].mxu0
      %996 = vdwg.mxu0
      %997 = vrot.lane.b32.xlu0 %v269, 48
      %v998 = vpop.permute.xlu0 %997
      %999 = vrot.lane.b32.xlu0 %v270, 48
      %v1000 = vpop.permute.xlu0 %999
      %v1004 = vsel %vm289, %v908, 0
      %v1007 = vsel %vm289, %v909, 0
      %1009 = vmatprep.subr.mxu0 0.0
      %1010 = vmatpush1.msra.mxu0 %v998
      %1011 = vmatprep.subr.mxu0 0.0
      %1012 = vmatpush1.msra.mxu0 %v1000
      %1013 = vmatprep.subr.mxu0 0.0
      %1014 = vmatpush1.msra.mxu0 0.0
      %1015 = vmatprep.subr.mxu0 0.0
      %1016 = vmatpush1.msra.mxu0 0.0
      %1017 = vmatprep.subr.mxu0 0.0
      %1018 = vmatpush1.msra.mxu0 0.0
      %1019 = vmatprep.subr.mxu0 0.0
      %1020 = vmatpush1.msra.mxu0 0.0
      %1021 = vmatprep.subr.mxu0 0.0
      %1022 = vmatpush1.msra.mxu0 0.0
      %1023 = vmatprep.subr.mxu0 0.0
      %1024 = vmatpush1.msra.mxu0 0.0
      %1025 = vmatprep.subr.mxu0 0.0
      %1026 = vmatpush1.msra.mxu0 0.0
      %1027 = vmatprep.subr.mxu0 0.0
      %1028 = vmatpush1.msra.mxu0 0.0
      %1029 = vmatprep.subr.mxu0 0.0
      %1030 = vmatpush1.msra.mxu0 0.0
      %1031 = vmatprep.subr.mxu0 0.0
      %1032 = vmatpush1.msra.mxu0 0.0
      %1033 = vmatprep.subr.mxu0 0.0
      %1034 = vmatpush1.msra.mxu0 0.0
      %1035 = vmatprep.subr.mxu0 0.0
      %1036 = vmatpush1.msra.mxu0 0.0
      %1037 = vmatprep.subr.mxu0 0.0
      %1038 = vmatpush1.msra.mxu0 0.0
      %1039 = vmatprep.subr.mxu0 0.0
      %1040 = vmatpush1.msra.mxu0 0.0
      %1041 = vmatprep.subr.mxu0 0.0
      %1042 = vmatpush1.msra.mxu0 0.0
      %1043 = vmatprep.subr.mxu0 0.0
      %1044 = vmatpush1.msra.mxu0 0.0
      %1045 = vmatprep.subr.mxu0 0.0
      %1046 = vmatpush1.msra.mxu0 0.0
      %1047 = vmatprep.subr.mxu0 0.0
      %1048 = vmatpush1.msra.mxu0 0.0
      %1049 = vmatprep.subr.mxu0 0.0
      %1050 = vmatpush1.msra.mxu0 0.0
      %1051 = vmatprep.subr.mxu0 0.0
      %1052 = vmatpush1.msra.mxu0 0.0
      %1053 = vmatprep.subr.mxu0 0.0
      %1054 = vmatpush1.msra.mxu0 0.0
      %1055 = vmatprep.subr.mxu0 0.0
      %1056 = vmatpush1.msra.mxu0 0.0
      %1057 = vmatprep.subr.mxu0 0.0
      %1058 = vmatpush1.msra.mxu0 0.0
      %1059 = vmatprep.subr.mxu0 0.0
      %1060 = vmatpush1.msra.mxu0 0.0
      %1061 = vmatprep.subr.mxu0 0.0
      %1062 = vmatpush1.msra.mxu0 0.0
      %1063 = vmatprep.subr.mxu0 0.0
      %1064 = vmatpush1.msra.mxu0 0.0
      %1065 = vmatprep.subr.mxu0 0.0
      %1066 = vmatpush1.msra.mxu0 0.0
      %1067 = vmatprep.subr.mxu0 0.0
      %1068 = vmatpush1.msra.mxu0 0.0
      %1069 = vmatprep.subr.mxu0 0.0
      %1070 = vmatpush1.msra.mxu0 0.0
      %1071 = vmatprep.subr.mxu0 0.0
      %1072 = vmatpush1.msra.mxu0 0.0
      %1073 = vmatprep.mubr.f32.mxu0 0.0
      %1074 = vmatmul.mubr.f32.gmra.mrb[0].mxu0 %v1004
      %v1075 = vpop.f32.mrb[0].mxu0
      %v1076 = vadd.f32 0.0, %v1075
      %v1077 = vpop.f32.mrb[0].mxu0
      %1078 = vmatprep.mubr.f32.mxu0 0.0
      %1079 = vmatmul.mubr.f32.gmra.mrb[0].mxu0 %v1007
      %v1080 = vpop.f32.mrb[0].mxu0
      %v1081 = vadd.f32 0.0, %v1080
      %v1082 = vpop.f32.mrb[0].mxu0
      %1083 = vdwg.mxu0
      %v1085 = vsel %vm289, %v989, 0
      %v1088 = vsel %vm289, %v994, 0
      %v1091 = vsel %vm289, %v1076, 0
      %v1094 = vsel %vm289, %v1081, 0
      %1096 = vmatprep.subr.mxu0 0.0
      %1097 = vmatpush1.msra.mxu0 %v277
      %1098 = vmatprep.subr.mxu0 0.0
      %1099 = vmatpush1.msra.mxu0 %v278
      %1100 = vmatprep.subr.mxu0 0.0
      %1101 = vmatpush1.msra.mxu0 0.0
      %1102 = vmatprep.subr.mxu0 0.0
      %1103 = vmatpush1.msra.mxu0 0.0
      %1104 = vmatprep.subr.mxu0 0.0
      %1105 = vmatpush1.msra.mxu0 0.0
      %1106 = vmatprep.subr.mxu0 0.0
      %1107 = vmatpush1.msra.mxu0 0.0
      %1108 = vmatprep.subr.mxu0 0.0
      %1109 = vmatpush1.msra.mxu0 0.0
      %1110 = vmatprep.subr.mxu0 0.0
      %1111 = vmatpush1.msra.mxu0 0.0
      %1112 = vmatprep.subr.mxu0 0.0
      %1113 = vmatpush1.msra.mxu0 0.0
      %1114 = vmatprep.subr.mxu0 0.0
      %1115 = vmatpush1.msra.mxu0 0.0
      %1116 = vmatprep.subr.mxu0 0.0
      %1117 = vmatpush1.msra.mxu0 0.0
      %1118 = vmatprep.subr.mxu0 0.0
      %1119 = vmatpush1.msra.mxu0 0.0
      %1120 = vmatprep.subr.mxu0 0.0
      %1121 = vmatpush1.msra.mxu0 0.0
      %1122 = vmatprep.subr.mxu0 0.0
      %1123 = vmatpush1.msra.mxu0 0.0
      %1124 = vmatprep.subr.mxu0 0.0
      %1125 = vmatpush1.msra.mxu0 0.0
      %1126 = vmatprep.subr.mxu0 0.0
      %1127 = vmatpush1.msra.mxu0 0.0
      %1128 = vmatprep.subr.mxu0 0.0
      %1129 = vmatpush1.msra.mxu0 0.0
      %1130 = vmatprep.subr.mxu0 0.0
      %1131 = vmatpush1.msra.mxu0 0.0
      %1132 = vmatprep.subr.mxu0 0.0
      %1133 = vmatpush1.msra.mxu0 0.0
      %1134 = vmatprep.subr.mxu0 0.0
      %1135 = vmatpush1.msra.mxu0 0.0
      %1136 = vmatprep.subr.mxu0 0.0
      %1137 = vmatpush1.msra.mxu0 0.0
      %1138 = vmatprep.subr.mxu0 0.0
      %1139 = vmatpush1.msra.mxu0 0.0
      %1140 = vmatprep.subr.mxu0 0.0
      %1141 = vmatpush1.msra.mxu0 0.0
      %1142 = vmatprep.subr.mxu0 0.0
      %1143 = vmatpush1.msra.mxu0 0.0
      %1144 = vmatprep.subr.mxu0 0.0
      %1145 = vmatpush1.msra.mxu0 0.0
      %1146 = vmatprep.subr.mxu0 0.0
      %1147 = vmatpush1.msra.mxu0 0.0
      %1148 = vmatprep.subr.mxu0 0.0
      %1149 = vmatpush1.msra.mxu0 0.0
      %1150 = vmatprep.subr.mxu0 0.0
      %1151 = vmatpush1.msra.mxu0 0.0
      %1152 = vmatprep.subr.mxu0 0.0
      %1153 = vmatpush1.msra.mxu0 0.0
      %1154 = vmatprep.subr.mxu0 0.0
      %1155 = vmatpush1.msra.mxu0 0.0
      %1156 = vmatprep.subr.mxu0 0.0
      %1157 = vmatpush1.msra.mxu0 0.0
      %1158 = vmatprep.subr.mxu0 0.0
      %1159 = vmatpush1.msra.mxu0 0.0
      %1160 = vmatprep.mubr.f32.mxu0 0.0
      %1161 = vmatmul.mubr.f32.gmra.mrb[0].mxu0 %v1085
      %v1162 = vpop.f32.mrb[0].mxu0
      %v1163 = vadd.f32 0.0, %v1162
      %v1164 = vpop.f32.mrb[0].mxu0
      %1165 = vmatprep.mubr.f32.mxu0 0.0
      %1166 = vmatmul.mubr.f32.gmra.mrb[0].mxu0 %v1088
      %v1167 = vpop.f32.mrb[0].mxu0
      %v1168 = vadd.f32 0.0, %v1167
      %v1169 = vpop.f32.mrb[0].mxu0
      %1170 = vmatprep.mubr.f32.mxu0 0.0
      %1171 = vmatmul.mubr.f32.gmra.mrb[0].mxu0 %v1091
      %v1172 = vpop.f32.mrb[0].mxu0
      %v1173 = vadd.f32 0.0, %v1172
      %v1174 = vpop.f32.mrb[0].mxu0
      %1175 = vmatprep.mubr.f32.mxu0 0.0
      %1176 = vmatmul.mubr.f32.gmra.mrb[0].mxu0 %v1094
      %v1177 = vpop.f32.mrb[0].mxu0
      %v1178 = vadd.f32 0.0, %v1177
      %v1179 = vpop.f32.mrb[0].mxu0
      %1180 = vdwg.mxu0
      %v1182 = vsel %vm289, %v589, 0
      %v1185 = vsel %vm289, %v594, 0
      %v1188 = vsel %vm289, %v676, 0
      %v1191 = vsel %vm289, %v681, 0
      %1193 = vmatprep.subr.mxu0 0.0
      %1194 = vmatpush1.msra.mxu0 %v275
      %1195 = vmatprep.subr.mxu0 0.0
      %1196 = vmatpush1.msra.mxu0 %v276
      %1197 = vmatprep.subr.mxu0 0.0
      %1198 = vmatpush1.msra.mxu0 0.0
      %1199 = vmatprep.subr.mxu0 0.0
      %1200 = vmatpush1.msra.mxu0 0.0
      %1201 = vmatprep.subr.mxu0 0.0
      %1202 = vmatpush1.msra.mxu0 0.0
      %1203 = vmatprep.subr.mxu0 0.0
      %1204 = vmatpush1.msra.mxu0 0.0
      %1205 = vmatprep.subr.mxu0 0.0
      %1206 = vmatpush1.msra.mxu0 0.0
      %1207 = vmatprep.subr.mxu0 0.0
      %1208 = vmatpush1.msra.mxu0 0.0
      %1209 = vmatprep.subr.mxu0 0.0
      %1210 = vmatpush1.msra.mxu0 0.0
      %1211 = vmatprep.subr.mxu0 0.0
      %1212 = vmatpush1.msra.mxu0 0.0
      %1213 = vmatprep.subr.mxu0 0.0
      %1214 = vmatpush1.msra.mxu0 0.0
      %1215 = vmatprep.subr.mxu0 0.0
      %1216 = vmatpush1.msra.mxu0 0.0
      %1217 = vmatprep.subr.mxu0 0.0
      %1218 = vmatpush1.msra.mxu0 0.0
      %1219 = vmatprep.subr.mxu0 0.0
      %1220 = vmatpush1.msra.mxu0 0.0
      %1221 = vmatprep.subr.mxu0 0.0
      %1222 = vmatpush1.msra.mxu0 0.0
      %1223 = vmatprep.subr.mxu0 0.0
      %1224 = vmatpush1.msra.mxu0 0.0
      %1225 = vmatprep.subr.mxu0 0.0
      %1226 = vmatpush1.msra.mxu0 0.0
      %1227 = vmatprep.subr.mxu0 0.0
      %1228 = vmatpush1.msra.mxu0 0.0
      %1229 = vmatprep.subr.mxu0 0.0
      %1230 = vmatpush1.msra.mxu0 0.0
      %1231 = vmatprep.subr.mxu0 0.0
      %1232 = vmatpush1.msra.mxu0 0.0
      %1233 = vmatprep.subr.mxu0 0.0
      %1234 = vmatpush1.msra.mxu0 0.0
      %1235 = vmatprep.subr.mxu0 0.0
      %1236 = vmatpush1.msra.mxu0 0.0
      %1237 = vmatprep.subr.mxu0 0.0
      %1238 = vmatpush1.msra.mxu0 0.0
      %1239 = vmatprep.subr.mxu0 0.0
      %1240 = vmatpush1.msra.mxu0 0.0
      %1241 = vmatprep.subr.mxu0 0.0
      %1242 = vmatpush1.msra.mxu0 0.0
      %1243 = vmatprep.subr.mxu0 0.0
      %1244 = vmatpush1.msra.mxu0 0.0
      %1245 = vmatprep.subr.mxu0 0.0
      %1246 = vmatpush1.msra.mxu0 0.0
      %1247 = vmatprep.subr.mxu0 0.0
      %1248 = vmatpush1.msra.mxu0 0.0
      %1249 = vmatprep.subr.mxu0 0.0
      %1250 = vmatpush1.msra.mxu0 0.0
      %1251 = vmatprep.subr.mxu0 0.0
      %1252 = vmatpush1.msra.mxu0 0.0
      %1253 = vmatprep.subr.mxu0 0.0
      %1254 = vmatpush1.msra.mxu0 0.0
      %1255 = vmatprep.subr.mxu0 0.0
      %1256 = vmatpush1.msra.mxu0 0.0
      %1257 = vmatprep.mubr.f32.mxu0 0.0
      %1258 = vmatmul.mubr.f32.gmra.mrb[0].mxu0 %v1182
      %v1259 = vpop.f32.mrb[0].mxu0
      %v1260 = vadd.f32 %v1163, %v1259
      %v1261 = vpop.f32.mrb[0].mxu0
      %1262 = vmatprep.mubr.f32.mxu0 0.0
      %1263 = vmatmul.mubr.f32.gmra.mrb[0].mxu0 %v1185
      %v1264 = vpop.f32.mrb[0].mxu0
      %v1265 = vadd.f32 %v1168, %v1264
      %v1266 = vpop.f32.mrb[0].mxu0
      %1267 = vmatprep.mubr.f32.mxu0 0.0
      %1268 = vmatmul.mubr.f32.gmra.mrb[0].mxu0 %v1188
      %v1269 = vpop.f32.mrb[0].mxu0
      %v1270 = vadd.f32 %v1173, %v1269
      %v1271 = vpop.f32.mrb[0].mxu0
      %1272 = vmatprep.mubr.f32.mxu0 0.0
      %1273 = vmatmul.mubr.f32.gmra.mrb[0].mxu0 %v1191
      %v1274 = vpop.f32.mrb[0].mxu0
      %v1275 = vadd.f32 %v1178, %v1274
      %v1276 = vpop.f32.mrb[0].mxu0
      %1277 = vdwg.mxu0
      %v1278 = vld [vmem:[%s3] sm:$0x1]
      %v1280 = vlaneseq
      %v1281 = vshrl.u32 %v1280, 7
      %v1282 = vsub.s32 0, %v1281
      %v1283 = vrot.slane %v1278, %v1282
      %v1285 = vadd.f32 %v1260, %v1283
      %v1286 = vadd.f32 %v1265, %v1283
      %v1287 = vadd.f32 %v1270, %v1283
      %v1288 = vadd.f32 %v1275, %v1283
      %vm1289 = vcmask 261120
      %1290 = vst.msk [vmem:[%s265] sm:$0xff] %vm1289, %v1285
      %1291 = vst.msk [vmem:[%s265 + $0x8] sm:$0xff] %vm1289, %v1286
      %1292 = vst.msk [vmem:[%s265 + $0x10] sm:$0xff] %vm1289, %v1287
      %1293 = vst.msk [vmem:[%s265 + $0x18] sm:$0xff] %vm1289, %v1288
      %s1294 = smul.u32 2, %s20
      %p1295 = scmp.lt.s32.totalorder %s19, 1
      %s1296 = scalar_select %p1295, %s19, 1
      %p1297 = scmp.lt.s32.totalorder %s1294, 3
      %s1298 = scalar_select %p1297, %s1294, 3
      %s1299 = smul.addr %s1298, 2
      %s1300 = smul.addr %s1296, 8
      %s1301 = sadd.s32 %s1299, %s1300
      %s1302 = smul.addr %s1301, 8
      %s1303 = scalar_lea.vmem %s4, %s1302
      // Predicated region
      $region37: #{stage_module.9} parent=35 // pred_check
        %p1304 = pneg %p143
      $region38: #{stage_module.9} parent=35 // pred_check_branch
        %1306 = sbr.rel (%p1304) target = $region40
      $region39: #{stage_module.9} parent=35 // pred_region
        %s1307 = smul.u32 2, %s20
      $region40: #{stage_module.9} parent=35 // pred_fallthru
        _
    $region36: #{stage_module.9} parent=5 // pred_fallthru
      _
    %p1308 = scmp.le.s32.totalorder 2, %s10
    // Predicated region
    $region41: #{stage_module.9} parent=5 // pred_check
      %p1309 = pneg %p1308
    $region42: #{stage_module.9} parent=5 // pred_check_branch
      %1311 = sbr.rel (%p1309) target = $region44
    $region43: #{stage_module.9} parent=5 // pred_region
      %s1312 = ssub.s32 %s10, 2
      // Predicated region
      $region45: #{stage_module.9} parent=43 // pred_check
        %p1313 = pneg %p149
      $region46: #{stage_module.9} parent=43 // pred_check_branch
        %1315 = sbr.rel (%p1313) target = $region48
      $region47: #{stage_module.9} parent=43 // pred_region
        %s1316 = smul.u32 2, %s22
        %p1317 = scmp.lt.s32.totalorder %s21, 1
        %s1318 = scalar_select %p1317, %s21, 1
        %p1319 = scmp.lt.s32.totalorder %s1316, 3
        %s1320 = scalar_select %p1319, %s1316, 3
        %s1321 = smul.addr %s1320, 2
        %s1322 = smul.addr %s1318, 8
        %s1323 = sadd.s32 %s1321, %s1322
        %s1324 = smul.addr %s1323, 8
        %s1325 = scalar_lea.vmem %s4, %s1324
      $region48: #{stage_module.9} parent=43 // pred_fallthru
        _
    $region44: #{stage_module.9} parent=5 // pred_fallthru
      _
  $region6: #{stage_module.9} parent=0 // loop_footer
    %s14 = sadd.s32 1, %s10
  $region7: #{stage_module.9} parent=0 // loop_footer_branch
    %9 = sbr.rel target = $region3
  $region8: #{stage_module.9} parent=0 // loop_exit
    _

// kernel: stage_module.10
$region0: #{stage_module.10}
  #allocation0 [shape = 'u32[]', space=smem, size = 0x4, offset = 0x4, fixed_abs, tag = 'smem constant byte address 0x4 - core index']
  #allocation1 [shape = 'u32[144,128]{1,0:T(1,128)}', space=vmem, size = 0x12000, scoped, tag = 'internal scratch']
  %s0 = inlined_call_operand.vmem [shape: f32[128,32], index: 0, kind: input, shape index: {}]
  %s1 = inlined_call_operand.vmem [shape: f32[128,32], index: 1, kind: input, shape index: {}]
  %s2 = inlined_call_operand.vmem [shape: f32[1,32], index: 2, kind: input, shape index: {}]
  %s3 = inlined_call_operand.vmem [shape: f32[1,32], index: 3, kind: input, shape index: {}]
  %s4 = inlined_call_operand.vmem [shape: f32[32,128], index: 4, kind: input, shape index: {}]
  %s5 = inlined_call_operand.vmem [shape: f32[1,128], index: 5, kind: input, shape index: {}]
  %s6 = inlined_call_operand.vmem [shape: f32[128,32], index: 6, kind: input, shape index: {}]
  %s7 = inlined_call_operand.vmem [shape: f32[1,32], index: 7, kind: input, shape index: {}]
  %s8 = inlined_call_operand.vmem [shape: f32[128,32], index: 8, kind: output, shape index: {}]
  %s9 = sld [smem:[#allocation0]]
  $region65: #{stage_module.10} parent=0
    _
  %s11 = ssub.s32 1, %s9
  %s12 = scalar_select 0, %s11, %s9
  loop: start=0, step=1, limit=4
  $region2: #{stage_module.10} parent=0 // loop_pre_header
    _
  $region3: #{stage_module.10} parent=0 // loop_header
    %s14 = sphi 0, %s18
    %p15 = scmp.ge.s32.totalorder %s14, 4
    %s24 = sphi 0, %s26
    %s27 = sphi 0, %s24
    %s28 = sphi 0, %s27
    %s44 = sphi 0, %s28
    %s50 = sphi 0, %s52
    %s53 = sphi 0, %s50
    %s54 = sphi 0, %s53
    %s70 = sphi 0, %s54
    %s74 = sphi 0, %s74
    %s76 = sphi 0, %s74
    %s77 = sphi 0, %s76
    %s91 = sphi 0, %s77
    %s95 = sphi 0, %s95
    %s97 = sphi 0, %s95
    %s98 = sphi 0, %s97
    %s112 = sphi 0, %s98
    %s116 = sphi 0, %s116
    %s118 = sphi 0, %s116
    %s119 = sphi 0, %s118
    %s133 = sphi 0, %s119
    %s137 = sphi 0, %s137
    %s139 = sphi 0, %s137
    %s140 = sphi 0, %s139
    %s154 = sphi 0, %s140
    %s158 = sphi 0, %s158
    %s160 = sphi 0, %s158
    %s161 = sphi 0, %s160
    %s175 = sphi 0, %s161
    %s179 = sphi 0, %s179
    %s181 = sphi 0, %s179
    %s182 = sphi 0, %s181
    %s196 = sphi 0, %s182
    %s202 = sphi 0, %s204
    %s205 = sphi 0, %s202
    %s206 = sphi 0, %s205
    %s222 = sphi 0, %s206
  $region4: #{stage_module.10} parent=0 // loop_header_branch
    %17 = sbr.rel (%p15) target = $region8
  $region5: #{stage_module.10} parent=0 // loop_body
    %s19 = ssub.s32 %s14, 1
    %s20 = ssub.s32 %s14, 2
    %s21 = sadd.s32 %s14, 1
    %s22 = ssub.s32 %s14, %s21
    %p23 = scmp.eq.s32.totalorder %s22, 0
    %s25 = sadd.s32 %s24, 1
    %s26 = scalar_select %p23, %s24, %s25
    %p29 = pneg %p23
    %p30 = scmp.eq.s32.totalorder %s14, 1
    %p31 = por %p29, %p30
    %p32 = scmp.ne.s32.totalorder %s24, %s27
    %p33 = scmp.eq.s32.totalorder %s14, 0
    %p34 = por %p32, %p33
    %p35 = scmp.ne.s32.totalorder %s24, %s27
    %p36 = scmp.eq.s32.totalorder %s19, 1
    %p37 = por %p35, %p36
    %p38 = scmp.ne.s32.totalorder %s27, %s28
    %p39 = scmp.eq.s32.totalorder %s19, 0
    %p40 = por %p38, %p39
    %p41 = scmp.ne.s32.totalorder %s27, %s28
    %p42 = scmp.eq.s32.totalorder %s20, 1
    %p43 = por %p41, %p42
    %p45 = scmp.ne.s32.totalorder %s28, %s44
    %p46 = scmp.eq.s32.totalorder %s20, 0
    %p47 = por %p45, %p46
    %s48 = ssub.s32 %s14, %s21
    %p49 = scmp.eq.s32.totalorder %s48, 0
    %s51 = sadd.s32 %s50, 1
    %s52 = scalar_select %p49, %s50, %s51
    %p55 = pneg %p49
    %p56 = scmp.eq.s32.totalorder %s14, 1
    %p57 = por %p55, %p56
    %p58 = scmp.ne.s32.totalorder %s50, %s53
    %p59 = scmp.eq.s32.totalorder %s14, 0
    %p60 = por %p58, %p59
    %p61 = scmp.ne.s32.totalorder %s50, %s53
    %p62 = scmp.eq.s32.totalorder %s19, 1
    %p63 = por %p61, %p62
    %p64 = scmp.ne.s32.totalorder %s53, %s54
    %p65 = scmp.eq.s32.totalorder %s19, 0
    %p66 = por %p64, %p65
    %p67 = scmp.ne.s32.totalorder %s53, %s54
    %p68 = scmp.eq.s32.totalorder %s20, 1
    %p69 = por %p67, %p68
    %p71 = scmp.ne.s32.totalorder %s54, %s70
    %p72 = scmp.eq.s32.totalorder %s20, 0
    %p73 = por %p71, %p72
    %s75 = sadd.s32 %s74, 1
    %p78 = scmp.eq.s32.totalorder %s14, 1
    %p79 = scmp.ne.s32.totalorder %s74, %s76
    %p80 = scmp.eq.s32.totalorder %s14, 0
    %p81 = por %p79, %p80
    %p82 = scmp.ne.s32.totalorder %s74, %s76
    %p83 = scmp.eq.s32.totalorder %s19, 1
    %p84 = por %p82, %p83
    %p85 = scmp.ne.s32.totalorder %s76, %s77
    %p86 = scmp.eq.s32.totalorder %s19, 0
    %p87 = por %p85, %p86
    %p88 = scmp.ne.s32.totalorder %s76, %s77
    %p89 = scmp.eq.s32.totalorder %s20, 1
    %p90 = por %p88, %p89
    %p92 = scmp.ne.s32.totalorder %s77, %s91
    %p93 = scmp.eq.s32.totalorder %s20, 0
    %p94 = por %p92, %p93
    %s96 = sadd.s32 %s95, 1
    %p99 = scmp.eq.s32.totalorder %s14, 1
    %p100 = scmp.ne.s32.totalorder %s95, %s97
    %p101 = scmp.eq.s32.totalorder %s14, 0
    %p102 = por %p100, %p101
    %p103 = scmp.ne.s32.totalorder %s95, %s97
    %p104 = scmp.eq.s32.totalorder %s19, 1
    %p105 = por %p103, %p104
    %p106 = scmp.ne.s32.totalorder %s97, %s98
    %p107 = scmp.eq.s32.totalorder %s19, 0
    %p108 = por %p106, %p107
    %p109 = scmp.ne.s32.totalorder %s97, %s98
    %p110 = scmp.eq.s32.totalorder %s20, 1
    %p111 = por %p109, %p110
    %p113 = scmp.ne.s32.totalorder %s98, %s112
    %p114 = scmp.eq.s32.totalorder %s20, 0
    %p115 = por %p113, %p114
    %s117 = sadd.s32 %s116, 1
    %p120 = scmp.eq.s32.totalorder %s14, 1
    %p121 = scmp.ne.s32.totalorder %s116, %s118
    %p122 = scmp.eq.s32.totalorder %s14, 0
    %p123 = por %p121, %p122
    %p124 = scmp.ne.s32.totalorder %s116, %s118
    %p125 = scmp.eq.s32.totalorder %s19, 1
    %p126 = por %p124, %p125
    %p127 = scmp.ne.s32.totalorder %s118, %s119
    %p128 = scmp.eq.s32.totalorder %s19, 0
    %p129 = por %p127, %p128
    %p130 = scmp.ne.s32.totalorder %s118, %s119
    %p131 = scmp.eq.s32.totalorder %s20, 1
    %p132 = por %p130, %p131
    %p134 = scmp.ne.s32.totalorder %s119, %s133
    %p135 = scmp.eq.s32.totalorder %s20, 0
    %p136 = por %p134, %p135
    %s138 = sadd.s32 %s137, 1
    %p141 = scmp.eq.s32.totalorder %s14, 1
    %p142 = scmp.ne.s32.totalorder %s137, %s139
    %p143 = scmp.eq.s32.totalorder %s14, 0
    %p144 = por %p142, %p143
    %p145 = scmp.ne.s32.totalorder %s137, %s139
    %p146 = scmp.eq.s32.totalorder %s19, 1
    %p147 = por %p145, %p146
    %p148 = scmp.ne.s32.totalorder %s139, %s140
    %p149 = scmp.eq.s32.totalorder %s19, 0
    %p150 = por %p148, %p149
    %p151 = scmp.ne.s32.totalorder %s139, %s140
    %p152 = scmp.eq.s32.totalorder %s20, 1
    %p153 = por %p151, %p152
    %p155 = scmp.ne.s32.totalorder %s140, %s154
    %p156 = scmp.eq.s32.totalorder %s20, 0
    %p157 = por %p155, %p156
    %s159 = sadd.s32 %s158, 1
    %p162 = scmp.eq.s32.totalorder %s14, 1
    %p163 = scmp.ne.s32.totalorder %s158, %s160
    %p164 = scmp.eq.s32.totalorder %s14, 0
    %p165 = por %p163, %p164
    %p166 = scmp.ne.s32.totalorder %s158, %s160
    %p167 = scmp.eq.s32.totalorder %s19, 1
    %p168 = por %p166, %p167
    %p169 = scmp.ne.s32.totalorder %s160, %s161
    %p170 = scmp.eq.s32.totalorder %s19, 0
    %p171 = por %p169, %p170
    %p172 = scmp.ne.s32.totalorder %s160, %s161
    %p173 = scmp.eq.s32.totalorder %s20, 1
    %p174 = por %p172, %p173
    %p176 = scmp.ne.s32.totalorder %s161, %s175
    %p177 = scmp.eq.s32.totalorder %s20, 0
    %p178 = por %p176, %p177
    %s180 = sadd.s32 %s179, 1
    %p183 = scmp.eq.s32.totalorder %s14, 1
    %p184 = scmp.ne.s32.totalorder %s179, %s181
    %p185 = scmp.eq.s32.totalorder %s14, 0
    %p186 = por %p184, %p185
    %p187 = scmp.ne.s32.totalorder %s179, %s181
    %p188 = scmp.eq.s32.totalorder %s19, 1
    %p189 = por %p187, %p188
    %p190 = scmp.ne.s32.totalorder %s181, %s182
    %p191 = scmp.eq.s32.totalorder %s19, 0
    %p192 = por %p190, %p191
    %p193 = scmp.ne.s32.totalorder %s181, %s182
    %p194 = scmp.eq.s32.totalorder %s20, 1
    %p195 = por %p193, %p194
    %p197 = scmp.ne.s32.totalorder %s182, %s196
    %p198 = scmp.eq.s32.totalorder %s20, 0
    %p199 = por %p197, %p198
    %s200 = ssub.s32 %s14, %s21
    %p201 = scmp.eq.s32.totalorder %s200, 0
    %s203 = sadd.s32 %s202, 1
    %s204 = scalar_select %p201, %s202, %s203
    %p207 = pneg %p201
    %p208 = scmp.eq.s32.totalorder %s14, 1
    %p209 = por %p207, %p208
    %p210 = scmp.ne.s32.totalorder %s202, %s205
    %p211 = scmp.eq.s32.totalorder %s14, 0
    %p212 = por %p210, %p211
    %p213 = scmp.ne.s32.totalorder %s202, %s205
    %p214 = scmp.eq.s32.totalorder %s19, 1
    %p215 = por %p213, %p214
    %p216 = scmp.ne.s32.totalorder %s205, %s206
    %p217 = scmp.eq.s32.totalorder %s19, 0
    %p218 = por %p216, %p217
    %p219 = scmp.ne.s32.totalorder %s205, %s206
    %p220 = scmp.eq.s32.totalorder %s20, 1
    %p221 = por %p219, %p220
    %p223 = scmp.ne.s32.totalorder %s206, %s222
    %p224 = scmp.eq.s32.totalorder %s20, 0
    %p225 = por %p223, %p224
    %p226 = scmp.le.s32.totalorder 1, %s14
    %p227 = scmp.lt.s32.totalorder %s14, 3
    %p228 = pnand %p226, %p227
    %p229 = pneg %p228
    // Predicated region
    $region9: #{stage_module.10} parent=5 // pred_check
      _
    $region10: #{stage_module.10} parent=5 // pred_check_branch
      %231 = sbr.rel (%p228) target = $region12
    $region11: #{stage_module.10} parent=5 // pred_region
      %s232 = ssub.s32 %s14, 1
      // Predicated region
      $region13: #{stage_module.10} parent=11 // pred_check
        %p233 = pneg %p87
      $region14: #{stage_module.10} parent=11 // pred_check_branch
        %235 = sbr.rel (%p233) target = $region16
      $region15: #{stage_module.10} parent=11 // pred_region
        _
      $region16: #{stage_module.10} parent=11 // pred_fallthru
        _
      // Predicated region
      $region17: #{stage_module.10} parent=11 // pred_check
        %p236 = pneg %p108
      $region18: #{stage_module.10} parent=11 // pred_check_branch
        %238 = sbr.rel (%p236) target = $region20
      $region19: #{stage_module.10} parent=11 // pred_region
        _
      $region20: #{stage_module.10} parent=11 // pred_fallthru
        _
      // Predicated region
      $region21: #{stage_module.10} parent=11 // pred_check
        %p239 = pneg %p129
      $region22: #{stage_module.10} parent=11 // pred_check_branch
        %241 = sbr.rel (%p239) target = $region24
      $region23: #{stage_module.10} parent=11 // pred_region
        _
      $region24: #{stage_module.10} parent=11 // pred_fallthru
        _
      // Predicated region
      $region25: #{stage_module.10} parent=11 // pred_check
        %p242 = pneg %p150
      $region26: #{stage_module.10} parent=11 // pred_check_branch
        %244 = sbr.rel (%p242) target = $region28
      $region27: #{stage_module.10} parent=11 // pred_region
        _
      $region28: #{stage_module.10} parent=11 // pred_fallthru
        _
      // Predicated region
      $region29: #{stage_module.10} parent=11 // pred_check
        %p245 = pneg %p171
      $region30: #{stage_module.10} parent=11 // pred_check_branch
        %247 = sbr.rel (%p245) target = $region32
      $region31: #{stage_module.10} parent=11 // pred_region
        _
      $region32: #{stage_module.10} parent=11 // pred_fallthru
        _
      // Predicated region
      $region33: #{stage_module.10} parent=11 // pred_check
        %p248 = pneg %p192
      $region34: #{stage_module.10} parent=11 // pred_check_branch
        %250 = sbr.rel (%p248) target = $region36
      $region35: #{stage_module.10} parent=11 // pred_region
        _
      $region36: #{stage_module.10} parent=11 // pred_fallthru
        _
    $region12: #{stage_module.10} parent=5 // pred_fallthru
      _
    %p251 = scmp.lt.s32.totalorder %s14, 2
    // Predicated region
    $region37: #{stage_module.10} parent=5 // pred_check
      %p252 = pneg %p251
    $region38: #{stage_module.10} parent=5 // pred_check_branch
      %254 = sbr.rel (%p252) target = $region40
    $region39: #{stage_module.10} parent=5 // pred_region
      // Predicated region
      $region41: #{stage_module.10} parent=39 // pred_check
        %p255 = pneg %p34
      $region42: #{stage_module.10} parent=39 // pred_check_branch
        %257 = sbr.rel (%p255) target = $region44
      $region43: #{stage_module.10} parent=39 // pred_region
        %s258 = smul.u32 8, %s14
        %p259 = scmp.lt.s32.totalorder %s258, 15
        %s260 = scalar_select %p259, %s258, 15
        %s261 = smul.addr %s260, 8
        %s262 = scalar_lea.vmem %s0, %s261
        %s263 = smul.u32 8, %s14
      $region44: #{stage_module.10} parent=39 // pred_fallthru
        _
      // Predicated region
      $region45: #{stage_module.10} parent=39 // pred_check
        %p264 = pneg %p60
      $region46: #{stage_module.10} parent=39 // pred_check_branch
        %266 = sbr.rel (%p264) target = $region48
      $region47: #{stage_module.10} parent=39 // pred_region
        %s267 = smul.u32 8, %s14
        %p268 = scmp.lt.s32.totalorder %s267, 15
        %s269 = scalar_select %p268, %s267, 15
        %s270 = smul.addr %s269, 8
        %s271 = scalar_lea.vmem %s1, %s270
        %s272 = smul.u32 8, %s14
      $region48: #{stage_module.10} parent=39 // pred_fallthru
        _
    $region40: #{stage_module.10} parent=5 // pred_fallthru
      _
    %p273 = scmp.le.s32.totalorder 1, %s14
    %p274 = scmp.lt.s32.totalorder %s14, 3
    %p275 = pnand %p273, %p274
    %p276 = pneg %p275
    // Predicated region
    $region49: #{stage_module.10} parent=5 // pred_check
      _
    $region50: #{stage_module.10} parent=5 // pred_check_branch
      %278 = sbr.rel (%p275) target = $region52
    $region51: #{stage_module.10} parent=5 // pred_region
      %s279 = ssub.s32 %s14, 1
      %s280 = smul.u32 8, %s19
      %p281 = scmp.lt.s32.totalorder %s280, 15
      %s282 = scalar_select %p281, %s280, 15
      %s283 = smul.addr %s282, 8
      %s284 = scalar_lea.vmem %s0, %s283
      %p285 = pneg %p40
      %p286 = pneg %p37
      %s287 = smul.u32 8, %s19
      %p288 = scmp.lt.s32.totalorder %s287, 15
      %s289 = scalar_select %p288, %s287, 15
      %s290 = smul.addr %s289, 8
      %s291 = scalar_lea.vmem %s1, %s290
      %p292 = pneg %p66
      %p293 = pneg %p63
      %p294 = pneg %p87
      %p295 = pneg %p84
      %p296 = pneg %p108
      %p297 = pneg %p105
      %p298 = pneg %p129
      %p299 = pneg %p126
      %p300 = pneg %p150
      %p301 = pneg %p147
      %p302 = pneg %p171
      %p303 = pneg %p168
      %p304 = pneg %p192
      %p305 = pneg %p189
      %p306 = pneg %p218
      %p307 = pneg %p215
      %s308 = smul.u32 8, %s19
      %p309 = scmp.lt.s32.totalorder %s308, 15
      %s310 = scalar_select %p309, %s308, 15
      %s311 = smul.addr %s310, 8
      %s312 = scalar_lea.vmem %s8, %s311
      %s313 = smul.u32 8, %s19
      %p314 = scmp.lt.s32.totalorder %s313, 15
      %s315 = scalar_select %p314, %s313, 15
      %s316 = smul.addr %s315, 8
      %s317 = scalar_lea.vmem %s0, %s316
      %s318 = smul.u32 8, %s19
      %s319 = smul.u32 8, %s19
      %p320 = scmp.lt.s32.totalorder %s319, 15
      %s321 = scalar_select %p320, %s319, 15
      %s322 = smul.addr %s321, 8
      %s323 = scalar_lea.vmem %s1, %s322
      %s324 = smul.u32 8, %s19
      %s325 = smul.u32 8, %s19
      %p326 = scmp.lt.s32.totalorder %s325, 15
      %s327 = scalar_select %p326, %s325, 15
      %s328 = smul.addr %s327, 8
      %s329 = scalar_lea.vmem %s8, %s328
      %s330 = smul.u32 8, %s19
      %v331 = vld [vmem:[%s317] sm:$0xff]
      %v332 = vld [vmem:[%s317 + $0x8] sm:$0xff]
      %v333 = vld [vmem:[%s317 + $0x10] sm:$0xff]
      %v334 = vld [vmem:[%s317 + $0x18] sm:$0xff]
      %v335 = vld [vmem:[%s317 + $0x20] sm:$0xff]
      %v336 = vld [vmem:[%s317 + $0x28] sm:$0xff]
      %v337 = vld [vmem:[%s317 + $0x30] sm:$0xff]
      %v338 = vld [vmem:[%s317 + $0x38] sm:$0xff]
      %v339 = vld [vmem:[%s323] sm:$0xff]
      %v340 = vld [vmem:[%s323 + $0x8] sm:$0xff]
      %v341 = vld [vmem:[%s323 + $0x10] sm:$0xff]
      %v342 = vld [vmem:[%s323 + $0x18] sm:$0xff]
      %v343 = vld [vmem:[%s323 + $0x20] sm:$0xff]
      %v344 = vld [vmem:[%s323 + $0x28] sm:$0xff]
      %v345 = vld [vmem:[%s323 + $0x30] sm:$0xff]
      %v346 = vld [vmem:[%s323 + $0x38] sm:$0xff]
      %v347 = vadd.f32 %v331, %v339
      %v348 = vadd.f32 %v332, %v340
      %v349 = vadd.f32 %v333, %v341
      %v350 = vadd.f32 %v334, %v342
      %v351 = vadd.f32 %v335, %v343
      %v352 = vadd.f32 %v336, %v344
      %v353 = vadd.f32 %v337, %v345
      %v354 = vadd.f32 %v338, %v346
      %vm355 = vcmask 261120
      %v356 = vsel %vm355, %v347, 0.0
      %357 = vadd.xlane.f32.xlu0 %v356
      %v358 = vpop.xlane.xlu0 %357
      %v359 = vsel %vm355, %v348, 0.0
      %360 = vadd.xlane.f32.xlu0 %v359
      %v361 = vpop.xlane.xlu0 %360
      %v362 = vsel %vm355, %v349, 0.0
      %363 = vadd.xlane.f32.xlu0 %v362
      %v364 = vpop.xlane.xlu0 %363
      %v365 = vsel %vm355, %v350, 0.0
      %366 = vadd.xlane.f32.xlu0 %v365
      %v367 = vpop.xlane.xlu0 %366
      %v368 = vsel %vm355, %v351, 0.0
      %369 = vadd.xlane.f32.xlu0 %v368
      %v370 = vpop.xlane.xlu0 %369
      %v371 = vsel %vm355, %v352, 0.0
      %372 = vadd.xlane.f32.xlu0 %v371
      %v373 = vpop.xlane.xlu0 %372
      %v374 = vsel %vm355, %v353, 0.0
      %375 = vadd.xlane.f32.xlu0 %v374
      %v376 = vpop.xlane.xlu0 %375
      %v377 = vsel %vm355, %v354, 0.0
      %378 = vadd.xlane.f32.xlu0 %v377
      %v379 = vpop.xlane.xlu0 %378
      %v380 = vrcp.pop 32.0
      %v381 = vmul.f32 %v358, %v380
      %v382 = vmul.f32 %v361, %v380
      %v383 = vmul.f32 %v364, %v380
      %v384 = vmul.f32 %v367, %v380
      %v385 = vmul.f32 %v370, %v380
      %v386 = vmul.f32 %v373, %v380
      %v387 = vmul.f32 %v376, %v380
      %v388 = vmul.f32 %v379, %v380
      %v389 = vsub.f32 %v347, %v381
      %v390 = vsub.f32 %v348, %v382
      %v391 = vsub.f32 %v349, %v383
      %v392 = vsub.f32 %v350, %v384
      %v393 = vsub.f32 %v351, %v385
      %v394 = vsub.f32 %v352, %v386
      %v395 = vsub.f32 %v353, %v387
      %v396 = vsub.f32 %v354, %v388
      %v397 = vmul.f32 %v389, %v389
      %v398 = vmul.f32 %v390, %v390
      %v399 = vmul.f32 %v391, %v391
      %v400 = vmul.f32 %v392, %v392
      %v401 = vmul.f32 %v393, %v393
      %v402 = vmul.f32 %v394, %v394
      %v403 = vmul.f32 %v395, %v395
      %v404 = vmul.f32 %v396, %v396
      %v405 = vsel %vm355, %v397, 0.0
      %406 = vadd.xlane.f32.xlu0 %v405
      %v407 = vpop.xlane.xlu0 %406
      %v408 = vsel %vm355, %v398, 0.0
      %409 = vadd.xlane.f32.xlu0 %v408
      %v410 = vpop.xlane.xlu0 %409
      %v411 = vsel %vm355, %v399, 0.0
      %412 = vadd.xlane.f32.xlu0 %v411
      %v413 = vpop.xlane.xlu0 %412
      %v414 = vsel %vm355, %v400, 0.0
      %415 = vadd.xlane.f32.xlu0 %v414
      %v416 = vpop.xlane.xlu0 %415
      %v417 = vsel %vm355, %v401, 0.0
      %418 = vadd.xlane.f32.xlu0 %v417
      %v419 = vpop.xlane.xlu0 %418
      %v420 = vsel %vm355, %v402, 0.0
      %421 = vadd.xlane.f32.xlu0 %v420
      %v422 = vpop.xlane.xlu0 %421
      %v423 = vsel %vm355, %v403, 0.0
      %424 = vadd.xlane.f32.xlu0 %v423
      %v425 = vpop.xlane.xlu0 %424
      %v426 = vsel %vm355, %v404, 0.0
      %427 = vadd.xlane.f32.xlu0 %v426
      %v428 = vpop.xlane.xlu0 %427
      %v429 = vmul.f32 %v407, %v380
      %v430 = vmul.f32 %v410, %v380
      %v431 = vmul.f32 %v413, %v380
      %v432 = vmul.f32 %v416, %v380
      %v433 = vmul.f32 %v419, %v380
      %v434 = vmul.f32 %v422, %v380
      %v435 = vmul.f32 %v425, %v380
      %v436 = vmul.f32 %v428, %v380
      %v437 = vadd.f32 %v429, 1e-05
      %v438 = vadd.f32 %v430, 1e-05
      %v439 = vadd.f32 %v431, 1e-05
      %v440 = vadd.f32 %v432, 1e-05
      %v441 = vadd.f32 %v433, 1e-05
      %v442 = vadd.f32 %v434, 1e-05
      %v443 = vadd.f32 %v435, 1e-05
      %v444 = vadd.f32 %v436, 1e-05
      %v445 = vrsqrt.pop %v437
      %v446 = vrsqrt.pop %v438
      %v447 = vrsqrt.pop %v439
      %v448 = vrsqrt.pop %v440
      %v449 = vrsqrt.pop %v441
      %v450 = vrsqrt.pop %v442
      %v451 = vrsqrt.pop %v443
      %v452 = vrsqrt.pop %v444
      %v453 = vmul.f32 %v389, %v445
      %v454 = vmul.f32 %v390, %v446
      %v455 = vmul.f32 %v391, %v447
      %v456 = vmul.f32 %v392, %v448
      %v457 = vmul.f32 %v393, %v449
      %v458 = vmul.f32 %v394, %v450
      %v459 = vmul.f32 %v395, %v451
      %v460 = vmul.f32 %v396, %v452
      %v461 = vld [vmem:[%s2] sm:$0x1]
      %v463 = vlaneseq
      %v464 = vshrl.u32 %v463, 7
      %v465 = vsub.s32 0, %v464
      %v466 = vrot.slane %v461, %v465
      %v468 = vmul.f32 %v453, %v466
      %v469 = vmul.f32 %v454, %v466
      %v470 = vmul.f32 %v455, %v466
      %v471 = vmul.f32 %v456, %v466
      %v472 = vmul.f32 %v457, %v466
      %v473 = vmul.f32 %v458, %v466
      %v474 = vmul.f32 %v459, %v466
      %v475 = vmul.f32 %v460, %v466
      %v476 = vld [vmem:[%s3] sm:$0x1]
      %v478 = vlaneseq
      %v479 = vshrl.u32 %v478, 7
      %v480 = vsub.s32 0, %v479
      %v481 = vrot.slane %v476, %v480
      %v483 = vadd.f32 %v468, %v481
      %v484 = vadd.f32 %v469, %v481
      %v485 = vadd.f32 %v470, %v481
      %v486 = vadd.f32 %v471, %v481
      %v487 = vadd.f32 %v472, %v481
      %v488 = vadd.f32 %v473, %v481
      %v489 = vadd.f32 %v474, %v481
      %v490 = vadd.f32 %v475, %v481
      %v491 = vld [vmem:[%s4] sm:$0xff]
      %v492 = vld [vmem:[%s4 + $0x8] sm:$0xff]
      %v493 = vld [vmem:[%s4 + $0x10] sm:$0xff]
      %v494 = vld [vmem:[%s4 + $0x18] sm:$0xff]
      %v495 = vld [vmem:[%s5] sm:$0x1]
      %v497 = vlaneseq
      %v498 = vshrl.u32 %v497, 7
      %v499 = vsub.s32 0, %v498
      %v500 = vrot.slane %v495, %v499
      %v503 = vsel %vm355, %v483, 0
      %v506 = vsel %vm355, %v484, 0
      %v509 = vsel %vm355, %v485, 0
      %v512 = vsel %vm355, %v486, 0
      %v515 = vsel %vm355, %v487, 0
      %v518 = vsel %vm355, %v488, 0
      %v521 = vsel %vm355, %v489, 0
      %v524 = vsel %vm355, %v490, 0
      %526 = vmatprep.subr.mxu0 0.0
      %527 = vmatpush1.msra.mxu0 %v491
      %528 = vmatprep.subr.mxu0 0.0
      %529 = vmatpush1.msra.mxu0 %v492
      %530 = vmatprep.subr.mxu0 0.0
      %531 = vmatpush1.msra.mxu0 %v493
      %532 = vmatprep.subr.mxu0 0.0
      %533 = vmatpush1.msra.mxu0 %v494
      %534 = vmatprep.subr.mxu0 0.0
      %535 = vmatpush1.msra.mxu0 0.0
      %536 = vmatprep.subr.mxu0 0.0
      %537 = vmatpush1.msra.mxu0 0.0
      %538 = vmatprep.subr.mxu0 0.0
      %539 = vmatpush1.msra.mxu0 0.0
      %540 = vmatprep.subr.mxu0 0.0
      %541 = vmatpush1.msra.mxu0 0.0
      %542 = vmatprep.subr.mxu0 0.0
      %543 = vmatpush1.msra.mxu0 0.0
      %544 = vmatprep.subr.mxu0 0.0
      %545 = vmatpush1.msra.mxu0 0.0
      %546 = vmatprep.subr.mxu0 0.0
      %547 = vmatpush1.msra.mxu0 0.0
      %548 = vmatprep.subr.mxu0 0.0
      %549 = vmatpush1.msra.mxu0 0.0
      %550 = vmatprep.subr.mxu0 0.0
      %551 = vmatpush1.msra.mxu0 0.0
      %552 = vmatprep.subr.mxu0 0.0
      %553 = vmatpush1.msra.mxu0 0.0
      %554 = vmatprep.subr.mxu0 0.0
      %555 = vmatpush1.msra.mxu0 0.0
      %556 = vmatprep.subr.mxu0 0.0
      %557 = vmatpush1.msra.mxu0 0.0
      %558 = vmatprep.subr.mxu0 0.0
      %559 = vmatpush1.msra.mxu0 0.0
      %560 = vmatprep.subr.mxu0 0.0
      %561 = vmatpush1.msra.mxu0 0.0
      %562 = vmatprep.subr.mxu0 0.0
      %563 = vmatpush1.msra.mxu0 0.0
      %564 = vmatprep.subr.mxu0 0.0
      %565 = vmatpush1.msra.mxu0 0.0
      %566 = vmatprep.subr.mxu0 0.0
      %567 = vmatpush1.msra.mxu0 0.0
      %568 = vmatprep.subr.mxu0 0.0
      %569 = vmatpush1.msra.mxu0 0.0
      %570 = vmatprep.subr.mxu0 0.0
      %571 = vmatpush1.msra.mxu0 0.0
      %572 = vmatprep.subr.mxu0 0.0
      %573 = vmatpush1.msra.mxu0 0.0
      %574 = vmatprep.subr.mxu0 0.0
      %575 = vmatpush1.msra.mxu0 0.0
      %576 = vmatprep.subr.mxu0 0.0
      %577 = vmatpush1.msra.mxu0 0.0
      %578 = vmatprep.subr.mxu0 0.0
      %579 = vmatpush1.msra.mxu0 0.0
      %580 = vmatprep.subr.mxu0 0.0
      %581 = vmatpush1.msra.mxu0 0.0
      %582 = vmatprep.subr.mxu0 0.0
      %583 = vmatpush1.msra.mxu0 0.0
      %584 = vmatprep.subr.mxu0 0.0
      %585 = vmatpush1.msra.mxu0 0.0
      %586 = vmatprep.subr.mxu0 0.0
      %587 = vmatpush1.msra.mxu0 0.0
      %588 = vmatprep.subr.mxu0 0.0
      %589 = vmatpush1.msra.mxu0 0.0
      %590 = vmatprep.mubr.f32.mxu0 0.0
      %591 = vmatmul.mubr.f32.gmra.mrb[0].mxu0 %v503
      %v592 = vpop.f32.mrb[0].mxu0
      %v593 = vadd.f32 %v500, %v592
      %v594 = vpop.f32.mrb[0].mxu0
      %595 = vmatprep.mubr.f32.mxu0 0.0
      %596 = vmatmul.mubr.f32.gmra.mrb[0].mxu0 %v506
      %v597 = vpop.f32.mrb[0].mxu0
      %v598 = vadd.f32 %v500, %v597
      %v599 = vpop.f32.mrb[0].mxu0
      %600 = vmatprep.mubr.f32.mxu0 0.0
      %601 = vmatmul.mubr.f32.gmra.mrb[0].mxu0 %v509
      %v602 = vpop.f32.mrb[0].mxu0
      %v603 = vadd.f32 %v500, %v602
      %v604 = vpop.f32.mrb[0].mxu0
      %605 = vmatprep.mubr.f32.mxu0 0.0
      %606 = vmatmul.mubr.f32.gmra.mrb[0].mxu0 %v512
      %v607 = vpop.f32.mrb[0].mxu0
      %v608 = vadd.f32 %v500, %v607
      %v609 = vpop.f32.mrb[0].mxu0
      %610 = vmatprep.mubr.f32.mxu0 0.0
      %611 = vmatmul.mubr.f32.gmra.mrb[0].mxu0 %v515
      %v612 = vpop.f32.mrb[0].mxu0
      %v613 = vadd.f32 %v500, %v612
      %v614 = vpop.f32.mrb[0].mxu0
      %615 = vmatprep.mubr.f32.mxu0 0.0
      %616 = vmatmul.mubr.f32.gmra.mrb[0].mxu0 %v518
      %v617 = vpop.f32.mrb[0].mxu0
      %v618 = vadd.f32 %v500, %v617
      %v619 = vpop.f32.mrb[0].mxu0
      %620 = vmatprep.mubr.f32.mxu0 0.0
      %621 = vmatmul.mubr.f32.gmra.mrb[0].mxu0 %v521
      %v622 = vpop.f32.mrb[0].mxu0
      %v623 = vadd.f32 %v500, %v622
      %v624 = vpop.f32.mrb[0].mxu0
      %625 = vmatprep.mubr.f32.mxu0 0.0
      %626 = vmatmul.mubr.f32.gmra.mrb[0].mxu0 %v524
      %v627 = vpop.f32.mrb[0].mxu0
      %v628 = vadd.f32 %v500, %v627
      %v629 = vpop.f32.mrb[0].mxu0
      %630 = vdwg.mxu0
      %v631 = vmul.f32 %v593, 0.5
      %v632 = vmul.f32 %v598, 0.5
      %v633 = vmul.f32 %v603, 0.5
      %v634 = vmul.f32 %v608, 0.5
      %v635 = vmul.f32 %v613, 0.5
      %v636 = vmul.f32 %v618, 0.5
      %v637 = vmul.f32 %v623, 0.5
      %v638 = vmul.f32 %v628, 0.5
      %v639 = vmul.f32 %v593, 0.70710677
      %v640 = vmul.f32 %v598, 0.70710677
      %v641 = vmul.f32 %v603, 0.70710677
      %v642 = vmul.f32 %v608, 0.70710677
      %v643 = vmul.f32 %v613, 0.70710677
      %v644 = vmul.f32 %v618, 0.70710677
      %v645 = vmul.f32 %v623, 0.70710677
      %v646 = vmul.f32 %v628, 0.70710677
      %vm647 = vcmp.ge.f32.partialorder %v639, 0.0
      %vm648 = vcmp.ge.f32.partialorder %v640, 0.0
      %vm649 = vcmp.ge.f32.partialorder %v641, 0.0
      %vm650 = vcmp.ge.f32.partialorder %v642, 0.0
      %vm651 = vcmp.ge.f32.partialorder %v643, 0.0
      %vm652 = vcmp.ge.f32.partialorder %v644, 0.0
      %vm653 = vcmp.ge.f32.partialorder %v645, 0.0
      %vm654 = vcmp.ge.f32.partialorder %v646, 0.0
      %v655 = vsel %vm647, 1.0, -1.0
      %v656 = vsel %vm648, 1.0, -1.0
      %v657 = vsel %vm649, 1.0, -1.0
      %v658 = vsel %vm650, 1.0, -1.0
      %v659 = vsel %vm651, 1.0, -1.0
      %v660 = vsel %vm652, 1.0, -1.0
      %v661 = vsel %vm653, 1.0, -1.0
      %v662 = vsel %vm654, 1.0, -1.0
      %v663 = vand.u32 2147483647, %v639
      %v664 = vand.u32 2147483647, %v640
      %v665 = vand.u32 2147483647, %v641
      %v666 = vand.u32 2147483647, %v642
      %v667 = vand.u32 2147483647, %v643
      %v668 = vand.u32 2147483647, %v644
      %v669 = vand.u32 2147483647, %v645
      %v670 = vand.u32 2147483647, %v646
      %v671 = vmul.f32 %v663, 0.3275911
      %v672 = vmul.f32 %v664, 0.3275911
      %v673 = vmul.f32 %v665, 0.3275911
      %v674 = vmul.f32 %v666, 0.3275911
      %v675 = vmul.f32 %v667, 0.3275911
      %v676 = vmul.f32 %v668, 0.3275911
      %v677 = vmul.f32 %v669, 0.3275911
      %v678 = vmul.f32 %v670, 0.3275911
      %v679 = vadd.f32 %v671, 1.0
      %v680 = vadd.f32 %v672, 1.0
      %v681 = vadd.f32 %v673, 1.0
      %v682 = vadd.f32 %v674, 1.0
      %v683 = vadd.f32 %v675, 1.0
      %v684 = vadd.f32 %v676, 1.0
      %v685 = vadd.f32 %v677, 1.0
      %v686 = vadd.f32 %v678, 1.0
      %v687 = vrcp.pop %v679
      %v688 = vmul.f32 1.0, %v687
      %v689 = vrcp.pop %v680
      %v690 = vmul.f32 1.0, %v689
      %v691 = vrcp.pop %v681
      %v692 = vmul.f32 1.0, %v691
      %v693 = vrcp.pop %v682
      %v694 = vmul.f32 1.0, %v693
      %v695 = vrcp.pop %v683
      %v696 = vmul.f32 1.0, %v695
      %v697 = vrcp.pop %v684
      %v698 = vmul.f32 1.0, %v697
      %v699 = vrcp.pop %v685
      %v700 = vmul.f32 1.0, %v699
      %v701 = vrcp.pop %v686
      %v702 = vmul.f32 1.0, %v701
      %v703 = vmul.f32 %v688, 1.0614054
      %v704 = vmul.f32 %v690, 1.0614054
      %v705 = vmul.f32 %v692, 1.0614054
      %v706 = vmul.f32 %v694, 1.0614054
      %v707 = vmul.f32 %v696, 1.0614054
      %v708 = vmul.f32 %v698, 1.0614054
      %v709 = vmul.f32 %v700, 1.0614054
      %v710 = vmul.f32 %v702, 1.0614054
      %v711 = vadd.f32 %v703, -1.4531521
      %v712 = vadd.f32 %v704, -1.4531521
      %v713 = vadd.f32 %v705, -1.4531521
      %v714 = vadd.f32 %v706, -1.4531521
      %v715 = vadd.f32 %v707, -1.4531521
      %v716 = vadd.f32 %v708, -1.4531521
      %v717 = vadd.f32 %v709, -1.4531521
      %v718 = vadd.f32 %v710, -1.4531521
      %v719 = vmul.f32 %v711, %v688
      %v720 = vmul.f32 %v712, %v690
      %v721 = vmul.f32 %v713, %v692
      %v722 = vmul.f32 %v714, %v694
      %v723 = vmul.f32 %v715, %v696
      %v724 = vmul.f32 %v716, %v698
      %v725 = vmul.f32 %v717, %v700
      %v726 = vmul.f32 %v718, %v702
      %v727 = vadd.f32 %v719, 1.4214138
      %v728 = vadd.f32 %v720, 1.4214138
      %v729 = vadd.f32 %v721, 1.4214138
      %v730 = vadd.f32 %v722, 1.4214138
      %v731 = vadd.f32 %v723, 1.4214138
      %v732 = vadd.f32 %v724, 1.4214138
      %v733 = vadd.f32 %v725, 1.4214138
      %v734 = vadd.f32 %v726, 1.4214138
      %v735 = vmul.f32 %v727, %v688
      %v736 = vmul.f32 %v728, %v690
      %v737 = vmul.f32 %v729, %v692
      %v738 = vmul.f32 %v730, %v694
      %v739 = vmul.f32 %v731, %v696
      %v740 = vmul.f32 %v732, %v698
      %v741 = vmul.f32 %v733, %v700
      %v742 = vmul.f32 %v734, %v702
      %v743 = vadd.f32 %v735, -0.28449672
      %v744 = vadd.f32 %v736, -0.28449672
      %v745 = vadd.f32 %v737, -0.28449672
      %v746 = vadd.f32 %v738, -0.28449672
      %v747 = vadd.f32 %v739, -0.28449672
      %v748 = vadd.f32 %v740, -0.28449672
      %v749 = vadd.f32 %v741, -0.28449672
      %v750 = vadd.f32 %v742, -0.28449672
      %v751 = vmul.f32 %v743, %v688
      %v752 = vmul.f32 %v744, %v690
      %v753 = vmul.f32 %v745, %v692
      %v754 = vmul.f32 %v746, %v694
      %v755 = vmul.f32 %v747, %v696
      %v756 = vmul.f32 %v748, %v698
      %v757 = vmul.f32 %v749, %v700
      %v758 = vmul.f32 %v750, %v702
      %v759 = vadd.f32 %v751, 0.2548296
      %v760 = vadd.f32 %v752, 0.2548296
      %v761 = vadd.f32 %v753, 0.2548296
      %v762 = vadd.f32 %v754, 0.2548296
      %v763 = vadd.f32 %v755, 0.2548296
      %v764 = vadd.f32 %v756, 0.2548296
      %v765 = vadd.f32 %v757, 0.2548296
      %v766 = vadd.f32 %v758, 0.2548296
      %v767 = vmul.f32 %v759, %v688
      %v768 = vmul.f32 %v760, %v690
      %v769 = vmul.f32 %v761, %v692
      %v770 = vmul.f32 %v762, %v694
      %v771 = vmul.f32 %v763, %v696
      %v772 = vmul.f32 %v764, %v698
      %v773 = vmul.f32 %v765, %v700
      %v774 = vmul.f32 %v766, %v702
      %v775 = vsub.f32 0.0, %v663
      %v776 = vsub.f32 0.0, %v664
      %v777 = vsub.f32 0.0, %v665
      %v778 = vsub.f32 0.0, %v666
      %v779 = vsub.f32 0.0, %v667
      %v780 = vsub.f32 0.0, %v668
      %v781 = vsub.f32 0.0, %v669
      %v782 = vsub.f32 0.0, %v670
      %v783 = vmul.f32 %v775, %v663
      %v784 = vmul.f32 %v776, %v664
      %v785 = vmul.f32 %v777, %v665
      %v786 = vmul.f32 %v778, %v666
      %v787 = vmul.f32 %v779, %v667
      %v788 = vmul.f32 %v780, %v668
      %v789 = vmul.f32 %v781, %v669
      %v790 = vmul.f32 %v782, %v670
      %v791 = vmul.f32 %v783, 1.442695
      %v792 = vpow.pop %v791
      %v793 = vmul.f32 %v784, 1.442695
      %v794 = vpow.pop %v793
      %v795 = vmul.f32 %v785, 1.442695
      %v796 = vpow.pop %v795
      %v797 = vmul.f32 %v786, 1.442695
      %v798 = vpow.pop %v797
      %v799 = vmul.f32 %v787, 1.442695
      %v800 = vpow.pop %v799
      %v801 = vmul.f32 %v788, 1.442695
      %v802 = vpow.pop %v801
      %v803 = vmul.f32 %v789, 1.442695
      %v804 = vpow.pop %v803
      %v805 = vmul.f32 %v790, 1.442695
      %v806 = vpow.pop %v805
      %v807 = vmul.f32 %v767, %v792
      %v808 = vmul.f32 %v768, %v794
      %v809 = vmul.f32 %v769, %v796
      %v810 = vmul.f32 %v770, %v798
      %v811 = vmul.f32 %v771, %v800
      %v812 = vmul.f32 %v772, %v802
      %v813 = vmul.f32 %v773, %v804
      %v814 = vmul.f32 %v774, %v806
      %v815 = vsub.f32 1.0, %v807
      %v816 = vsub.f32 1.0, %v808
      %v817 = vsub.f32 1.0, %v809
      %v818 = vsub.f32 1.0, %v810
      %v819 = vsub.f32 1.0, %v811
      %v820 = vsub.f32 1.0, %v812
      %v821 = vsub.f32 1.0, %v813
      %v822 = vsub.f32 1.0, %v814
      %v823 = vmul.f32 %v655, %v815
      %v824 = vmul.f32 %v656, %v816
      %v825 = vmul.f32 %v657, %v817
      %v826 = vmul.f32 %v658, %v818
      %v827 = vmul.f32 %v659, %v819
      %v828 = vmul.f32 %v660, %v820
      %v829 = vmul.f32 %v661, %v821
      %v830 = vmul.f32 %v662, %v822
      %v831 = vadd.f32 %v823, 1.0
      %v832 = vadd.f32 %v824, 1.0
      %v833 = vadd.f32 %v825, 1.0
      %v834 = vadd.f32 %v826, 1.0
      %v835 = vadd.f32 %v827, 1.0
      %v836 = vadd.f32 %v828, 1.0
      %v837 = vadd.f32 %v829, 1.0
      %v838 = vadd.f32 %v830, 1.0
      %v839 = vmul.f32 %v631, %v831
      %v840 = vmul.f32 %v632, %v832
      %v841 = vmul.f32 %v633, %v833
      %v842 = vmul.f32 %v634, %v834
      %v843 = vmul.f32 %v635, %v835
      %v844 = vmul.f32 %v636, %v836
      %v845 = vmul.f32 %v637, %v837
      %v846 = vmul.f32 %v638, %v838
      %v847 = vld [vmem:[%s6] sm:$0xff]
      %v848 = vld [vmem:[%s6 + $0x8] sm:$0xff]
      %v849 = vld [vmem:[%s6 + $0x10] sm:$0xff]
      %v850 = vld [vmem:[%s6 + $0x18] sm:$0xff]
      %v851 = vld [vmem:[%s6 + $0x20] sm:$0xff]
      %v852 = vld [vmem:[%s6 + $0x28] sm:$0xff]
      %v853 = vld [vmem:[%s6 + $0x30] sm:$0xff]
      %v854 = vld [vmem:[%s6 + $0x38] sm:$0xff]
      %v855 = vld [vmem:[%s6 + $0x40] sm:$0xff]
      %v856 = vld [vmem:[%s6 + $0x48] sm:$0xff]
      %v857 = vld [vmem:[%s6 + $0x50] sm:$0xff]
      %v858 = vld [vmem:[%s6 + $0x58] sm:$0xff]
      %v859 = vld [vmem:[%s6 + $0x60] sm:$0xff]
      %v860 = vld [vmem:[%s6 + $0x68] sm:$0xff]
      %v861 = vld [vmem:[%s6 + $0x70] sm:$0xff]
      %v862 = vld [vmem:[%s6 + $0x78] sm:$0xff]
      %v863 = vld [vmem:[%s7] sm:$0x1]
      %v865 = vlaneseq
      %v866 = vshrl.u32 %v865, 7
      %v867 = vsub.s32 0, %v866
      %v868 = vrot.slane %v863, %v867
      %870 = vmatprep.subr.mxu0 0.0
      %871 = vmatpush1.msra.mxu0 %v847
      %872 = vmatprep.subr.mxu0 0.0
      %873 = vmatpush1.msra.mxu0 %v848
      %874 = vmatprep.subr.mxu0 0.0
      %875 = vmatpush1.msra.mxu0 %v849
      %876 = vmatprep.subr.mxu0 0.0
      %877 = vmatpush1.msra.mxu0 %v850
      %878 = vmatprep.subr.mxu0 0.0
      %879 = vmatpush1.msra.mxu0 %v851
      %880 = vmatprep.subr.mxu0 0.0
      %881 = vmatpush1.msra.mxu0 %v852
      %882 = vmatprep.subr.mxu0 0.0
      %883 = vmatpush1.msra.mxu0 %v853
      %884 = vmatprep.subr.mxu0 0.0
      %885 = vmatpush1.msra.mxu0 %v854
      %886 = vmatprep.subr.mxu0 0.0
      %887 = vmatpush1.msra.mxu0 %v855
      %888 = vmatprep.subr.mxu0 0.0
      %889 = vmatpush1.msra.mxu0 %v856
      %890 = vmatprep.subr.mxu0 0.0
      %891 = vmatpush1.msra.mxu0 %v857
      %892 = vmatprep.subr.mxu0 0.0
      %893 = vmatpush1.msra.mxu0 %v858
      %894 = vmatprep.subr.mxu0 0.0
      %895 = vmatpush1.msra.mxu0 %v859
      %896 = vmatprep.subr.mxu0 0.0
      %897 = vmatpush1.msra.mxu0 %v860
      %898 = vmatprep.subr.mxu0 0.0
      %899 = vmatpush1.msra.mxu0 %v861
      %900 = vmatprep.subr.mxu0 0.0
      %901 = vmatpush1.msra.mxu0 %v862
      %902 = vmatprep.subr.mxu0 0.0
      %903 = vmatpush1.msra.mxu0 0.0
      %904 = vmatprep.subr.mxu0 0.0
      %905 = vmatpush1.msra.mxu0 0.0
      %906 = vmatprep.subr.mxu0 0.0
      %907 = vmatpush1.msra.mxu0 0.0
      %908 = vmatprep.subr.mxu0 0.0
      %909 = vmatpush1.msra.mxu0 0.0
      %910 = vmatprep.subr.mxu0 0.0
      %911 = vmatpush1.msra.mxu0 0.0
      %912 = vmatprep.subr.mxu0 0.0
      %913 = vmatpush1.msra.mxu0 0.0
      %914 = vmatprep.subr.mxu0 0.0
      %915 = vmatpush1.msra.mxu0 0.0
      %916 = vmatprep.subr.mxu0 0.0
      %917 = vmatpush1.msra.mxu0 0.0
      %918 = vmatprep.subr.mxu0 0.0
      %919 = vmatpush1.msra.mxu0 0.0
      %920 = vmatprep.subr.mxu0 0.0
      %921 = vmatpush1.msra.mxu0 0.0
      %922 = vmatprep.subr.mxu0 0.0
      %923 = vmatpush1.msra.mxu0 0.0
      %924 = vmatprep.subr.mxu0 0.0
      %925 = vmatpush1.msra.mxu0 0.0
      %926 = vmatprep.subr.mxu0 0.0
      %927 = vmatpush1.msra.mxu0 0.0
      %928 = vmatprep.subr.mxu0 0.0
      %929 = vmatpush1.msra.mxu0 0.0
      %930 = vmatprep.subr.mxu0 0.0
      %931 = vmatpush1.msra.mxu0 0.0
      %932 = vmatprep.subr.mxu0 0.0
      %933 = vmatpush1.msra.mxu0 0.0
      %934 = vmatprep.mubr.f32.mxu0 0.0
      %935 = vmatmul.mubr.f32.gmra.mrb[0].mxu0 %v839
      %v936 = vpop.f32.mrb[0].mxu0
      %v937 = vadd.f32 %v868, %v936
      %v938 = vpop.f32.mrb[0].mxu0
      %939 = vmatprep.mubr.f32.mxu0 0.0
      %940 = vmatmul.mubr.f32.gmra.mrb[0].mxu0 %v840
      %v941 = vpop.f32.mrb[0].mxu0
      %v942 = vadd.f32 %v868, %v941
      %v943 = vpop.f32.mrb[0].mxu0
      %944 = vmatprep.mubr.f32.mxu0 0.0
      %945 = vmatmul.mubr.f32.gmra.mrb[0].mxu0 %v841
      %v946 = vpop.f32.mrb[0].mxu0
      %v947 = vadd.f32 %v868, %v946
      %v948 = vpop.f32.mrb[0].mxu0
      %949 = vmatprep.mubr.f32.mxu0 0.0
      %950 = vmatmul.mubr.f32.gmra.mrb[0].mxu0 %v842
      %v951 = vpop.f32.mrb[0].mxu0
      %v952 = vadd.f32 %v868, %v951
      %v953 = vpop.f32.mrb[0].mxu0
      %954 = vmatprep.mubr.f32.mxu0 0.0
      %955 = vmatmul.mubr.f32.gmra.mrb[0].mxu0 %v843
      %v956 = vpop.f32.mrb[0].mxu0
      %v957 = vadd.f32 %v868, %v956
      %v958 = vpop.f32.mrb[0].mxu0
      %959 = vmatprep.mubr.f32.mxu0 0.0
      %960 = vmatmul.mubr.f32.gmra.mrb[0].mxu0 %v844
      %v961 = vpop.f32.mrb[0].mxu0
      %v962 = vadd.f32 %v868, %v961
      %v963 = vpop.f32.mrb[0].mxu0
      %964 = vmatprep.mubr.f32.mxu0 0.0
      %965 = vmatmul.mubr.f32.gmra.mrb[0].mxu0 %v845
      %v966 = vpop.f32.mrb[0].mxu0
      %v967 = vadd.f32 %v868, %v966
      %v968 = vpop.f32.mrb[0].mxu0
      %969 = vmatprep.mubr.f32.mxu0 0.0
      %970 = vmatmul.mubr.f32.gmra.mrb[0].mxu0 %v846
      %v971 = vpop.f32.mrb[0].mxu0
      %v972 = vadd.f32 %v868, %v971
      %v973 = vpop.f32.mrb[0].mxu0
      %974 = vdwg.mxu0
      %v975 = vadd.f32 %v347, %v937
      %v976 = vadd.f32 %v348, %v942
      %v977 = vadd.f32 %v349, %v947
      %v978 = vadd.f32 %v350, %v952
      %v979 = vadd.f32 %v351, %v957
      %v980 = vadd.f32 %v352, %v962
      %v981 = vadd.f32 %v353, %v967
      %v982 = vadd.f32 %v354, %v972
      %983 = vst.msk [vmem:[%s329] sm:$0xff] %vm355, %v975
      %984 = vst.msk [vmem:[%s329 + $0x8] sm:$0xff] %vm355, %v976
      %985 = vst.msk [vmem:[%s329 + $0x10] sm:$0xff] %vm355, %v977
      %986 = vst.msk [vmem:[%s329 + $0x18] sm:$0xff] %vm355, %v978
      %987 = vst.msk [vmem:[%s329 + $0x20] sm:$0xff] %vm355, %v979
      %988 = vst.msk [vmem:[%s329 + $0x28] sm:$0xff] %vm355, %v980
      %989 = vst.msk [vmem:[%s329 + $0x30] sm:$0xff] %vm355, %v981
      %990 = vst.msk [vmem:[%s329 + $0x38] sm:$0xff] %vm355, %v982
      %s991 = smul.u32 8, %s19
      %p992 = scmp.lt.s32.totalorder %s991, 15
      %s993 = scalar_select %p992, %s991, 15
      %s994 = smul.addr %s993, 8
      %s995 = scalar_lea.vmem %s8, %s994
      // Predicated region
      $region53: #{stage_module.10} parent=51 // pred_check
        %p996 = pneg %p215
      $region54: #{stage_module.10} parent=51 // pred_check_branch
        %998 = sbr.rel (%p996) target = $region56
      $region55: #{stage_module.10} parent=51 // pred_region
        %s999 = smul.u32 8, %s19
      $region56: #{stage_module.10} parent=51 // pred_fallthru
        _
    $region52: #{stage_module.10} parent=5 // pred_fallthru
      _
    %p1000 = scmp.le.s32.totalorder 2, %s14
    // Predicated region
    $region57: #{stage_module.10} parent=5 // pred_check
      %p1001 = pneg %p1000
    $region58: #{stage_module.10} parent=5 // pred_check_branch
      %1003 = sbr.rel (%p1001) target = $region60
    $region59: #{stage_module.10} parent=5 // pred_region
      %s1004 = ssub.s32 %s14, 2
      // Predicated region
      $region61: #{stage_module.10} parent=59 // pred_check
        %p1005 = pneg %p221
      $region62: #{stage_module.10} parent=59 // pred_check_branch
        %1007 = sbr.rel (%p1005) target = $region64
      $region63: #{stage_module.10} parent=59 // pred_region
        %s1008 = smul.u32 8, %s20
        %p1009 = scmp.lt.s32.totalorder %s1008, 15
        %s1010 = scalar_select %p1009, %s1008, 15
        %s1011 = smul.addr %s1010, 8
        %s1012 = scalar_lea.vmem %s8, %s1011
      $region64: #{stage_module.10} parent=59 // pred_fallthru
        _
    $region60: #{stage_module.10} parent=5 // pred_fallthru
      _
  $region6: #{stage_module.10} parent=0 // loop_footer
    %s18 = sadd.s32 1, %s14
  $region7: #{stage_module.10} parent=0 // loop_footer_branch
    %13 = sbr.rel target = $region3
  $region8: #{stage_module.10} parent=0 // loop_exit
    _

// kernel: stage_module.13
$region0: #{stage_module.13}
  #allocation0 [shape = 'u32[]', space=smem, size = 0x4, offset = 0x4, fixed_abs, tag = 'smem constant byte address 0x4 - core index']
  #allocation1 [shape = 'u32[144,128]{1,0:T(1,128)}', space=vmem, size = 0x12000, scoped, tag = 'internal scratch']
  %s0 = inlined_call_operand.vmem [shape: f32[128,32], index: 0, kind: input, shape index: {}]
  %s1 = inlined_call_operand.vmem [shape: f32[128,32], index: 1, kind: input, shape index: {}]
  %s2 = inlined_call_operand.vmem [shape: f32[1,32], index: 2, kind: input, shape index: {}]
  %s3 = inlined_call_operand.vmem [shape: f32[1,32], index: 3, kind: input, shape index: {}]
  %s4 = inlined_call_operand.vmem [shape: f32[32,128], index: 4, kind: input, shape index: {}]
  %s5 = inlined_call_operand.vmem [shape: f32[1,128], index: 5, kind: input, shape index: {}]
  %s6 = inlined_call_operand.vmem [shape: f32[128,32], index: 6, kind: input, shape index: {}]
  %s7 = inlined_call_operand.vmem [shape: f32[1,32], index: 7, kind: input, shape index: {}]
  %s8 = inlined_call_operand.hbm [shape: f32[128,32], index: 8, kind: output, shape index: {}]
  %s9 = sld [smem:[#allocation0]]
  $region65: #{stage_module.13} parent=0
    _
  %s11 = ssub.s32 1, %s9
  %s12 = scalar_select 0, %s11, %s9
  $region1: #{stage_module.13} parent=0
    #allocation2 [shape = 'u8[65536]{0}', space=vmem, size = 0x10000, scoped, tag = 'output window, operand 0']
    #allocation3 [shape = 's32[2]{0}', space=sflag, size = 0x8, scoped, tag = 'scoped memory for stage_module.13']
    %13 = vsyncpa [#allocation3], 0
    %s14 = scalar_lea.sflag [#allocation3], 1
    %15 = vsyncpa %s14, 0
    loop: start=0, step=1, limit=4
    $region2: #{stage_module.13} parent=1 // loop_pre_header
      _
    $region3: #{stage_module.13} parent=1 // loop_header
      %s17 = sphi 0, %s21
      %p18 = scmp.ge.s32.totalorder %s17, 4
      %s27 = sphi 0, %s29
      %s30 = sphi 0, %s27
      %s31 = sphi 0, %s30
      %s47 = sphi 0, %s31
      %s53 = sphi 0, %s55
      %s56 = sphi 0, %s53
      %s57 = sphi 0, %s56
      %s73 = sphi 0, %s57
      %s77 = sphi 0, %s77
      %s79 = sphi 0, %s77
      %s80 = sphi 0, %s79
      %s94 = sphi 0, %s80
      %s98 = sphi 0, %s98
      %s100 = sphi 0, %s98
      %s101 = sphi 0, %s100
      %s115 = sphi 0, %s101
      %s119 = sphi 0, %s119
      %s121 = sphi 0, %s119
      %s122 = sphi 0, %s121
      %s136 = sphi 0, %s122
      %s140 = sphi 0, %s140
      %s142 = sphi 0, %s140
      %s143 = sphi 0, %s142
      %s157 = sphi 0, %s143
      %s161 = sphi 0, %s161
      %s163 = sphi 0, %s161
      %s164 = sphi 0, %s163
      %s178 = sphi 0, %s164
      %s182 = sphi 0, %s182
      %s184 = sphi 0, %s182
      %s185 = sphi 0, %s184
      %s199 = sphi 0, %s185
      %s205 = sphi 0, %s207
      %s208 = sphi 0, %s205
      %s209 = sphi 0, %s208
      %s225 = sphi 0, %s209
    $region4: #{stage_module.13} parent=1 // loop_header_branch
      %20 = sbr.rel (%p18) target = $region8
    $region5: #{stage_module.13} parent=1 // loop_body
      %s22 = ssub.s32 %s17, 1
      %s23 = ssub.s32 %s17, 2
      %s24 = sadd.s32 %s17, 1
      %s25 = ssub.s32 %s17, %s24
      %p26 = scmp.eq.s32.totalorder %s25, 0
      %s28 = sadd.s32 %s27, 1
      %s29 = scalar_select %p26, %s27, %s28
      %p32 = pneg %p26
      %p33 = scmp.eq.s32.totalorder %s17, 1
      %p34 = por %p32, %p33
      %p35 = scmp.ne.s32.totalorder %s27, %s30
      %p36 = scmp.eq.s32.totalorder %s17, 0
      %p37 = por %p35, %p36
      %p38 = scmp.ne.s32.totalorder %s27, %s30
      %p39 = scmp.eq.s32.totalorder %s22, 1
      %p40 = por %p38, %p39
      %p41 = scmp.ne.s32.totalorder %s30, %s31
      %p42 = scmp.eq.s32.totalorder %s22, 0
      %p43 = por %p41, %p42
      %p44 = scmp.ne.s32.totalorder %s30, %s31
      %p45 = scmp.eq.s32.totalorder %s23, 1
      %p46 = por %p44, %p45
      %p48 = scmp.ne.s32.totalorder %s31, %s47
      %p49 = scmp.eq.s32.totalorder %s23, 0
      %p50 = por %p48, %p49
      %s51 = ssub.s32 %s17, %s24
      %p52 = scmp.eq.s32.totalorder %s51, 0
      %s54 = sadd.s32 %s53, 1
      %s55 = scalar_select %p52, %s53, %s54
      %p58 = pneg %p52
      %p59 = scmp.eq.s32.totalorder %s17, 1
      %p60 = por %p58, %p59
      %p61 = scmp.ne.s32.totalorder %s53, %s56
      %p62 = scmp.eq.s32.totalorder %s17, 0
      %p63 = por %p61, %p62
      %p64 = scmp.ne.s32.totalorder %s53, %s56
      %p65 = scmp.eq.s32.totalorder %s22, 1
      %p66 = por %p64, %p65
      %p67 = scmp.ne.s32.totalorder %s56, %s57
      %p68 = scmp.eq.s32.totalorder %s22, 0
      %p69 = por %p67, %p68
      %p70 = scmp.ne.s32.totalorder %s56, %s57
      %p71 = scmp.eq.s32.totalorder %s23, 1
      %p72 = por %p70, %p71
      %p74 = scmp.ne.s32.totalorder %s57, %s73
      %p75 = scmp.eq.s32.totalorder %s23, 0
      %p76 = por %p74, %p75
      %s78 = sadd.s32 %s77, 1
      %p81 = scmp.eq.s32.totalorder %s17, 1
      %p82 = scmp.ne.s32.totalorder %s77, %s79
      %p83 = scmp.eq.s32.totalorder %s17, 0
      %p84 = por %p82, %p83
      %p85 = scmp.ne.s32.totalorder %s77, %s79
      %p86 = scmp.eq.s32.totalorder %s22, 1
      %p87 = por %p85, %p86
      %p88 = scmp.ne.s32.totalorder %s79, %s80
      %p89 = scmp.eq.s32.totalorder %s22, 0
      %p90 = por %p88, %p89
      %p91 = scmp.ne.s32.totalorder %s79, %s80
      %p92 = scmp.eq.s32.totalorder %s23, 1
      %p93 = por %p91, %p92
      %p95 = scmp.ne.s32.totalorder %s80, %s94
      %p96 = scmp.eq.s32.totalorder %s23, 0
      %p97 = por %p95, %p96
      %s99 = sadd.s32 %s98, 1
      %p102 = scmp.eq.s32.totalorder %s17, 1
      %p103 = scmp.ne.s32.totalorder %s98, %s100
      %p104 = scmp.eq.s32.totalorder %s17, 0
      %p105 = por %p103, %p104
      %p106 = scmp.ne.s32.totalorder %s98, %s100
      %p107 = scmp.eq.s32.totalorder %s22, 1
      %p108 = por %p106, %p107
      %p109 = scmp.ne.s32.totalorder %s100, %s101
      %p110 = scmp.eq.s32.totalorder %s22, 0
      %p111 = por %p109, %p110
      %p112 = scmp.ne.s32.totalorder %s100, %s101
      %p113 = scmp.eq.s32.totalorder %s23, 1
      %p114 = por %p112, %p113
      %p116 = scmp.ne.s32.totalorder %s101, %s115
      %p117 = scmp.eq.s32.totalorder %s23, 0
      %p118 = por %p116, %p117
      %s120 = sadd.s32 %s119, 1
      %p123 = scmp.eq.s32.totalorder %s17, 1
      %p124 = scmp.ne.s32.totalorder %s119, %s121
      %p125 = scmp.eq.s32.totalorder %s17, 0
      %p126 = por %p124, %p125
      %p127 = scmp.ne.s32.totalorder %s119, %s121
      %p128 = scmp.eq.s32.totalorder %s22, 1
      %p129 = por %p127, %p128
      %p130 = scmp.ne.s32.totalorder %s121, %s122
      %p131 = scmp.eq.s32.totalorder %s22, 0
      %p132 = por %p130, %p131
      %p133 = scmp.ne.s32.totalorder %s121, %s122
      %p134 = scmp.eq.s32.totalorder %s23, 1
      %p135 = por %p133, %p134
      %p137 = scmp.ne.s32.totalorder %s122, %s136
      %p138 = scmp.eq.s32.totalorder %s23, 0
      %p139 = por %p137, %p138
      %s141 = sadd.s32 %s140, 1
      %p144 = scmp.eq.s32.totalorder %s17, 1
      %p145 = scmp.ne.s32.totalorder %s140, %s142
      %p146 = scmp.eq.s32.totalorder %s17, 0
      %p147 = por %p145, %p146
      %p148 = scmp.ne.s32.totalorder %s140, %s142
      %p149 = scmp.eq.s32.totalorder %s22, 1
      %p150 = por %p148, %p149
      %p151 = scmp.ne.s32.totalorder %s142, %s143
      %p152 = scmp.eq.s32.totalorder %s22, 0
      %p153 = por %p151, %p152
      %p154 = scmp.ne.s32.totalorder %s142, %s143
      %p155 = scmp.eq.s32.totalorder %s23, 1
      %p156 = por %p154, %p155
      %p158 = scmp.ne.s32.totalorder %s143, %s157
      %p159 = scmp.eq.s32.totalorder %s23, 0
      %p160 = por %p158, %p159
      %s162 = sadd.s32 %s161, 1
      %p165 = scmp.eq.s32.totalorder %s17, 1
      %p166 = scmp.ne.s32.totalorder %s161, %s163
      %p167 = scmp.eq.s32.totalorder %s17, 0
      %p168 = por %p166, %p167
      %p169 = scmp.ne.s32.totalorder %s161, %s163
      %p170 = scmp.eq.s32.totalorder %s22, 1
      %p171 = por %p169, %p170
      %p172 = scmp.ne.s32.totalorder %s163, %s164
      %p173 = scmp.eq.s32.totalorder %s22, 0
      %p174 = por %p172, %p173
      %p175 = scmp.ne.s32.totalorder %s163, %s164
      %p176 = scmp.eq.s32.totalorder %s23, 1
      %p177 = por %p175, %p176
      %p179 = scmp.ne.s32.totalorder %s164, %s178
      %p180 = scmp.eq.s32.totalorder %s23, 0
      %p181 = por %p179, %p180
      %s183 = sadd.s32 %s182, 1
      %p186 = scmp.eq.s32.totalorder %s17, 1
      %p187 = scmp.ne.s32.totalorder %s182, %s184
      %p188 = scmp.eq.s32.totalorder %s17, 0
      %p189 = por %p187, %p188
      %p190 = scmp.ne.s32.totalorder %s182, %s184
      %p191 = scmp.eq.s32.totalorder %s22, 1
      %p192 = por %p190, %p191
      %p193 = scmp.ne.s32.totalorder %s184, %s185
      %p194 = scmp.eq.s32.totalorder %s22, 0
      %p195 = por %p193, %p194
      %p196 = scmp.ne.s32.totalorder %s184, %s185
      %p197 = scmp.eq.s32.totalorder %s23, 1
      %p198 = por %p196, %p197
      %p200 = scmp.ne.s32.totalorder %s185, %s199
      %p201 = scmp.eq.s32.totalorder %s23, 0
      %p202 = por %p200, %p201
      %s203 = ssub.s32 %s17, %s24
      %p204 = scmp.eq.s32.totalorder %s203, 0
      %s206 = sadd.s32 %s205, 1
      %s207 = scalar_select %p204, %s205, %s206
      %p210 = pneg %p204
      %p211 = scmp.eq.s32.totalorder %s17, 1
      %p212 = por %p210, %p211
      %p213 = scmp.ne.s32.totalorder %s205, %s208
      %p214 = scmp.eq.s32.totalorder %s17, 0
      %p215 = por %p213, %p214
      %p216 = scmp.ne.s32.totalorder %s205, %s208
      %p217 = scmp.eq.s32.totalorder %s22, 1
      %p218 = por %p216, %p217
      %p219 = scmp.ne.s32.totalorder %s208, %s209
      %p220 = scmp.eq.s32.totalorder %s22, 0
      %p221 = por %p219, %p220
      %p222 = scmp.ne.s32.totalorder %s208, %s209
      %p223 = scmp.eq.s32.totalorder %s23, 1
      %p224 = por %p222, %p223
      %p226 = scmp.ne.s32.totalorder %s209, %s225
      %p227 = scmp.eq.s32.totalorder %s23, 0
      %p228 = por %p226, %p227
      %p229 = scmp.le.s32.totalorder 1, %s17
      %p230 = scmp.lt.s32.totalorder %s17, 3
      %p231 = pnand %p229, %p230
      %p232 = pneg %p231
      // Predicated region
      $region9: #{stage_module.13} parent=5 // pred_check
        _
      $region10: #{stage_module.13} parent=5 // pred_check_branch
        %234 = sbr.rel (%p231) target = $region12
      $region11: #{stage_module.13} parent=5 // pred_region
        %s235 = ssub.s32 %s17, 1
        // Predicated region
        $region13: #{stage_module.13} parent=11 // pred_check
          %p236 = pneg %p90
        $region14: #{stage_module.13} parent=11 // pred_check_branch
          %238 = sbr.rel (%p236) target = $region16
        $region15: #{stage_module.13} parent=11 // pred_region
          _
        $region16: #{stage_module.13} parent=11 // pred_fallthru
          _
        // Predicated region
        $region17: #{stage_module.13} parent=11 // pred_check
          %p239 = pneg %p111
        $region18: #{stage_module.13} parent=11 // pred_check_branch
          %241 = sbr.rel (%p239) target = $region20
        $region19: #{stage_module.13} parent=11 // pred_region
          _
        $region20: #{stage_module.13} parent=11 // pred_fallthru
          _
        // Predicated region
        $region21: #{stage_module.13} parent=11 // pred_check
          %p242 = pneg %p132
        $region22: #{stage_module.13} parent=11 // pred_check_branch
          %244 = sbr.rel (%p242) target = $region24
        $region23: #{stage_module.13} parent=11 // pred_region
          _
        $region24: #{stage_module.13} parent=11 // pred_fallthru
          _
        // Predicated region
        $region25: #{stage_module.13} parent=11 // pred_check
          %p245 = pneg %p153
        $region26: #{stage_module.13} parent=11 // pred_check_branch
          %247 = sbr.rel (%p245) target = $region28
        $region27: #{stage_module.13} parent=11 // pred_region
          _
        $region28: #{stage_module.13} parent=11 // pred_fallthru
          _
        // Predicated region
        $region29: #{stage_module.13} parent=11 // pred_check
          %p248 = pneg %p174
        $region30: #{stage_module.13} parent=11 // pred_check_branch
          %250 = sbr.rel (%p248) target = $region32
        $region31: #{stage_module.13} parent=11 // pred_region
          _
        $region32: #{stage_module.13} parent=11 // pred_fallthru
          _
        // Predicated region
        $region33: #{stage_module.13} parent=11 // pred_check
          %p251 = pneg %p195
        $region34: #{stage_module.13} parent=11 // pred_check_branch
          %253 = sbr.rel (%p251) target = $region36
        $region35: #{stage_module.13} parent=11 // pred_region
          _
        $region36: #{stage_module.13} parent=11 // pred_fallthru
          _
      $region12: #{stage_module.13} parent=5 // pred_fallthru
        _
      %p254 = scmp.lt.s32.totalorder %s17, 2
      // Predicated region
      $region37: #{stage_module.13} parent=5 // pred_check
        %p255 = pneg %p254
      $region38: #{stage_module.13} parent=5 // pred_check_branch
        %257 = sbr.rel (%p255) target = $region40
      $region39: #{stage_module.13} parent=5 // pred_region
        // Predicated region
        $region41: #{stage_module.13} parent=39 // pred_check
          %p258 = pneg %p37
        $region42: #{stage_module.13} parent=39 // pred_check_branch
          %260 = sbr.rel (%p258) target = $region44
        $region43: #{stage_module.13} parent=39 // pred_region
          %s261 = smul.u32 8, %s17
          %p262 = scmp.lt.s32.totalorder %s261, 15
          %s263 = scalar_select %p262, %s261, 15
          %s264 = smul.addr %s263, 8
          %s265 = scalar_lea.vmem %s0, %s264
          %s266 = smul.u32 8, %s17
        $region44: #{stage_module.13} parent=39 // pred_fallthru
          _
        // Predicated region
        $region45: #{stage_module.13} parent=39 // pred_check
          %p267 = pneg %p63
        $region46: #{stage_module.13} parent=39 // pred_check_branch
          %269 = sbr.rel (%p267) target = $region48
        $region47: #{stage_module.13} parent=39 // pred_region
          %s270 = smul.u32 8, %s17
          %p271 = scmp.lt.s32.totalorder %s270, 15
          %s272 = scalar_select %p271, %s270, 15
          %s273 = smul.addr %s272, 8
          %s274 = scalar_lea.vmem %s1, %s273
          %s275 = smul.u32 8, %s17
        $region48: #{stage_module.13} parent=39 // pred_fallthru
          _
      $region40: #{stage_module.13} parent=5 // pred_fallthru
        _
      %p276 = scmp.le.s32.totalorder 1, %s17
      %p277 = scmp.lt.s32.totalorder %s17, 3
      %p278 = pnand %p276, %p277
      %p279 = pneg %p278
      // Predicated region
      $region49: #{stage_module.13} parent=5 // pred_check
        _
      $region50: #{stage_module.13} parent=5 // pred_check_branch
        %281 = sbr.rel (%p278) target = $region52
      $region51: #{stage_module.13} parent=5 // pred_region
        %s282 = ssub.s32 %s17, 1
        %s283 = smul.u32 8, %s22
        %p284 = scmp.lt.s32.totalorder %s283, 15
        %s285 = scalar_select %p284, %s283, 15
        %s286 = smul.addr %s285, 8
        %s287 = scalar_lea.vmem %s0, %s286
        %p288 = pneg %p43
        %p289 = pneg %p40
        %s290 = smul.u32 8, %s22
        %p291 = scmp.lt.s32.totalorder %s290, 15
        %s292 = scalar_select %p291, %s290, 15
        %s293 = smul.addr %s292, 8
        %s294 = scalar_lea.vmem %s1, %s293
        %p295 = pneg %p69
        %p296 = pneg %p66
        %p297 = pneg %p90
        %p298 = pneg %p87
        %p299 = pneg %p111
        %p300 = pneg %p108
        %p301 = pneg %p132
        %p302 = pneg %p129
        %p303 = pneg %p153
        %p304 = pneg %p150
        %p305 = pneg %p174
        %p306 = pneg %p171
        %p307 = pneg %p195
        %p308 = pneg %p192
        %p309 = pneg %p221
        %p310 = pneg %p218
        %s311 = sand.u32 %s208, 1
        %s312 = scalar_lea.sflag [#allocation3], %s311
        %s313 = sand.u32 %s208, 1
        %s314 = smul.addr %s313, 64
        %s315 = scalar_lea.vmem [#allocation2], %s314
        %s316 = smul.u32 8, %s22
        %p317 = scmp.lt.s32.totalorder %s316, 15
        %s318 = scalar_select %p317, %s316, 15
        %s319 = smul.addr %s318, 8
        %s320 = scalar_lea.vmem %s0, %s319
        %s321 = smul.u32 8, %s22
        %s322 = smul.u32 8, %s22
        %p323 = scmp.lt.s32.totalorder %s322, 15
        %s324 = scalar_select %p323, %s322, 15
        %s325 = smul.addr %s324, 8
        %s326 = scalar_lea.vmem %s1, %s325
        %s327 = smul.u32 8, %s22
        %s328 = smul.u32 8, %s22
        %v329 = vld [vmem:[%s320] sm:$0xff]
        %v330 = vld [vmem:[%s320 + $0x8] sm:$0xff]
        %v331 = vld [vmem:[%s320 + $0x10] sm:$0xff]
        %v332 = vld [vmem:[%s320 + $0x18] sm:$0xff]
        %v333 = vld [vmem:[%s320 + $0x20] sm:$0xff]
        %v334 = vld [vmem:[%s320 + $0x28] sm:$0xff]
        %v335 = vld [vmem:[%s320 + $0x30] sm:$0xff]
        %v336 = vld [vmem:[%s320 + $0x38] sm:$0xff]
        %v337 = vld [vmem:[%s326] sm:$0xff]
        %v338 = vld [vmem:[%s326 + $0x8] sm:$0xff]
        %v339 = vld [vmem:[%s326 + $0x10] sm:$0xff]
        %v340 = vld [vmem:[%s326 + $0x18] sm:$0xff]
        %v341 = vld [vmem:[%s326 + $0x20] sm:$0xff]
        %v342 = vld [vmem:[%s326 + $0x28] sm:$0xff]
        %v343 = vld [vmem:[%s326 + $0x30] sm:$0xff]
        %v344 = vld [vmem:[%s326 + $0x38] sm:$0xff]
        %v345 = vadd.f32 %v329, %v337
        %v346 = vadd.f32 %v330, %v338
        %v347 = vadd.f32 %v331, %v339
        %v348 = vadd.f32 %v332, %v340
        %v349 = vadd.f32 %v333, %v341
        %v350 = vadd.f32 %v334, %v342
        %v351 = vadd.f32 %v335, %v343
        %v352 = vadd.f32 %v336, %v344
        %vm353 = vcmask 261120
        %v354 = vsel %vm353, %v345, 0.0
        %355 = vadd.xlane.f32.xlu0 %v354
        %v356 = vpop.xlane.xlu0 %355
        %v357 = vsel %vm353, %v346, 0.0
        %358 = vadd.xlane.f32.xlu0 %v357
        %v359 = vpop.xlane.xlu0 %358
        %v360 = vsel %vm353, %v347, 0.0
        %361 = vadd.xlane.f32.xlu0 %v360
        %v362 = vpop.xlane.xlu0 %361
        %v363 = vsel %vm353, %v348, 0.0
        %364 = vadd.xlane.f32.xlu0 %v363
        %v365 = vpop.xlane.xlu0 %364
        %v366 = vsel %vm353, %v349, 0.0
        %367 = vadd.xlane.f32.xlu0 %v366
        %v368 = vpop.xlane.xlu0 %367
        %v369 = vsel %vm353, %v350, 0.0
        %370 = vadd.xlane.f32.xlu0 %v369
        %v371 = vpop.xlane.xlu0 %370
        %v372 = vsel %vm353, %v351, 0.0
        %373 = vadd.xlane.f32.xlu0 %v372
        %v374 = vpop.xlane.xlu0 %373
        %v375 = vsel %vm353, %v352, 0.0
        %376 = vadd.xlane.f32.xlu0 %v375
        %v377 = vpop.xlane.xlu0 %376
        %v378 = vrcp.pop 32.0
        %v379 = vmul.f32 %v356, %v378
        %v380 = vmul.f32 %v359, %v378
        %v381 = vmul.f32 %v362, %v378
        %v382 = vmul.f32 %v365, %v378
        %v383 = vmul.f32 %v368, %v378
        %v384 = vmul.f32 %v371, %v378
        %v385 = vmul.f32 %v374, %v378
        %v386 = vmul.f32 %v377, %v378
        %v387 = vsub.f32 %v345, %v379
        %v388 = vsub.f32 %v346, %v380
        %v389 = vsub.f32 %v347, %v381
        %v390 = vsub.f32 %v348, %v382
        %v391 = vsub.f32 %v349, %v383
        %v392 = vsub.f32 %v350, %v384
        %v393 = vsub.f32 %v351, %v385
        %v394 = vsub.f32 %v352, %v386
        %v395 = vmul.f32 %v387, %v387
        %v396 = vmul.f32 %v388, %v388
        %v397 = vmul.f32 %v389, %v389
        %v398 = vmul.f32 %v390, %v390
        %v399 = vmul.f32 %v391, %v391
        %v400 = vmul.f32 %v392, %v392
        %v401 = vmul.f32 %v393, %v393
        %v402 = vmul.f32 %v394, %v394
        %v403 = vsel %vm353, %v395, 0.0
        %404 = vadd.xlane.f32.xlu0 %v403
        %v405 = vpop.xlane.xlu0 %404
        %v406 = vsel %vm353, %v396, 0.0
        %407 = vadd.xlane.f32.xlu0 %v406
        %v408 = vpop.xlane.xlu0 %407
        %v409 = vsel %vm353, %v397, 0.0
        %410 = vadd.xlane.f32.xlu0 %v409
        %v411 = vpop.xlane.xlu0 %410
        %v412 = vsel %vm353, %v398, 0.0
        %413 = vadd.xlane.f32.xlu0 %v412
        %v414 = vpop.xlane.xlu0 %413
        %v415 = vsel %vm353, %v399, 0.0
        %416 = vadd.xlane.f32.xlu0 %v415
        %v417 = vpop.xlane.xlu0 %416
        %v418 = vsel %vm353, %v400, 0.0
        %419 = vadd.xlane.f32.xlu0 %v418
        %v420 = vpop.xlane.xlu0 %419
        %v421 = vsel %vm353, %v401, 0.0
        %422 = vadd.xlane.f32.xlu0 %v421
        %v423 = vpop.xlane.xlu0 %422
        %v424 = vsel %vm353, %v402, 0.0
        %425 = vadd.xlane.f32.xlu0 %v424
        %v426 = vpop.xlane.xlu0 %425
        %v427 = vmul.f32 %v405, %v378
        %v428 = vmul.f32 %v408, %v378
        %v429 = vmul.f32 %v411, %v378
        %v430 = vmul.f32 %v414, %v378
        %v431 = vmul.f32 %v417, %v378
        %v432 = vmul.f32 %v420, %v378
        %v433 = vmul.f32 %v423, %v378
        %v434 = vmul.f32 %v426, %v378
        %v435 = vadd.f32 %v427, 1e-05
        %v436 = vadd.f32 %v428, 1e-05
        %v437 = vadd.f32 %v429, 1e-05
        %v438 = vadd.f32 %v430, 1e-05
        %v439 = vadd.f32 %v431, 1e-05
        %v440 = vadd.f32 %v432, 1e-05
        %v441 = vadd.f32 %v433, 1e-05
        %v442 = vadd.f32 %v434, 1e-05
        %v443 = vrsqrt.pop %v435
        %v444 = vrsqrt.pop %v436
        %v445 = vrsqrt.pop %v437
        %v446 = vrsqrt.pop %v438
        %v447 = vrsqrt.pop %v439
        %v448 = vrsqrt.pop %v440
        %v449 = vrsqrt.pop %v441
        %v450 = vrsqrt.pop %v442
        %v451 = vmul.f32 %v387, %v443
        %v452 = vmul.f32 %v388, %v444
        %v453 = vmul.f32 %v389, %v445
        %v454 = vmul.f32 %v390, %v446
        %v455 = vmul.f32 %v391, %v447
        %v456 = vmul.f32 %v392, %v448
        %v457 = vmul.f32 %v393, %v449
        %v458 = vmul.f32 %v394, %v450
        %v459 = vld [vmem:[%s2] sm:$0x1]
        %v461 = vlaneseq
        %v462 = vshrl.u32 %v461, 7
        %v463 = vsub.s32 0, %v462
        %v464 = vrot.slane %v459, %v463
        %v466 = vmul.f32 %v451, %v464
        %v467 = vmul.f32 %v452, %v464
        %v468 = vmul.f32 %v453, %v464
        %v469 = vmul.f32 %v454, %v464
        %v470 = vmul.f32 %v455, %v464
        %v471 = vmul.f32 %v456, %v464
        %v472 = vmul.f32 %v457, %v464
        %v473 = vmul.f32 %v458, %v464
        %v474 = vld [vmem:[%s3] sm:$0x1]
        %v476 = vlaneseq
        %v477 = vshrl.u32 %v476, 7
        %v478 = vsub.s32 0, %v477
        %v479 = vrot.slane %v474, %v478
        %v481 = vadd.f32 %v466, %v479
        %v482 = vadd.f32 %v467, %v479
        %v483 = vadd.f32 %v468, %v479
        %v484 = vadd.f32 %v469, %v479
        %v485 = vadd.f32 %v470, %v479
        %v486 = vadd.f32 %v471, %v479
        %v487 = vadd.f32 %v472, %v479
        %v488 = vadd.f32 %v473, %v479
        %v489 = vld [vmem:[%s4] sm:$0xff]
        %v490 = vld [vmem:[%s4 + $0x8] sm:$0xff]
        %v491 = vld [vmem:[%s4 + $0x10] sm:$0xff]
        %v492 = vld [vmem:[%s4 + $0x18] sm:$0xff]
        %v493 = vld [vmem:[%s5] sm:$0x1]
        %v495 = vlaneseq
        %v496 = vshrl.u32 %v495, 7
        %v497 = vsub.s32 0, %v496
        %v498 = vrot.slane %v493, %v497
        %v501 = vsel %vm353, %v481, 0
        %v504 = vsel %vm353, %v482, 0
        %v507 = vsel %vm353, %v483, 0
        %v510 = vsel %vm353, %v484, 0
        %v513 = vsel %vm353, %v485, 0
        %v516 = vsel %vm353, %v486, 0
        %v519 = vsel %vm353, %v487, 0
        %v522 = vsel %vm353, %v488, 0
        %524 = vmatprep.subr.mxu0 0.0
        %525 = vmatpush1.msra.mxu0 %v489
        %526 = vmatprep.subr.mxu0 0.0
        %527 = vmatpush1.msra.mxu0 %v490
        %528 = vmatprep.subr.mxu0 0.0
        %529 = vmatpush1.msra.mxu0 %v491
        %530 = vmatprep.subr.mxu0 0.0
        %531 = vmatpush1.msra.mxu0 %v492
        %532 = vmatprep.subr.mxu0 0.0
        %533 = vmatpush1.msra.mxu0 0.0
        %534 = vmatprep.subr.mxu0 0.0
        %535 = vmatpush1.msra.mxu0 0.0
        %536 = vmatprep.subr.mxu0 0.0
        %537 = vmatpush1.msra.mxu0 0.0
        %538 = vmatprep.subr.mxu0 0.0
        %539 = vmatpush1.msra.mxu0 0.0
        %540 = vmatprep.subr.mxu0 0.0
        %541 = vmatpush1.msra.mxu0 0.0
        %542 = vmatprep.subr.mxu0 0.0
        %543 = vmatpush1.msra.mxu0 0.0
        %544 = vmatprep.subr.mxu0 0.0
        %545 = vmatpush1.msra.mxu0 0.0
        %546 = vmatprep.subr.mxu0 0.0
        %547 = vmatpush1.msra.mxu0 0.0
        %548 = vmatprep.subr.mxu0 0.0
        %549 = vmatpush1.msra.mxu0 0.0
        %550 = vmatprep.subr.mxu0 0.0
        %551 = vmatpush1.msra.mxu0 0.0
        %552 = vmatprep.subr.mxu0 0.0
        %553 = vmatpush1.msra.mxu0 0.0
        %554 = vmatprep.subr.mxu0 0.0
        %555 = vmatpush1.msra.mxu0 0.0
        %556 = vmatprep.subr.mxu0 0.0
        %557 = vmatpush1.msra.mxu0 0.0
        %558 = vmatprep.subr.mxu0 0.0
        %559 = vmatpush1.msra.mxu0 0.0
        %560 = vmatprep.subr.mxu0 0.0
        %561 = vmatpush1.msra.mxu0 0.0
        %562 = vmatprep.subr.mxu0 0.0
        %563 = vmatpush1.msra.mxu0 0.0
        %564 = vmatprep.subr.mxu0 0.0
        %565 = vmatpush1.msra.mxu0 0.0
        %566 = vmatprep.subr.mxu0 0.0
        %567 = vmatpush1.msra.mxu0 0.0
        %568 = vmatprep.subr.mxu0 0.0
        %569 = vmatpush1.msra.mxu0 0.0
        %570 = vmatprep.subr.mxu0 0.0
        %571 = vmatpush1.msra.mxu0 0.0
        %572 = vmatprep.subr.mxu0 0.0
        %573 = vmatpush1.msra.mxu0 0.0
        %574 = vmatprep.subr.mxu0 0.0
        %575 = vmatpush1.msra.mxu0 0.0
        %576 = vmatprep.subr.mxu0 0.0
        %577 = vmatpush1.msra.mxu0 0.0
        %578 = vmatprep.subr.mxu0 0.0
        %579 = vmatpush1.msra.mxu0 0.0
        %580 = vmatprep.subr.mxu0 0.0
        %581 = vmatpush1.msra.mxu0 0.0
        %582 = vmatprep.subr.mxu0 0.0
        %583 = vmatpush1.msra.mxu0 0.0
        %584 = vmatprep.subr.mxu0 0.0
        %585 = vmatpush1.msra.mxu0 0.0
        %586 = vmatprep.subr.mxu0 0.0
        %587 = vmatpush1.msra.mxu0 0.0
        %588 = vmatprep.mubr.f32.mxu0 0.0
        %589 = vmatmul.mubr.f32.gmra.mrb[0].mxu0 %v501
        %v590 = vpop.f32.mrb[0].mxu0
        %v591 = vadd.f32 %v498, %v590
        %v592 = vpop.f32.mrb[0].mxu0
        %593 = vmatprep.mubr.f32.mxu0 0.0
        %594 = vmatmul.mubr.f32.gmra.mrb[0].mxu0 %v504
        %v595 = vpop.f32.mrb[0].mxu0
        %v596 = vadd.f32 %v498, %v595
        %v597 = vpop.f32.mrb[0].mxu0
        %598 = vmatprep.mubr.f32.mxu0 0.0
        %599 = vmatmul.mubr.f32.gmra.mrb[0].mxu0 %v507
        %v600 = vpop.f32.mrb[0].mxu0
        %v601 = vadd.f32 %v498, %v600
        %v602 = vpop.f32.mrb[0].mxu0
        %603 = vmatprep.mubr.f32.mxu0 0.0
        %604 = vmatmul.mubr.f32.gmra.mrb[0].mxu0 %v510
        %v605 = vpop.f32.mrb[0].mxu0
        %v606 = vadd.f32 %v498, %v605
        %v607 = vpop.f32.mrb[0].mxu0
        %608 = vmatprep.mubr.f32.mxu0 0.0
        %609 = vmatmul.mubr.f32.gmra.mrb[0].mxu0 %v513
        %v610 = vpop.f32.mrb[0].mxu0
        %v611 = vadd.f32 %v498, %v610
        %v612 = vpop.f32.mrb[0].mxu0
        %613 = vmatprep.mubr.f32.mxu0 0.0
        %614 = vmatmul.mubr.f32.gmra.mrb[0].mxu0 %v516
        %v615 = vpop.f32.mrb[0].mxu0
        %v616 = vadd.f32 %v498, %v615
        %v617 = vpop.f32.mrb[0].mxu0
        %618 = vmatprep.mubr.f32.mxu0 0.0
        %619 = vmatmul.mubr.f32.gmra.mrb[0].mxu0 %v519
        %v620 = vpop.f32.mrb[0].mxu0
        %v621 = vadd.f32 %v498, %v620
        %v622 = vpop.f32.mrb[0].mxu0
        %623 = vmatprep.mubr.f32.mxu0 0.0
        %624 = vmatmul.mubr.f32.gmra.mrb[0].mxu0 %v522
        %v625 = vpop.f32.mrb[0].mxu0
        %v626 = vadd.f32 %v498, %v625
        %v627 = vpop.f32.mrb[0].mxu0
        %628 = vdwg.mxu0
        %v629 = vmul.f32 %v591, 0.5
        %v630 = vmul.f32 %v596, 0.5
        %v631 = vmul.f32 %v601, 0.5
        %v632 = vmul.f32 %v606, 0.5
        %v633 = vmul.f32 %v611, 0.5
        %v634 = vmul.f32 %v616, 0.5
        %v635 = vmul.f32 %v621, 0.5
        %v636 = vmul.f32 %v626, 0.5
        %v637 = vmul.f32 %v591, 0.70710677
        %v638 = vmul.f32 %v596, 0.70710677
        %v639 = vmul.f32 %v601, 0.70710677
        %v640 = vmul.f32 %v606, 0.70710677
        %v641 = vmul.f32 %v611, 0.70710677
        %v642 = vmul.f32 %v616, 0.70710677
        %v643 = vmul.f32 %v621, 0.70710677
        %v644 = vmul.f32 %v626, 0.70710677
        %vm645 = vcmp.ge.f32.partialorder %v637, 0.0
        %vm646 = vcmp.ge.f32.partialorder %v638, 0.0
        %vm647 = vcmp.ge.f32.partialorder %v639, 0.0
        %vm648 = vcmp.ge.f32.partialorder %v640, 0.0
        %vm649 = vcmp.ge.f32.partialorder %v641, 0.0
        %vm650 = vcmp.ge.f32.partialorder %v642, 0.0
        %vm651 = vcmp.ge.f32.partialorder %v643, 0.0
        %vm652 = vcmp.ge.f32.partialorder %v644, 0.0
        %v653 = vsel %vm645, 1.0, -1.0
        %v654 = vsel %vm646, 1.0, -1.0
        %v655 = vsel %vm647, 1.0, -1.0
        %v656 = vsel %vm648, 1.0, -1.0
        %v657 = vsel %vm649, 1.0, -1.0
        %v658 = vsel %vm650, 1.0, -1.0
        %v659 = vsel %vm651, 1.0, -1.0
        %v660 = vsel %vm652, 1.0, -1.0
        %v661 = vand.u32 2147483647, %v637
        %v662 = vand.u32 2147483647, %v638
        %v663 = vand.u32 2147483647, %v639
        %v664 = vand.u32 2147483647, %v640
        %v665 = vand.u32 2147483647, %v641
        %v666 = vand.u32 2147483647, %v642
        %v667 = vand.u32 2147483647, %v643
        %v668 = vand.u32 2147483647, %v644
        %v669 = vmul.f32 %v661, 0.3275911
        %v670 = vmul.f32 %v662, 0.3275911
        %v671 = vmul.f32 %v663, 0.3275911
        %v672 = vmul.f32 %v664, 0.3275911
        %v673 = vmul.f32 %v665, 0.3275911
        %v674 = vmul.f32 %v666, 0.3275911
        %v675 = vmul.f32 %v667, 0.3275911
        %v676 = vmul.f32 %v668, 0.3275911
        %v677 = vadd.f32 %v669, 1.0
        %v678 = vadd.f32 %v670, 1.0
        %v679 = vadd.f32 %v671, 1.0
        %v680 = vadd.f32 %v672, 1.0
        %v681 = vadd.f32 %v673, 1.0
        %v682 = vadd.f32 %v674, 1.0
        %v683 = vadd.f32 %v675, 1.0
        %v684 = vadd.f32 %v676, 1.0
        %v685 = vrcp.pop %v677
        %v686 = vmul.f32 1.0, %v685
        %v687 = vrcp.pop %v678
        %v688 = vmul.f32 1.0, %v687
        %v689 = vrcp.pop %v679
        %v690 = vmul.f32 1.0, %v689
        %v691 = vrcp.pop %v680
        %v692 = vmul.f32 1.0, %v691
        %v693 = vrcp.pop %v681
        %v694 = vmul.f32 1.0, %v693
        %v695 = vrcp.pop %v682
        %v696 = vmul.f32 1.0, %v695
        %v697 = vrcp.pop %v683
        %v698 = vmul.f32 1.0, %v697
        %v699 = vrcp.pop %v684
        %v700 = vmul.f32 1.0, %v699
        %v701 = vmul.f32 %v686, 1.0614054
        %v702 = vmul.f32 %v688, 1.0614054
        %v703 = vmul.f32 %v690, 1.0614054
        %v704 = vmul.f32 %v692, 1.0614054
        %v705 = vmul.f32 %v694, 1.0614054
        %v706 = vmul.f32 %v696, 1.0614054
        %v707 = vmul.f32 %v698, 1.0614054
        %v708 = vmul.f32 %v700, 1.0614054
        %v709 = vadd.f32 %v701, -1.4531521
        %v710 = vadd.f32 %v702, -1.4531521
        %v711 = vadd.f32 %v703, -1.4531521
        %v712 = vadd.f32 %v704, -1.4531521
        %v713 = vadd.f32 %v705, -1.4531521
        %v714 = vadd.f32 %v706, -1.4531521
        %v715 = vadd.f32 %v707, -1.4531521
        %v716 = vadd.f32 %v708, -1.4531521
        %v717 = vmul.f32 %v709, %v686
        %v718 = vmul.f32 %v710, %v688
        %v719 = vmul.f32 %v711, %v690
        %v720 = vmul.f32 %v712, %v692
        %v721 = vmul.f32 %v713, %v694
        %v722 = vmul.f32 %v714, %v696
        %v723 = vmul.f32 %v715, %v698
        %v724 = vmul.f32 %v716, %v700
        %v725 = vadd.f32 %v717, 1.4214138
        %v726 = vadd.f32 %v718, 1.4214138
        %v727 = vadd.f32 %v719, 1.4214138
        %v728 = vadd.f32 %v720, 1.4214138
        %v729 = vadd.f32 %v721, 1.4214138
        %v730 = vadd.f32 %v722, 1.4214138
        %v731 = vadd.f32 %v723, 1.4214138
        %v732 = vadd.f32 %v724, 1.4214138
        %v733 = vmul.f32 %v725, %v686
        %v734 = vmul.f32 %v726, %v688
        %v735 = vmul.f32 %v727, %v690
        %v736 = vmul.f32 %v728, %v692
        %v737 = vmul.f32 %v729, %v694
        %v738 = vmul.f32 %v730, %v696
        %v739 = vmul.f32 %v731, %v698
        %v740 = vmul.f32 %v732, %v700
        %v741 = vadd.f32 %v733, -0.28449672
        %v742 = vadd.f32 %v734, -0.28449672
        %v743 = vadd.f32 %v735, -0.28449672
        %v744 = vadd.f32 %v736, -0.28449672
        %v745 = vadd.f32 %v737, -0.28449672
        %v746 = vadd.f32 %v738, -0.28449672
        %v747 = vadd.f32 %v739, -0.28449672
        %v748 = vadd.f32 %v740, -0.28449672
        %v749 = vmul.f32 %v741, %v686
        %v750 = vmul.f32 %v742, %v688
        %v751 = vmul.f32 %v743, %v690
        %v752 = vmul.f32 %v744, %v692
        %v753 = vmul.f32 %v745, %v694
        %v754 = vmul.f32 %v746, %v696
        %v755 = vmul.f32 %v747, %v698
        %v756 = vmul.f32 %v748, %v700
        %v757 = vadd.f32 %v749, 0.2548296
        %v758 = vadd.f32 %v750, 0.2548296
        %v759 = vadd.f32 %v751, 0.2548296
        %v760 = vadd.f32 %v752, 0.2548296
        %v761 = vadd.f32 %v753, 0.2548296
        %v762 = vadd.f32 %v754, 0.2548296
        %v763 = vadd.f32 %v755, 0.2548296
        %v764 = vadd.f32 %v756, 0.2548296
        %v765 = vmul.f32 %v757, %v686
        %v766 = vmul.f32 %v758, %v688
        %v767 = vmul.f32 %v759, %v690
        %v768 = vmul.f32 %v760, %v692
        %v769 = vmul.f32 %v761, %v694
        %v770 = vmul.f32 %v762, %v696
        %v771 = vmul.f32 %v763, %v698
        %v772 = vmul.f32 %v764, %v700
        %v773 = vsub.f32 0.0, %v661
        %v774 = vsub.f32 0.0, %v662
        %v775 = vsub.f32 0.0, %v663
        %v776 = vsub.f32 0.0, %v664
        %v777 = vsub.f32 0.0, %v665
        %v778 = vsub.f32 0.0, %v666
        %v779 = vsub.f32 0.0, %v667
        %v780 = vsub.f32 0.0, %v668
        %v781 = vmul.f32 %v773, %v661
        %v782 = vmul.f32 %v774, %v662
        %v783 = vmul.f32 %v775, %v663
        %v784 = vmul.f32 %v776, %v664
        %v785 = vmul.f32 %v777, %v665
        %v786 = vmul.f32 %v778, %v666
        %v787 = vmul.f32 %v779, %v667
        %v788 = vmul.f32 %v780, %v668
        %v789 = vmul.f32 %v781, 1.442695
        %v790 = vpow.pop %v789
        %v791 = vmul.f32 %v782, 1.442695
        %v792 = vpow.pop %v791
        %v793 = vmul.f32 %v783, 1.442695
        %v794 = vpow.pop %v793
        %v795 = vmul.f32 %v784, 1.442695
        %v796 = vpow.pop %v795
        %v797 = vmul.f32 %v785, 1.442695
        %v798 = vpow.pop %v797
        %v799 = vmul.f32 %v786, 1.442695
        %v800 = vpow.pop %v799
        %v801 = vmul.f32 %v787, 1.442695
        %v802 = vpow.pop %v801
        %v803 = vmul.f32 %v788, 1.442695
        %v804 = vpow.pop %v803
        %v805 = vmul.f32 %v765, %v790
        %v806 = vmul.f32 %v766, %v792
        %v807 = vmul.f32 %v767, %v794
        %v808 = vmul.f32 %v768, %v796
        %v809 = vmul.f32 %v769, %v798
        %v810 = vmul.f32 %v770, %v800
        %v811 = vmul.f32 %v771, %v802
        %v812 = vmul.f32 %v772, %v804
        %v813 = vsub.f32 1.0, %v805
        %v814 = vsub.f32 1.0, %v806
        %v815 = vsub.f32 1.0, %v807
        %v816 = vsub.f32 1.0, %v808
        %v817 = vsub.f32 1.0, %v809
        %v818 = vsub.f32 1.0, %v810
        %v819 = vsub.f32 1.0, %v811
        %v820 = vsub.f32 1.0, %v812
        %v821 = vmul.f32 %v653, %v813
        %v822 = vmul.f32 %v654, %v814
        %v823 = vmul.f32 %v655, %v815
        %v824 = vmul.f32 %v656, %v816
        %v825 = vmul.f32 %v657, %v817
        %v826 = vmul.f32 %v658, %v818
        %v827 = vmul.f32 %v659, %v819
        %v828 = vmul.f32 %v660, %v820
        %v829 = vadd.f32 %v821, 1.0
        %v830 = vadd.f32 %v822, 1.0
        %v831 = vadd.f32 %v823, 1.0
        %v832 = vadd.f32 %v824, 1.0
        %v833 = vadd.f32 %v825, 1.0
        %v834 = vadd.f32 %v826, 1.0
        %v835 = vadd.f32 %v827, 1.0
        %v836 = vadd.f32 %v828, 1.0
        %v837 = vmul.f32 %v629, %v829
        %v838 = vmul.f32 %v630, %v830
        %v839 = vmul.f32 %v631, %v831
        %v840 = vmul.f32 %v632, %v832
        %v841 = vmul.f32 %v633, %v833
        %v842 = vmul.f32 %v634, %v834
        %v843 = vmul.f32 %v635, %v835
        %v844 = vmul.f32 %v636, %v836
        %v845 = vld [vmem:[%s6] sm:$0xff]
        %v846 = vld [vmem:[%s6 + $0x8] sm:$0xff]
        %v847 = vld [vmem:[%s6 + $0x10] sm:$0xff]
        %v848 = vld [vmem:[%s6 + $0x18] sm:$0xff]
        %v849 = vld [vmem:[%s6 + $0x20] sm:$0xff]
        %v850 = vld [vmem:[%s6 + $0x28] sm:$0xff]
        %v851 = vld [vmem:[%s6 + $0x30] sm:$0xff]
        %v852 = vld [vmem:[%s6 + $0x38] sm:$0xff]
        %v853 = vld [vmem:[%s6 + $0x40] sm:$0xff]
        %v854 = vld [vmem:[%s6 + $0x48] sm:$0xff]
        %v855 = vld [vmem:[%s6 + $0x50] sm:$0xff]
        %v856 = vld [vmem:[%s6 + $0x58] sm:$0xff]
        %v857 = vld [vmem:[%s6 + $0x60] sm:$0xff]
        %v858 = vld [vmem:[%s6 + $0x68] sm:$0xff]
        %v859 = vld [vmem:[%s6 + $0x70] sm:$0xff]
        %v860 = vld [vmem:[%s6 + $0x78] sm:$0xff]
        %v861 = vld [vmem:[%s7] sm:$0x1]
        %v863 = vlaneseq
        %v864 = vshrl.u32 %v863, 7
        %v865 = vsub.s32 0, %v864
        %v866 = vrot.slane %v861, %v865
        %868 = vmatprep.subr.mxu0 0.0
        %869 = vmatpush1.msra.mxu0 %v845
        %870 = vmatprep.subr.mxu0 0.0
        %871 = vmatpush1.msra.mxu0 %v846
        %872 = vmatprep.subr.mxu0 0.0
        %873 = vmatpush1.msra.mxu0 %v847
        %874 = vmatprep.subr.mxu0 0.0
        %875 = vmatpush1.msra.mxu0 %v848
        %876 = vmatprep.subr.mxu0 0.0
        %877 = vmatpush1.msra.mxu0 %v849
        %878 = vmatprep.subr.mxu0 0.0
        %879 = vmatpush1.msra.mxu0 %v850
        %880 = vmatprep.subr.mxu0 0.0
        %881 = vmatpush1.msra.mxu0 %v851
        %882 = vmatprep.subr.mxu0 0.0
        %883 = vmatpush1.msra.mxu0 %v852
        %884 = vmatprep.subr.mxu0 0.0
        %885 = vmatpush1.msra.mxu0 %v853
        %886 = vmatprep.subr.mxu0 0.0
        %887 = vmatpush1.msra.mxu0 %v854
        %888 = vmatprep.subr.mxu0 0.0
        %889 = vmatpush1.msra.mxu0 %v855
        %890 = vmatprep.subr.mxu0 0.0
        %891 = vmatpush1.msra.mxu0 %v856
        %892 = vmatprep.subr.mxu0 0.0
        %893 = vmatpush1.msra.mxu0 %v857
        %894 = vmatprep.subr.mxu0 0.0
        %895 = vmatpush1.msra.mxu0 %v858
        %896 = vmatprep.subr.mxu0 0.0
        %897 = vmatpush1.msra.mxu0 %v859
        %898 = vmatprep.subr.mxu0 0.0
        %899 = vmatpush1.msra.mxu0 %v860
        %900 = vmatprep.subr.mxu0 0.0
        %901 = vmatpush1.msra.mxu0 0.0
        %902 = vmatprep.subr.mxu0 0.0
        %903 = vmatpush1.msra.mxu0 0.0
        %904 = vmatprep.subr.mxu0 0.0
        %905 = vmatpush1.msra.mxu0 0.0
        %906 = vmatprep.subr.mxu0 0.0
        %907 = vmatpush1.msra.mxu0 0.0
        %908 = vmatprep.subr.mxu0 0.0
        %909 = vmatpush1.msra.mxu0 0.0
        %910 = vmatprep.subr.mxu0 0.0
        %911 = vmatpush1.msra.mxu0 0.0
        %912 = vmatprep.subr.mxu0 0.0
        %913 = vmatpush1.msra.mxu0 0.0
        %914 = vmatprep.subr.mxu0 0.0
        %915 = vmatpush1.msra.mxu0 0.0
        %916 = vmatprep.subr.mxu0 0.0
        %917 = vmatpush1.msra.mxu0 0.0
        %918 = vmatprep.subr.mxu0 0.0
        %919 = vmatpush1.msra.mxu0 0.0
        %920 = vmatprep.subr.mxu0 0.0
        %921 = vmatpush1.msra.mxu0 0.0
        %922 = vmatprep.subr.mxu0 0.0
        %923 = vmatpush1.msra.mxu0 0.0
        %924 = vmatprep.subr.mxu0 0.0
        %925 = vmatpush1.msra.mxu0 0.0
        %926 = vmatprep.subr.mxu0 0.0
        %927 = vmatpush1.msra.mxu0 0.0
        %928 = vmatprep.subr.mxu0 0.0
        %929 = vmatpush1.msra.mxu0 0.0
        %930 = vmatprep.subr.mxu0 0.0
        %931 = vmatpush1.msra.mxu0 0.0
        %932 = vmatprep.mubr.f32.mxu0 0.0
        %933 = vmatmul.mubr.f32.gmra.mrb[0].mxu0 %v837
        %v934 = vpop.f32.mrb[0].mxu0
        %v935 = vadd.f32 %v866, %v934
        %v936 = vpop.f32.mrb[0].mxu0
        %937 = vmatprep.mubr.f32.mxu0 0.0
        %938 = vmatmul.mubr.f32.gmra.mrb[0].mxu0 %v838
        %v939 = vpop.f32.mrb[0].mxu0
        %v940 = vadd.f32 %v866, %v939
        %v941 = vpop.f32.mrb[0].mxu0
        %942 = vmatprep.mubr.f32.mxu0 0.0
        %943 = vmatmul.mubr.f32.gmra.mrb[0].mxu0 %v839
        %v944 = vpop.f32.mrb[0].mxu0
        %v945 = vadd.f32 %v866, %v944
        %v946 = vpop.f32.mrb[0].mxu0
        %947 = vmatprep.mubr.f32.mxu0 0.0
        %948 = vmatmul.mubr.f32.gmra.mrb[0].mxu0 %v840
        %v949 = vpop.f32.mrb[0].mxu0
        %v950 = vadd.f32 %v866, %v949
        %v951 = vpop.f32.mrb[0].mxu0
        %952 = vmatprep.mubr.f32.mxu0 0.0
        %953 = vmatmul.mubr.f32.gmra.mrb[0].mxu0 %v841
        %v954 = vpop.f32.mrb[0].mxu0
        %v955 = vadd.f32 %v866, %v954
        %v956 = vpop.f32.mrb[0].mxu0
        %957 = vmatprep.mubr.f32.mxu0 0.0
        %958 = vmatmul.mubr.f32.gmra.mrb[0].mxu0 %v842
        %v959 = vpop.f32.mrb[0].mxu0
        %v960 = vadd.f32 %v866, %v959
        %v961 = vpop.f32.mrb[0].mxu0
        %962 = vmatprep.mubr.f32.mxu0 0.0
        %963 = vmatmul.mubr.f32.gmra.mrb[0].mxu0 %v843
        %v964 = vpop.f32.mrb[0].mxu0
        %v965 = vadd.f32 %v866, %v964
        %v966 = vpop.f32.mrb[0].mxu0
        %967 = vmatprep.mubr.f32.mxu0 0.0
        %968 = vmatmul.mubr.f32.gmra.mrb[0].mxu0 %v844
        %v969 = vpop.f32.mrb[0].mxu0
        %v970 = vadd.f32 %v866, %v969
        %v971 = vpop.f32.mrb[0].mxu0
        %972 = vdwg.mxu0
        %v973 = vadd.f32 %v345, %v935
        %v974 = vadd.f32 %v346, %v940
        %v975 = vadd.f32 %v347, %v945
        %v976 = vadd.f32 %v348, %v950
        %v977 = vadd.f32 %v349, %v955
        %v978 = vadd.f32 %v350, %v960
        %v979 = vadd.f32 %v351, %v965
        %v980 = vadd.f32 %v352, %v970
        %981 = vst.msk [vmem:[%s315] sm:$0xff] %vm353, %v973
        %982 = vst.msk [vmem:[%s315 + $0x8] sm:$0xff] %vm353, %v974
        %983 = vst.msk [vmem:[%s315 + $0x10] sm:$0xff] %vm353, %v975
        %984 = vst.msk [vmem:[%s315 + $0x18] sm:$0xff] %vm353, %v976
        %985 = vst.msk [vmem:[%s315 + $0x20] sm:$0xff] %vm353, %v977
        %986 = vst.msk [vmem:[%s315 + $0x28] sm:$0xff] %vm353, %v978
        %987 = vst.msk [vmem:[%s315 + $0x30] sm:$0xff] %vm353, %v979
        %988 = vst.msk [vmem:[%s315 + $0x38] sm:$0xff] %vm353, %v980
        %s989 = sand.u32 %s208, 1
        %s990 = scalar_lea.sflag [#allocation3], %s989
        %s991 = sand.u32 %s208, 1
        %s992 = smul.addr %s991, 64
        %s993 = scalar_lea.vmem [#allocation2], %s992
        // Predicated region
        $region53: #{stage_module.13} parent=51 // pred_check
          %p994 = pneg %p218
        $region54: #{stage_module.13} parent=51 // pred_check_branch
          %996 = sbr.rel (%p994) target = $region56
        $region55: #{stage_module.13} parent=51 // pred_region
          %s997 = smul.u32 8, %s22
          %s999 = ssub.s32 1024, 1024
          %1000 = vsyncadd %s990, %s999
          %s1001 = smul.addr %s997, 128
          %s1002 = scalar_lea.hbm %s8, %s1001
          %s1003 = sshll.u32 %s993, 4
          %s1004 = int_to_ptr.vmem [resolvable:$true] %s1003
          %1009 = dma.vmem_to_hbm [thread:$0]  %s1004, 1024, %s1002, %s990, 128, 128, 8
        $region56: #{stage_module.13} parent=51 // pred_fallthru
          _
      $region52: #{stage_module.13} parent=5 // pred_fallthru
        _
      %p1010 = scmp.le.s32.totalorder 2, %s17
      // Predicated region
      $region57: #{stage_module.13} parent=5 // pred_check
        %p1011 = pneg %p1010
      $region58: #{stage_module.13} parent=5 // pred_check_branch
        %1013 = sbr.rel (%p1011) target = $region60
      $region59: #{stage_module.13} parent=5 // pred_region
        %s1014 = ssub.s32 %s17, 2
        // Predicated region
        $region61: #{stage_module.13} parent=59 // pred_check
          %p1015 = pneg %p224
        $region62: #{stage_module.13} parent=59 // pred_check_branch
          %1017 = sbr.rel (%p1015) target = $region64
        $region63: #{stage_module.13} parent=59 // pred_region
          %s1018 = sand.u32 %s209, 1
          %s1019 = scalar_lea.sflag [#allocation3], %s1018
          %s1020 = sand.u32 %s209, 1
          %s1021 = smul.addr %s1020, 64
          %s1022 = scalar_lea.vmem [#allocation2], %s1021
          %1023 = dma.done %s1019, 1024
        $region64: #{stage_module.13} parent=59 // pred_fallthru
          _
      $region60: #{stage_module.13} parent=5 // pred_fallthru
        _
    $region6: #{stage_module.13} parent=1 // loop_footer
      %s21 = sadd.s32 1, %s17
    $region7: #{stage_module.13} parent=1 // loop_footer_branch
      %16 = sbr.rel target = $region3
    $region8: #{stage_module.13} parent=1 // loop_exit
      _
    %1024 = vsyncpa [#allocation3], 1
    %s1025 = scalar_lea.sflag [#allocation3], 1
    %1026 = vsyncpa %s1025, 1

</llo_original>
